<compile_context>
chip_gen: v6e
topology: v6e:2x2x1
jax: 0.10.0
libtpu: 0.0.40
codegen_flags: <defaults>
</compile_context>

<pallas_src>
import math

import jax
import jax.numpy as jnp
from jax.experimental import pallas as pl
from jax.experimental.pallas import tpu as pltpu


_PARALLEL = pltpu.CompilerParams(dimension_semantics=("parallel",))


# ----------------------------- Pallas kernels -------------------------------

def _gemm_bias_relu_kernel(x_ref, w_ref, b_ref, o_ref):
    """o = relu(x @ w + b); bf16 MXU operands, f32 epilogue (BN scale pre-folded)."""
    y = jnp.dot(x_ref[...], w_ref[...], preferred_element_type=jnp.float32)
    o_ref[...] = jnp.maximum(y + b_ref[...], 0.0).astype(o_ref.dtype)


def _down_tail_kernel(mp_ref, p12_ref, p3_ref, p4_ref,
                      w1_ref, wdw_ref, w2_ref, w3_ref, w4_ref, w5_ref,
                      b_ref, o_ref):
    """Fused Downsample tail producing the full (tm, 2*in_c) output tile."""
    f32, bf16 = jnp.float32, jnp.bfloat16
    b = b_ref[...]                          # (3, 64) packed biases
    hc = wdw_ref.shape[1]                   # hide_c

    p12 = p12_ref[...]                      # (tm, 9*2*hide_c) bf16 — z1|z2 patches

    # branch 2: depthwise 3x3/2 conv as a tap-diagonal GEMM (MXU has ample slack
    # at these channel widths), then bias + ReLU
    ydw = jnp.dot(p12, wdw_ref[...], preferred_element_type=f32)
    ydw = jnp.maximum(ydw + b[0:1, :hc], 0.0)

    # branch tails: each banded weight writes its own 16-lane band of one 64-wide acc
    acc = jnp.dot(p12, w1_ref[...], preferred_element_type=f32)              # b1 -> 0:16
    acc = acc + jnp.dot(ydw.astype(bf16), w2_ref[...],
                        preferred_element_type=f32)                          # b2 -> 16:32
    acc = acc + jnp.dot(p3_ref[...], w3_ref[...],
                        preferred_element_type=f32)                          # b3 -> 32:48
    acc = acc + jnp.dot(p4_ref[...], w4_ref[...],
                        preferred_element_type=f32)                          # b4 -> 48:64
    ycat = jnp.maximum(acc + b[1:2, :], 0.0)                                 # (tm, 64)

    # final 1x1 CBR over the (virtual) branch concat: one K=64 dot
    x2 = jnp.dot(ycat.astype(bf16), w5_ref[...], preferred_element_type=f32)
    x2 = jnp.maximum(x2 + b[2:3, :], 0.0)                                    # (tm, 64)

    # 3x3/2 max-pool (exact f32): taps-leading input -> unrolled VPU maximum tree
    mp = mp_ref[0]
    for t in range(1, 9):
        mp = jnp.maximum(mp, mp_ref[t])                                      # (tm, 64)

    # single full-width lane-dense store: output channels = [max-pool | conv1x1]
    o_ref[...] = jnp.concatenate([mp, x2], axis=-1).astype(o_ref.dtype)


# ----------------------------- kernel wrappers -------------------------------

def _num_min_steps():
    """Force a multi-step grid only on chips with >= 2 TensorCores (v7x);
    on single-core chips (v5e/v6e) the extra grid step is pure overhead."""
    try:
        dev = jax.devices()[0]
        cores = getattr(dev, "num_cores", None)
        if isinstance(cores, int) and cores >= 2:
            return 2
        if "v7" in str(getattr(dev, "device_kind", "")).lower():
            return 2
    except Exception:
        pass
    return 1


_MIN_STEPS = None


def _tiles(m):
    """Largest row tile (cap 512 — sized against v7x's 32 MiB scoped VMEM, not
    v6e's 128 MiB) dividing m exactly, with a step count that is a multiple of the
    TensorCore count (even split on v7x, single step on v5e/v6e)."""
    global _MIN_STEPS
    if _MIN_STEPS is None:
        _MIN_STEPS = _num_min_steps()
    for tm in (512, 256, 128, 64, 32, 16, 8):
        if m % tm == 0:
            steps = m // tm
            if steps >= _MIN_STEPS and steps % _MIN_STEPS == 0:
                return tm, steps
    return m, 1   # TODO(synk): awkward m falls back to one unpipelined block


def _gemm_bias_relu(x2d, w, b, out_dtype):
    m, k = x2d.shape
    n = w.shape[1]
    tm, steps = _tiles(m)
    return pl.pallas_call(
        _gemm_bias_relu_kernel,
        out_shape=jax.ShapeDtypeStruct((m, n), out_dtype),
        grid=(steps,),
        in_specs=[pl.BlockSpec((tm, k), lambda i: (i, 0)),
                  pl.BlockSpec((k, n), lambda i: (0, 0)),
                  pl.BlockSpec((1, n), lambda i: (0, 0))],
        out_specs=pl.BlockSpec((tm, n), lambda i: (i, 0)),
        compiler_params=_PARALLEL,
    )(x2d, w, b)


def _down_tail(mp, p12, p3, p4, w1, wdw, w2, w3, w4, w5, b):
    _, m, in_c = mp.shape
    hide_c = wdw.shape[1]
    tm, steps = _tiles(m)
    return pl.pallas_call(
        _down_tail_kernel,
        out_shape=jax.ShapeDtypeStruct((m, 2 * in_c), jnp.float32),
        grid=(steps,),
        in_specs=[
            pl.BlockSpec((9, tm, in_c), lambda i: (0, i, 0)),          # maxpool taps (f32)
            pl.BlockSpec((tm, 18 * hide_c), lambda i: (i, 0)),         # z1|z2 patches (bf16)
            pl.BlockSpec((tm, 9 * hide_c), lambda i: (i, 0)),          # z3 dilated patches
            pl.BlockSpec((tm, 3 * hide_c), lambda i: (i, 0)),          # b4 2nd-conv patches
            pl.BlockSpec((18 * hide_c, 4 * hide_c), lambda i: (0, 0)), # W b1 (banded)
            pl.BlockSpec((18 * hide_c, hide_c), lambda i: (0, 0)),     # W depthwise (tap-diag)
            pl.BlockSpec((hide_c, 4 * hide_c), lambda i: (0, 0)),      # W b2 1x1 (banded)
            pl.BlockSpec((9 * hide_c, 4 * hide_c), lambda i: (0, 0)),  # W b3 (banded)
            pl.BlockSpec((3 * hide_c, 4 * hide_c), lambda i: (0, 0)),  # W b4b (banded)
            pl.BlockSpec((4 * hide_c, in_c), lambda i: (0, 0)),        # W final 1x1
            pl.BlockSpec((3, 4 * hide_c), lambda i: (0, 0)),           # packed biases
        ],
        out_specs=pl.BlockSpec((tm, 2 * in_c), lambda i: (i, 0)),
        compiler_params=_PARALLEL,
    )(mp, p12, p3, p4, w1, wdw, w2, w3, w4, w5, b)


def _extract_patches(x, kh, kw, sh, sw, ph, pw, dh, dw,
                     pad_value=0.0, taps_leading=False):
    """im2col: (N,H,W,C) -> (N,Ho,Wo,kh*kw,C), or (kh*kw,N,Ho,Wo,C) taps-leading."""
    n, h, w, c = x.shape
    ho = (h + 2 * ph - dh * (kh - 1) - 1) // sh + 1
    wo = (w + 2 * pw - dw * (kw - 1) - 1) // sw + 1
    xp = jnp.pad(x, ((0, 0), (ph, ph), (pw, pw), (0, 0)), constant_values=pad_value)
    taps = []
    for i in range(kh):
        for j in range(kw):
            h0, w0 = i * dh, j * dw
            taps.append(xp[:, h0:h0 + (ho - 1) * sh + 1:sh,
                              w0:w0 + (wo - 1) * sw + 1:sw, :])
    return jnp.stack(taps, axis=0 if taps_leading else 3), ho, wo


# ----------------------------- forward pass -----------------------------------

@jax.jit
def downsample_forward_nhwc(x, p):
    n, h, w, in_c = x.shape
    hide_c = in_c // 4

    # (1) four branch-head 1x1 CBRs fused into one bf16 GEMM over all pixels
    z = _gemm_bias_relu(x.reshape(n * h * w, in_c).astype(jnp.bfloat16),
                        p["w_head"], p["b_head"], jnp.bfloat16)
    z = z.reshape(n, h, w, 4 * hide_c)
    z12 = z[..., :2 * hide_c]               # branch-1 + branch-2 heads (shared taps)
    z3 = z[..., 2 * hide_c:3 * hide_c]
    z4 = z[..., 3 * hide_c:]

    # (2) branch-4 first conv: (1,3) kernel, stride (1,2), pad (0,1)
    t4a, h4, w4 = _extract_patches(z4, 1, 3, 1, 2, 0, 1, 1, 1)
    m4 = _gemm_bias_relu(t4a.reshape(n * h4 * w4, 3 * hide_c),
                         p["w_b4a"], p["b_b4a"], jnp.bfloat16)
    m4 = m4.reshape(n, h4, w4, hide_c)

    # (3) im2col for everything landing on the (N, Ho, Wo) output grid
    # TODO(synk): patch extraction is still wrapper-side XLA; fully in-kernel halo'd
    #             spatial windowing (and fusing the head/b4a GEMMs into the tail)
    #             is not implemented here.
    mp_t, ho, wo = _extract_patches(x, 3, 3, 2, 2, 1, 1, 1, 1,
                                    pad_value=-jnp.inf, taps_leading=True)
    p12_t, _, _ = _extract_patches(z12, 3, 3, 2, 2, 1, 1, 1, 1)
    p3_t, _, _ = _extract_patches(z3, 3, 3, 2, 2, 2, 2, 2, 2)
    p4_t, _, _ = _extract_patches(m4, 3, 1, 2, 1, 1, 0, 1, 1)
    m = n * ho * wo

    out = _down_tail(mp_t.reshape(9, m, in_c),
                     p12_t.reshape(m, 18 * hide_c),
                     p3_t.reshape(m, 9 * hide_c),
                     p4_t.reshape(m, 3 * hide_c),
                     p["w_b1"], p["w_dw"], p["w_b2c"], p["w_b3"], p["w_b4b"],
                     p["w_1x1"], p["b_tail"])
    return out.reshape(n, ho, wo, 2 * in_c)


def downsample_forward(x_nchw, params):
    x = jnp.transpose(x_nchw, (0, 2, 3, 1)).astype(jnp.float32)   # NCHW -> NHWC
    y = downsample_forward_nhwc(x, params)
    return jnp.transpose(y, (0, 3, 1, 2))                         # NHWC -> NCHW


# ----------------------------- parameter init ---------------------------------

class ParamGen:
    def __init__(self, seed):
        self._key = jax.random.PRNGKey(seed)

    def next(self):
        self._key, sub = jax.random.split(self._key)
        return sub


def _conv_w(pg, kh, kw, cin, cout):
    """Conv weight as a GEMM matrix: rows tap-major, input-channel-minor."""
    fan_in = kh * kw * cin
    w = jax.random.normal(pg.next(), (kh, kw, cin, cout), jnp.float32)
    return (w * math.sqrt(2.0 / fan_in)).reshape(kh * kw * cin, cout)


def _bn(pg, c):
    """Eval-mode BatchNorm folded to per-channel (scale, bias); running stats (0, 1)."""
    gamma = 1.0 + 0.05 * jax.random.normal(pg.next(), (c,), jnp.float32)
    beta = 0.05 * jax.random.normal(pg.next(), (c,), jnp.float32)
    scale = gamma * (1.0 / math.sqrt(1.0 + 1e-5))
    return scale, beta


def init_downsample(seed, in_c, hide_c, out_c=None):
    # The module requires 4*hide_c == in_c (conv1x1 consumes the 4-branch concat);
    # out_c is unused by the PyTorch module as well.
    assert in_c == 4 * hide_c
    pg = ParamGen(seed)
    bf = jnp.bfloat16
    band = 4 * hide_c                                    # width of the banded tail GEMMs

    # four branch-head 1x1 CBRs fused along output channels (BN scale folded in)
    wh, bh = [], []
    for _ in range(4):
        w = _conv_w(pg, 1, 1, in_c, hide_c)
        s, b = _bn(pg, hide_c)
        wh.append(w * s[None, :])
        bh.append(b)
    w_head = jnp.concatenate(wh, axis=1).astype(bf)                  # (in_c, 4*hide_c)
    b_head = jnp.concatenate(bh).reshape(1, 4 * hide_c)

    # branch 1: 3x3 stride-2 conv -> band 0:hide_c, rows over the z1|z2 patches
    w1 = _conv_w(pg, 3, 3, hide_c, hide_c)
    s1, b1 = _bn(pg, hide_c)
    w_b1 = jnp.zeros((9, 2 * hide_c, band), jnp.float32)
    w_b1 = w_b1.at[:, :hide_c, :hide_c].set(w1.reshape(9, hide_c, hide_c) * s1[None, None, :])
    w_b1 = w_b1.reshape(18 * hide_c, band).astype(bf)

    # branch 2: depthwise 3x3 stride-2 conv as a tap-diagonal GEMM over the z1|z2
    # patches (rows hide_c:2*hide_c of each tap), then a banded 1x1
    wdw = (jax.random.normal(pg.next(), (3, 3, hide_c), jnp.float32)
           * math.sqrt(2.0 / 9.0)).reshape(9, hide_c)
    sdw, bdw = _bn(pg, hide_c)
    dw_blk = wdw[:, :, None] * jnp.eye(hide_c, dtype=jnp.float32)[None] * sdw[None, None, :]
    w_dw = jnp.concatenate([jnp.zeros((9, hide_c, hide_c), jnp.float32), dw_blk], axis=1)
    w_dw = w_dw.reshape(18 * hide_c, hide_c).astype(bf)
    w2c = _conv_w(pg, 1, 1, hide_c, hide_c)
    s2, b2 = _bn(pg, hide_c)
    w_b2c = jnp.zeros((hide_c, band), jnp.float32)
    w_b2c = w_b2c.at[:, hide_c:2 * hide_c].set(w2c * s2[None, :]).astype(bf)

    # branch 3: 3x3 stride-2 dilation-2 conv (pad = dilation*(k//2) = 2) -> band 2
    w3 = _conv_w(pg, 3, 3, hide_c, hide_c)
    s3, b3 = _bn(pg, hide_c)
    w_b3 = jnp.zeros((9 * hide_c, band), jnp.float32)
    w_b3 = w_b3.at[:, 2 * hide_c:3 * hide_c].set(w3 * s3[None, :]).astype(bf)

    # branch 4: (1,3)/(1,2) conv (standalone GEMM), then (3,1)/(2,1) conv -> band 3
    w4a = _conv_w(pg, 1, 3, hide_c, hide_c)
    s4a, b4a = _bn(pg, hide_c)
    w_b4a = (w4a * s4a[None, :]).astype(bf)
    b_b4a = b4a.reshape(1, hide_c)
    w4b = _conv_w(pg, 3, 1, hide_c, hide_c)
    s4b, b4b = _bn(pg, hide_c)
    w_b4b = jnp.zeros((3 * hide_c, band), jnp.float32)
    w_b4b = w_b4b.at[:, 3 * hide_c:].set(w4b * s4b[None, :]).astype(bf)

    # final 1x1 CBR over the branch concat (input rows already in band order)
    w5 = _conv_w(pg, 1, 1, in_c, in_c)
    s5, b5 = _bn(pg, in_c)
    w_1x1 = (w5 * s5[None, :]).astype(bf)

    # packed tail biases: [depthwise-BN | banded-branch-BN | final-1x1-BN]
    b_tail = jnp.stack([
        jnp.concatenate([bdw, jnp.zeros(3 * hide_c, jnp.float32)]),
        jnp.concatenate([b1, b2, b3, b4b]),
        b5,
    ]).astype(jnp.float32)

    return {"w_head": w_head, "b_head": b_head,
            "w_b4a": w_b4a, "b_b4a": b_b4a,
            "w_b1": w_b1, "w_dw": w_dw, "w_b2c": w_b2c, "w_b3": w_b3,
            "w_b4b": w_b4b, "w_1x1": w_1x1, "b_tail": b_tail}


# ----------------------------- demo ------------------------------------------

if __name__ == "__main__":
    IN_C, HIDE_C, OUT_C = 64, 16, 128          # matches Downsample(64, 16, 128) usage
    N, H, W = 2, 16, 16

    params = init_downsample(seed=0, in_c=IN_C, hide_c=HIDE_C, out_c=OUT_C)
    x = jax.random.normal(jax.random.PRNGKey(0), (N, IN_C, H, W), jnp.float32)

    y = downsample_forward(x, params)
    y = jax.block_until_ready(y)

    assert y.shape == (N, 2 * IN_C, H // 2, W // 2), y.shape
    assert bool(jnp.all(jnp.isfinite(y)))
    print("KERNEL_OK")
</pallas_src>

<mosaic_0001>
module attributes {stable_mosaic.version = 11 : i64} {
  func.func @_gemm_bias_relu_kernel(%arg0: i32, %arg1: memref<512x64xbf16, #tpu.memory_space<vmem>>, %arg2: memref<64x64xbf16, #tpu.memory_space<vmem>>, %arg3: memref<1x64xf32, #tpu.memory_space<vmem>>, %arg4: memref<512x64xbf16, #tpu.memory_space<vmem>>) attributes {dimension_semantics = [#tpu.dimension_semantics<parallel>], iteration_bounds = array<i64: 1>, scalar_prefetch = 0 : i64, scratch_operands = 0 : i64, tpu.core_type = #tpu.core_type<tc>, window_params = [{transform_indices = @transform_0, window_bounds = array<i64: 512, 64>}, {pipeline_mode = #tpu.pipeline_mode<synchronous>, transform_indices = @transform_1, window_bounds = array<i64: 64, 64>}, {pipeline_mode = #tpu.pipeline_mode<synchronous>, transform_indices = @transform_2, window_bounds = array<i64: 1, 64>}, {transform_indices = @transform_3, window_bounds = array<i64: 512, 64>}]} {
    %c0 = arith.constant 0 : index
    %c0_0 = arith.constant 0 : index
    %0 = vector.load %arg1[%c0, %c0_0] : memref<512x64xbf16, #tpu.memory_space<vmem>>, vector<512x64xbf16>
    %c0_1 = arith.constant 0 : index
    %c0_2 = arith.constant 0 : index
    %1 = vector.load %arg2[%c0_1, %c0_2] : memref<64x64xbf16, #tpu.memory_space<vmem>>, vector<64x64xbf16>
    %cst = arith.constant dense<0.000000e+00> : vector<512x64xf32>
    %2 = tpu.matmul %0, %1, %cst {dimension_numbers = #tpu.dot_dimension_numbers<[1], [0], [0], [1], [0, 0, 1, 1], [], []>} : vector<512x64xbf16>, vector<64x64xbf16>, vector<512x64xf32> -> vector<512x64xf32>
    %c0_3 = arith.constant 0 : index
    %c0_4 = arith.constant 0 : index
    %3 = vector.load %arg3[%c0_3, %c0_4] : memref<1x64xf32, #tpu.memory_space<vmem>>, vector<1x64xf32>
    %4 = vector.broadcast %3 : vector<1x64xf32> to vector<512x64xf32>
    %5 = arith.addf %2, %4 : vector<512x64xf32>
    %cst_5 = arith.constant 0.000000e+00 : f32
    %6 = vector.broadcast %cst_5 : f32 to vector<512x64xf32>
    %7 = arith.maximumf %5, %6 : vector<512x64xf32>
    %8 = arith.truncf %7 : vector<512x64xf32> to vector<512x64xbf16>
    %c0_6 = arith.constant 0 : index
    %c0_7 = arith.constant 0 : index
    %9 = vector.load %arg4[%c0_6, %c0_7] : memref<512x64xbf16, #tpu.memory_space<vmem>>, vector<512x64xbf16>
    tpu.vector_store %arg4[%c0_6, %c0_7], %8 {strides = array<i32>} : memref<512x64xbf16, #tpu.memory_space<vmem>>, vector<512x64xbf16>,
    return
  }
  func.func @transform_0(%arg0: i32) -> (i32, i32) {
    %c0_i32 = arith.constant 0 : i32
    %c0_i32_0 = arith.constant 0 : i32
    return %arg0, %c0_i32 : i32, i32
  }
  func.func @transform_1(%arg0: i32) -> (i32, i32) {
    %c0_i32 = arith.constant 0 : i32
    %c0_i32_0 = arith.constant 0 : i32
    %c0_i32_1 = arith.constant 0 : i32
    return %c0_i32, %c0_i32_0 : i32, i32
  }
  func.func @transform_2(%arg0: i32) -> (i32, i32) {
    %c0_i32 = arith.constant 0 : i32
    %c0_i32_0 = arith.constant 0 : i32
    %c0_i32_1 = arith.constant 0 : i32
    return %c0_i32, %c0_i32_0 : i32, i32
  }
  func.func @transform_3(%arg0: i32) -> (i32, i32) {
    %c0_i32 = arith.constant 0 : i32
    %c0_i32_0 = arith.constant 0 : i32
    return %arg0, %c0_i32 : i32, i32
  }
}

module attributes {stable_mosaic.version = 11 : i64} {
  func.func @_gemm_bias_relu_kernel(%arg0: i32, %arg1: memref<256x48xbf16, #tpu.memory_space<vmem>>, %arg2: memref<48x16xbf16, #tpu.memory_space<vmem>>, %arg3: memref<1x16xf32, #tpu.memory_space<vmem>>, %arg4: memref<256x16xbf16, #tpu.memory_space<vmem>>) attributes {dimension_semantics = [#tpu.dimension_semantics<parallel>], iteration_bounds = array<i64: 1>, scalar_prefetch = 0 : i64, scratch_operands = 0 : i64, tpu.core_type = #tpu.core_type<tc>, window_params = [{transform_indices = @transform_0, window_bounds = array<i64: 256, 48>}, {pipeline_mode = #tpu.pipeline_mode<synchronous>, transform_indices = @transform_1, window_bounds = array<i64: 48, 16>}, {pipeline_mode = #tpu.pipeline_mode<synchronous>, transform_indices = @transform_2, window_bounds = array<i64: 1, 16>}, {transform_indices = @transform_3, window_bounds = array<i64: 256, 16>}]} {
    %c0 = arith.constant 0 : index
    %c0_0 = arith.constant 0 : index
    %0 = vector.load %arg1[%c0, %c0_0] : memref<256x48xbf16, #tpu.memory_space<vmem>>, vector<256x48xbf16>
    %c0_1 = arith.constant 0 : index
    %c0_2 = arith.constant 0 : index
    %1 = vector.load %arg2[%c0_1, %c0_2] : memref<48x16xbf16, #tpu.memory_space<vmem>>, vector<48x16xbf16>
    %cst = arith.constant dense<0.000000e+00> : vector<256x16xf32>
    %2 = tpu.matmul %0, %1, %cst {dimension_numbers = #tpu.dot_dimension_numbers<[1], [0], [0], [1], [0, 0, 1, 1], [], []>} : vector<256x48xbf16>, vector<48x16xbf16>, vector<256x16xf32> -> vector<256x16xf32>
    %c0_3 = arith.constant 0 : index
    %c0_4 = arith.constant 0 : index
    %3 = vector.load %arg3[%c0_3, %c0_4] : memref<1x16xf32, #tpu.memory_space<vmem>>, vector<1x16xf32>
    %4 = vector.broadcast %3 : vector<1x16xf32> to vector<256x16xf32>
    %5 = arith.addf %2, %4 : vector<256x16xf32>
    %cst_5 = arith.constant 0.000000e+00 : f32
    %6 = vector.broadcast %cst_5 : f32 to vector<256x16xf32>
    %7 = arith.maximumf %5, %6 : vector<256x16xf32>
    %8 = arith.truncf %7 : vector<256x16xf32> to vector<256x16xbf16>
    %c0_6 = arith.constant 0 : index
    %c0_7 = arith.constant 0 : index
    %9 = vector.load %arg4[%c0_6, %c0_7] : memref<256x16xbf16, #tpu.memory_space<vmem>>, vector<256x16xbf16>
    tpu.vector_store %arg4[%c0_6, %c0_7], %8 {strides = array<i32>} : memref<256x16xbf16, #tpu.memory_space<vmem>>, vector<256x16xbf16>,
    return
  }
  func.func @transform_0(%arg0: i32) -> (i32, i32) {
    %c0_i32 = arith.constant 0 : i32
    %c0_i32_0 = arith.constant 0 : i32
    return %arg0, %c0_i32 : i32, i32
  }
  func.func @transform_1(%arg0: i32) -> (i32, i32) {
    %c0_i32 = arith.constant 0 : i32
    %c0_i32_0 = arith.constant 0 : i32
    %c0_i32_1 = arith.constant 0 : i32
    return %c0_i32, %c0_i32_0 : i32, i32
  }
  func.func @transform_2(%arg0: i32) -> (i32, i32) {
    %c0_i32 = arith.constant 0 : i32
    %c0_i32_0 = arith.constant 0 : i32
    %c0_i32_1 = arith.constant 0 : i32
    return %c0_i32, %c0_i32_0 : i32, i32
  }
  func.func @transform_3(%arg0: i32) -> (i32, i32) {
    %c0_i32 = arith.constant 0 : i32
    %c0_i32_0 = arith.constant 0 : i32
    return %arg0, %c0_i32 : i32, i32
  }
}

module attributes {stable_mosaic.version = 11 : i64} {
  func.func @_down_tail_kernel(%arg0: i32, %arg1: memref<9x128x64xf32, #tpu.memory_space<vmem>>, %arg2: memref<128x288xbf16, #tpu.memory_space<vmem>>, %arg3: memref<128x144xbf16, #tpu.memory_space<vmem>>, %arg4: memref<128x48xbf16, #tpu.memory_space<vmem>>, %arg5: memref<288x64xbf16, #tpu.memory_space<vmem>>, %arg6: memref<288x16xbf16, #tpu.memory_space<vmem>>, %arg7: memref<16x64xbf16, #tpu.memory_space<vmem>>, %arg8: memref<144x64xbf16, #tpu.memory_space<vmem>>, %arg9: memref<48x64xbf16, #tpu.memory_space<vmem>>, %arg10: memref<64x64xbf16, #tpu.memory_space<vmem>>, %arg11: memref<3x64xf32, #tpu.memory_space<vmem>>, %arg12: memref<128x128xf32, #tpu.memory_space<vmem>>) attributes {dimension_semantics = [#tpu.dimension_semantics<parallel>], iteration_bounds = array<i64: 1>, scalar_prefetch = 0 : i64, scratch_operands = 0 : i64, tpu.core_type = #tpu.core_type<tc>, window_params = [{transform_indices = @transform_0, window_bounds = array<i64: 9, 128, 64>}, {transform_indices = @transform_1, window_bounds = array<i64: 128, 288>}, {transform_indices = @transform_2, window_bounds = array<i64: 128, 144>}, {transform_indices = @transform_3, window_bounds = array<i64: 128, 48>}, {pipeline_mode = #tpu.pipeline_mode<synchronous>, transform_indices = @transform_4, window_bounds = array<i64: 288, 64>}, {pipeline_mode = #tpu.pipeline_mode<synchronous>, transform_indices = @transform_5, window_bounds = array<i64: 288, 16>}, {pipeline_mode = #tpu.pipeline_mode<synchronous>, transform_indices = @transform_6, window_bounds = array<i64: 16, 64>}, {pipeline_mode = #tpu.pipeline_mode<synchronous>, transform_indices = @transform_7, window_bounds = array<i64: 144, 64>}, {pipeline_mode = #tpu.pipeline_mode<synchronous>, transform_indices = @transform_8, window_bounds = array<i64: 48, 64>}, {pipeline_mode = #tpu.pipeline_mode<synchronous>, transform_indices = @transform_9, window_bounds = array<i64: 64, 64>}, {pipeline_mode = #tpu.pipeline_mode<synchronous>, transform_indices = @transform_10, window_bounds = array<i64: 3, 64>}, {transform_indices = @transform_11, window_bounds = array<i64: 128, 128>}]} {
    %c0 = arith.constant 0 : index
    %c0_0 = arith.constant 0 : index
    %0 = vector.load %arg11[%c0, %c0_0] : memref<3x64xf32, #tpu.memory_space<vmem>>, vector<3x64xf32>
    %c0_1 = arith.constant 0 : index
    %c0_2 = arith.constant 0 : index
    %1 = vector.load %arg2[%c0_1, %c0_2] : memref<128x288xbf16, #tpu.memory_space<vmem>>, vector<128x288xbf16>
    %c0_3 = arith.constant 0 : index
    %c0_4 = arith.constant 0 : index
    %2 = vector.load %arg6[%c0_3, %c0_4] : memref<288x16xbf16, #tpu.memory_space<vmem>>, vector<288x16xbf16>
    %cst = arith.constant dense<0.000000e+00> : vector<128x16xf32>
    %3 = tpu.matmul %1, %2, %cst {dimension_numbers = #tpu.dot_dimension_numbers<[1], [0], [0], [1], [0, 0, 1, 1], [], []>} : vector<128x288xbf16>, vector<288x16xbf16>, vector<128x16xf32> -> vector<128x16xf32>
    %4 = vector.extract_strided_slice %0 {offsets = [0, 0], sizes = [1, 16], strides = [1, 1]} : vector<3x64xf32> to vector<1x16xf32>
    %5 = vector.broadcast %4 : vector<1x16xf32> to vector<128x16xf32>
    %6 = arith.addf %3, %5 : vector<128x16xf32>
    %cst_5 = arith.constant 0.000000e+00 : f32
    %7 = vector.broadcast %cst_5 : f32 to vector<128x16xf32>
    %8 = arith.maximumf %6, %7 : vector<128x16xf32>
    %c0_6 = arith.constant 0 : index
    %c0_7 = arith.constant 0 : index
    %9 = vector.load %arg5[%c0_6, %c0_7] : memref<288x64xbf16, #tpu.memory_space<vmem>>, vector<288x64xbf16>
    %cst_8 = arith.constant dense<0.000000e+00> : vector<128x64xf32>
    %10 = tpu.matmul %1, %9, %cst_8 {dimension_numbers = #tpu.dot_dimension_numbers<[1], [0], [0], [1], [0, 0, 1, 1], [], []>} : vector<128x288xbf16>, vector<288x64xbf16>, vector<128x64xf32> -> vector<128x64xf32>
    %11 = arith.truncf %8 : vector<128x16xf32> to vector<128x16xbf16>
    %c0_9 = arith.constant 0 : index
    %c0_10 = arith.constant 0 : index
    %12 = vector.load %arg7[%c0_9, %c0_10] : memref<16x64xbf16, #tpu.memory_space<vmem>>, vector<16x64xbf16>
    %cst_11 = arith.constant dense<0.000000e+00> : vector<128x64xf32>
    %13 = tpu.matmul %11, %12, %cst_11 {dimension_numbers = #tpu.dot_dimension_numbers<[1], [0], [0], [1], [0, 0, 1, 1], [], []>} : vector<128x16xbf16>, vector<16x64xbf16>, vector<128x64xf32> -> vector<128x64xf32>
    %14 = arith.addf %10, %13 : vector<128x64xf32>
    %c0_12 = arith.constant 0 : index
    %c0_13 = arith.constant 0 : index
    %15 = vector.load %arg3[%c0_12, %c0_13] : memref<128x144xbf16, #tpu.memory_space<vmem>>, vector<128x144xbf16>
    %c0_14 = arith.constant 0 : index
    %c0_15 = arith.constant 0 : index
    %16 = vector.load %arg8[%c0_14, %c0_15] : memref<144x64xbf16, #tpu.memory_space<vmem>>, vector<144x64xbf16>
    %cst_16 = arith.constant dense<0.000000e+00> : vector<128x64xf32>
    %17 = tpu.matmul %15, %16, %cst_16 {dimension_numbers = #tpu.dot_dimension_numbers<[1], [0], [0], [1], [0, 0, 1, 1], [], []>} : vector<128x144xbf16>, vector<144x64xbf16>, vector<128x64xf32> -> vector<128x64xf32>
    %18 = arith.addf %14, %17 : vector<128x64xf32>
    %c0_17 = arith.constant 0 : index
    %c0_18 = arith.constant 0 : index
    %19 = vector.load %arg4[%c0_17, %c0_18] : memref<128x48xbf16, #tpu.memory_space<vmem>>, vector<128x48xbf16>
    %c0_19 = arith.constant 0 : index
    %c0_20 = arith.constant 0 : index
    %20 = vector.load %arg9[%c0_19, %c0_20] : memref<48x64xbf16, #tpu.memory_space<vmem>>, vector<48x64xbf16>
    %cst_21 = arith.constant dense<0.000000e+00> : vector<128x64xf32>
    %21 = tpu.matmul %19, %20, %cst_21 {dimension_numbers = #tpu.dot_dimension_numbers<[1], [0], [0], [1], [0, 0, 1, 1], [], []>} : vector<128x48xbf16>, vector<48x64xbf16>, vector<128x64xf32> -> vector<128x64xf32>
    %22 = arith.addf %18, %21 : vector<128x64xf32>
    %23 = vector.extract_strided_slice %0 {offsets = [1, 0], sizes = [1, 64], strides = [1, 1]} : vector<3x64xf32> to vector<1x64xf32>
    %24 = vector.broadcast %23 : vector<1x64xf32> to vector<128x64xf32>
    %25 = arith.addf %22, %24 : vector<128x64xf32>
    %cst_22 = arith.constant 0.000000e+00 : f32
    %26 = vector.broadcast %cst_22 : f32 to vector<128x64xf32>
    %27 = arith.maximumf %25, %26 : vector<128x64xf32>
    %28 = arith.truncf %27 : vector<128x64xf32> to vector<128x64xbf16>
    %c0_23 = arith.constant 0 : index
    %c0_24 = arith.constant 0 : index
    %29 = vector.load %arg10[%c0_23, %c0_24] : memref<64x64xbf16, #tpu.memory_space<vmem>>, vector<64x64xbf16>
    %cst_25 = arith.constant dense<0.000000e+00> : vector<128x64xf32>
    %30 = tpu.matmul %28, %29, %cst_25 {dimension_numbers = #tpu.dot_dimension_numbers<[1], [0], [0], [1], [0, 0, 1, 1], [], []>} : vector<128x64xbf16>, vector<64x64xbf16>, vector<128x64xf32> -> vector<128x64xf32>
    %31 = vector.extract_strided_slice %0 {offsets = [2, 0], sizes = [1, 64], strides = [1, 1]} : vector<3x64xf32> to vector<1x64xf32>
    %32 = vector.broadcast %31 : vector<1x64xf32> to vector<128x64xf32>
    %33 = arith.addf %30, %32 : vector<128x64xf32>
    %cst_26 = arith.constant 0.000000e+00 : f32
    %34 = vector.broadcast %cst_26 : f32 to vector<128x64xf32>
    %35 = arith.maximumf %33, %34 : vector<128x64xf32>
    %c0_27 = arith.constant 0 : index
    %c0_28 = arith.constant 0 : index
    %c0_29 = arith.constant 0 : index
    %36 = vector.load %arg1[%c0_27, %c0_28, %c0_29] : memref<9x128x64xf32, #tpu.memory_space<vmem>>, vector<1x128x64xf32>
    %37 = vector.shape_cast %36 : vector<1x128x64xf32> to vector<128x64xf32>
    %c1 = arith.constant 1 : index
    %c0_30 = arith.constant 0 : index
    %c0_31 = arith.constant 0 : index
    %38 = vector.load %arg1[%c1, %c0_30, %c0_31] : memref<9x128x64xf32, #tpu.memory_space<vmem>>, vector<1x128x64xf32>
    %39 = vector.shape_cast %38 : vector<1x128x64xf32> to vector<128x64xf32>
    %40 = arith.maximumf %37, %39 : vector<128x64xf32>
    %c2 = arith.constant 2 : index
    %c0_32 = arith.constant 0 : index
    %c0_33 = arith.constant 0 : index
    %41 = vector.load %arg1[%c2, %c0_32, %c0_33] : memref<9x128x64xf32, #tpu.memory_space<vmem>>, vector<1x128x64xf32>
    %42 = vector.shape_cast %41 : vector<1x128x64xf32> to vector<128x64xf32>
    %43 = arith.maximumf %40, %42 : vector<128x64xf32>
    %c3 = arith.constant 3 : index
    %c0_34 = arith.constant 0 : index
    %c0_35 = arith.constant 0 : index
    %44 = vector.load %arg1[%c3, %c0_34, %c0_35] : memref<9x128x64xf32, #tpu.memory_space<vmem>>, vector<1x128x64xf32>
    %45 = vector.shape_cast %44 : vector<1x128x64xf32> to vector<128x64xf32>
    %46 = arith.maximumf %43, %45 : vector<128x64xf32>
    %c4 = arith.constant 4 : index
    %c0_36 = arith.constant 0 : index
    %c0_37 = arith.constant 0 : index
    %47 = vector.load %arg1[%c4, %c0_36, %c0_37] : memref<9x128x64xf32, #tpu.memory_space<vmem>>, vector<1x128x64xf32>
    %48 = vector.shape_cast %47 : vector<1x128x64xf32> to vector<128x64xf32>
    %49 = arith.maximumf %46, %48 : vector<128x64xf32>
    %c5 = arith.constant 5 : index
    %c0_38 = arith.constant 0 : index
    %c0_39 = arith.constant 0 : index
    %50 = vector.load %arg1[%c5, %c0_38, %c0_39] : memref<9x128x64xf32, #tpu.memory_space<vmem>>, vector<1x128x64xf32>
    %51 = vector.shape_cast %50 : vector<1x128x64xf32> to vector<128x64xf32>
    %52 = arith.maximumf %49, %51 : vector<128x64xf32>
    %c6 = arith.constant 6 : index
    %c0_40 = arith.constant 0 : index
    %c0_41 = arith.constant 0 : index
    %53 = vector.load %arg1[%c6, %c0_40, %c0_41] : memref<9x128x64xf32, #tpu.memory_space<vmem>>, vector<1x128x64xf32>
    %54 = vector.shape_cast %53 : vector<1x128x64xf32> to vector<128x64xf32>
    %55 = arith.maximumf %52, %54 : vector<128x64xf32>
    %c7 = arith.constant 7 : index
    %c0_42 = arith.constant 0 : index
    %c0_43 = arith.constant 0 : index
    %56 = vector.load %arg1[%c7, %c0_42, %c0_43] : memref<9x128x64xf32, #tpu.memory_space<vmem>>, vector<1x128x64xf32>
    %57 = vector.shape_cast %56 : vector<1x128x64xf32> to vector<128x64xf32>
    %58 = arith.maximumf %55, %57 : vector<128x64xf32>
    %c8 = arith.constant 8 : index
    %c0_44 = arith.constant 0 : index
    %c0_45 = arith.constant 0 : index
    %59 = vector.load %arg1[%c8, %c0_44, %c0_45] : memref<9x128x64xf32, #tpu.memory_space<vmem>>, vector<1x128x64xf32>
    %60 = vector.shape_cast %59 : vector<1x128x64xf32> to vector<128x64xf32>
    %61 = arith.maximumf %58, %60 : vector<128x64xf32>
    %62 = tpu.concatenate %61, %35 in 1 : vector<128x64xf32>, vector<128x64xf32> -> vector<128x128xf32>
    %c0_46 = arith.constant 0 : index
    %c0_47 = arith.constant 0 : index
    %63 = vector.load %arg12[%c0_46, %c0_47] : memref<128x128xf32, #tpu.memory_space<vmem>>, vector<128x128xf32>
    tpu.vector_store %arg12[%c0_46, %c0_47], %62 {strides = array<i32>} : memref<128x128xf32, #tpu.memory_space<vmem>>, vector<128x128xf32>,
    return
  }
  func.func @transform_0(%arg0: i32) -> (i32, i32, i32) {
    %c0_i32 = arith.constant 0 : i32
    %c0_i32_0 = arith.constant 0 : i32
    %c0_i32_1 = arith.constant 0 : i32
    return %c0_i32, %arg0, %c0_i32_0 : i32, i32, i32
  }
  func.func @transform_1(%arg0: i32) -> (i32, i32) {
    %c0_i32 = arith.constant 0 : i32
    %c0_i32_0 = arith.constant 0 : i32
    return %arg0, %c0_i32 : i32, i32
  }
  func.func @transform_2(%arg0: i32) -> (i32, i32) {
    %c0_i32 = arith.constant 0 : i32
    %c0_i32_0 = arith.constant 0 : i32
    return %arg0, %c0_i32 : i32, i32
  }
  func.func @transform_3(%arg0: i32) -> (i32, i32) {
    %c0_i32 = arith.constant 0 : i32
    %c0_i32_0 = arith.constant 0 : i32
    return %arg0, %c0_i32 : i32, i32
  }
  func.func @transform_4(%arg0: i32) -> (i32, i32) {
    %c0_i32 = arith.constant 0 : i32
    %c0_i32_0 = arith.constant 0 : i32
    %c0_i32_1 = arith.constant 0 : i32
    return %c0_i32, %c0_i32_0 : i32, i32
  }
  func.func @transform_5(%arg0: i32) -> (i32, i32) {
    %c0_i32 = arith.constant 0 : i32
    %c0_i32_0 = arith.constant 0 : i32
    %c0_i32_1 = arith.constant 0 : i32
    return %c0_i32, %c0_i32_0 : i32, i32
  }
  func.func @transform_6(%arg0: i32) -> (i32, i32) {
    %c0_i32 = arith.constant 0 : i32
    %c0_i32_0 = arith.constant 0 : i32
    %c0_i32_1 = arith.constant 0 : i32
    return %c0_i32, %c0_i32_0 : i32, i32
  }
  func.func @transform_7(%arg0: i32) -> (i32, i32) {
    %c0_i32 = arith.constant 0 : i32
    %c0_i32_0 = arith.constant 0 : i32
    %c0_i32_1 = arith.constant 0 : i32
    return %c0_i32, %c0_i32_0 : i32, i32
  }
  func.func @transform_8(%arg0: i32) -> (i32, i32) {
    %c0_i32 = arith.constant 0 : i32
    %c0_i32_0 = arith.constant 0 : i32
    %c0_i32_1 = arith.constant 0 : i32
    return %c0_i32, %c0_i32_0 : i32, i32
  }
  func.func @transform_9(%arg0: i32) -> (i32, i32) {
    %c0_i32 = arith.constant 0 : i32
    %c0_i32_0 = arith.constant 0 : i32
    %c0_i32_1 = arith.constant 0 : i32
    return %c0_i32, %c0_i32_0 : i32, i32
  }
  func.func @transform_10(%arg0: i32) -> (i32, i32) {
    %c0_i32 = arith.constant 0 : i32
    %c0_i32_0 = arith.constant 0 : i32
    %c0_i32_1 = arith.constant 0 : i32
    return %c0_i32, %c0_i32_0 : i32, i32
  }
  func.func @transform_11(%arg0: i32) -> (i32, i32) {
    %c0_i32 = arith.constant 0 : i32
    %c0_i32_0 = arith.constant 0 : i32
    return %arg0, %c0_i32 : i32, i32
  }
}

</mosaic_0001>

<llo_original>
// kernel: downsample_forward_nhwc.3
$region0: #{downsample_forward_nhwc.3}
  #allocation0 [shape = 'u32[]', space=smem, size = 0x4, offset = 0x4, fixed_abs, tag = 'smem constant byte address 0x4 - core index']
  #allocation1 [shape = 'u32[144,128]{1,0:T(1,128)}', space=vmem, size = 0x12000, scoped, tag = 'internal scratch']
  %s0 = inlined_call_operand.vmem [shape: bf16[512,64], index: 0, kind: input, shape index: {}]
  %s1 = inlined_call_operand.vmem [shape: bf16[64,64], index: 1, kind: input, shape index: {}]
  %s2 = inlined_call_operand.vmem [shape: f32[1,64], index: 2, kind: input, shape index: {}]
  %s3 = inlined_call_operand.vmem [shape: bf16[512,64], index: 3, kind: output, shape index: {}]
  %s4 = sld [smem:[#allocation0]]
  $region22: #{downsample_forward_nhwc.3} parent=0
    _
  %s6 = ssub.s32 1, %s4
  %s7 = scalar_select 0, %s6, %s4
  // Predicated region
  $region2: #{downsample_forward_nhwc.3} parent=0 // pred_check
    _
  $region3: #{downsample_forward_nhwc.3} parent=0 // pred_check_branch
    %9 = sbr.rel (0) target = $region5
  $region4: #{downsample_forward_nhwc.3} parent=0 // pred_region
    _
  $region5: #{downsample_forward_nhwc.3} parent=0 // pred_fallthru
    _
  // Predicated region
  $region6: #{downsample_forward_nhwc.3} parent=0 // pred_check
    _
  $region7: #{downsample_forward_nhwc.3} parent=0 // pred_check_branch
    %11 = sbr.rel (0) target = $region9
  $region8: #{downsample_forward_nhwc.3} parent=0 // pred_region
    _
  $region9: #{downsample_forward_nhwc.3} parent=0 // pred_fallthru
    _
  // Predicated region
  $region10: #{downsample_forward_nhwc.3} parent=0 // pred_check
    _
  $region11: #{downsample_forward_nhwc.3} parent=0 // pred_check_branch
    %13 = sbr.rel (0) target = $region13
  $region12: #{downsample_forward_nhwc.3} parent=0 // pred_region
    _
  $region13: #{downsample_forward_nhwc.3} parent=0 // pred_fallthru
    _
  %v15 = vld [vmem:[%s0] sm:$0xf]
  %v16 = vld [vmem:[%s0 + $0x4] sm:$0xf]
  %v17 = vld [vmem:[%s0 + $0x8] sm:$0xf]
  %v18 = vld [vmem:[%s0 + $0xc] sm:$0xf]
  %v19 = vld [vmem:[%s0 + $0x10] sm:$0xf]
  %v20 = vld [vmem:[%s0 + $0x14] sm:$0xf]
  %v21 = vld [vmem:[%s0 + $0x18] sm:$0xf]
  %v22 = vld [vmem:[%s0 + $0x1c] sm:$0xf]
  %v23 = vld [vmem:[%s0 + $0x20] sm:$0xf]
  %v24 = vld [vmem:[%s0 + $0x24] sm:$0xf]
  %v25 = vld [vmem:[%s0 + $0x28] sm:$0xf]
  %v26 = vld [vmem:[%s0 + $0x2c] sm:$0xf]
  %v27 = vld [vmem:[%s0 + $0x30] sm:$0xf]
  %v28 = vld [vmem:[%s0 + $0x34] sm:$0xf]
  %v29 = vld [vmem:[%s0 + $0x38] sm:$0xf]
  %v30 = vld [vmem:[%s0 + $0x3c] sm:$0xf]
  %v31 = vld [vmem:[%s0 + $0x40] sm:$0xf]
  %v32 = vld [vmem:[%s0 + $0x44] sm:$0xf]
  %v33 = vld [vmem:[%s0 + $0x48] sm:$0xf]
  %v34 = vld [vmem:[%s0 + $0x4c] sm:$0xf]
  %v35 = vld [vmem:[%s0 + $0x50] sm:$0xf]
  %v36 = vld [vmem:[%s0 + $0x54] sm:$0xf]
  %v37 = vld [vmem:[%s0 + $0x58] sm:$0xf]
  %v38 = vld [vmem:[%s0 + $0x5c] sm:$0xf]
  %v39 = vld [vmem:[%s0 + $0x60] sm:$0xf]
  %v40 = vld [vmem:[%s0 + $0x64] sm:$0xf]
  %v41 = vld [vmem:[%s0 + $0x68] sm:$0xf]
  %v42 = vld [vmem:[%s0 + $0x6c] sm:$0xf]
  %v43 = vld [vmem:[%s0 + $0x70] sm:$0xf]
  %v44 = vld [vmem:[%s0 + $0x74] sm:$0xf]
  %v45 = vld [vmem:[%s0 + $0x78] sm:$0xf]
  %v46 = vld [vmem:[%s0 + $0x7c] sm:$0xf]
  %v47 = vld [vmem:[%s0 + $0x80] sm:$0xf]
  %v48 = vld [vmem:[%s0 + $0x84] sm:$0xf]
  %v49 = vld [vmem:[%s0 + $0x88] sm:$0xf]
  %v50 = vld [vmem:[%s0 + $0x8c] sm:$0xf]
  %v51 = vld [vmem:[%s0 + $0x90] sm:$0xf]
  %v52 = vld [vmem:[%s0 + $0x94] sm:$0xf]
  %v53 = vld [vmem:[%s0 + $0x98] sm:$0xf]
  %v54 = vld [vmem:[%s0 + $0x9c] sm:$0xf]
  %v55 = vld [vmem:[%s0 + $0xa0] sm:$0xf]
  %v56 = vld [vmem:[%s0 + $0xa4] sm:$0xf]
  %v57 = vld [vmem:[%s0 + $0xa8] sm:$0xf]
  %v58 = vld [vmem:[%s0 + $0xac] sm:$0xf]
  %v59 = vld [vmem:[%s0 + $0xb0] sm:$0xf]
  %v60 = vld [vmem:[%s0 + $0xb4] sm:$0xf]
  %v61 = vld [vmem:[%s0 + $0xb8] sm:$0xf]
  %v62 = vld [vmem:[%s0 + $0xbc] sm:$0xf]
  %v63 = vld [vmem:[%s0 + $0xc0] sm:$0xf]
  %v64 = vld [vmem:[%s0 + $0xc4] sm:$0xf]
  %v65 = vld [vmem:[%s0 + $0xc8] sm:$0xf]
  %v66 = vld [vmem:[%s0 + $0xcc] sm:$0xf]
  %v67 = vld [vmem:[%s0 + $0xd0] sm:$0xf]
  %v68 = vld [vmem:[%s0 + $0xd4] sm:$0xf]
  %v69 = vld [vmem:[%s0 + $0xd8] sm:$0xf]
  %v70 = vld [vmem:[%s0 + $0xdc] sm:$0xf]
  %v71 = vld [vmem:[%s0 + $0xe0] sm:$0xf]
  %v72 = vld [vmem:[%s0 + $0xe4] sm:$0xf]
  %v73 = vld [vmem:[%s0 + $0xe8] sm:$0xf]
  %v74 = vld [vmem:[%s0 + $0xec] sm:$0xf]
  %v75 = vld [vmem:[%s0 + $0xf0] sm:$0xf]
  %v76 = vld [vmem:[%s0 + $0xf4] sm:$0xf]
  %v77 = vld [vmem:[%s0 + $0xf8] sm:$0xf]
  %v78 = vld [vmem:[%s0 + $0xfc] sm:$0xf]
  %v79 = vld [vmem:[%s1] sm:$0xf]
  %v80 = vld [vmem:[%s1 + $0x4] sm:$0xf]
  %v81 = vld [vmem:[%s1 + $0x8] sm:$0xf]
  %v82 = vld [vmem:[%s1 + $0xc] sm:$0xf]
  %v83 = vld [vmem:[%s1 + $0x10] sm:$0xf]
  %v84 = vld [vmem:[%s1 + $0x14] sm:$0xf]
  %v85 = vld [vmem:[%s1 + $0x18] sm:$0xf]
  %v86 = vld [vmem:[%s1 + $0x1c] sm:$0xf]
  %v87 = vld [vmem:[%s2] sm:$0x1]
  %v89 = vlaneseq
  %v90 = vshrl.u32 %v89, 7
  %v91 = vsub.s32 0, %v90
  %v92 = vrot.slane %v87, %v91
  %v158 = vunpack.c.l.b16 %v15
  %v159 = vunpack.c.l.b16 %v16
  %v160 = vunpack.c.l.b16 %v17
  %v161 = vunpack.c.l.b16 %v18
  %v162 = vunpack.c.l.b16 %v19
  %v163 = vunpack.c.l.b16 %v20
  %v164 = vunpack.c.l.b16 %v21
  %v165 = vunpack.c.l.b16 %v22
  %v166 = vunpack.c.l.b16 %v23
  %v167 = vunpack.c.l.b16 %v24
  %v168 = vunpack.c.l.b16 %v25
  %v169 = vunpack.c.l.b16 %v26
  %v170 = vunpack.c.l.b16 %v27
  %v171 = vunpack.c.l.b16 %v28
  %v172 = vunpack.c.l.b16 %v29
  %v173 = vunpack.c.l.b16 %v30
  %v174 = vunpack.c.l.b16 %v31
  %v175 = vunpack.c.l.b16 %v32
  %v176 = vunpack.c.l.b16 %v33
  %v177 = vunpack.c.l.b16 %v34
  %v178 = vunpack.c.l.b16 %v35
  %v179 = vunpack.c.l.b16 %v36
  %v180 = vunpack.c.l.b16 %v37
  %v181 = vunpack.c.l.b16 %v38
  %v182 = vunpack.c.l.b16 %v39
  %v183 = vunpack.c.l.b16 %v40
  %v184 = vunpack.c.l.b16 %v41
  %v185 = vunpack.c.l.b16 %v42
  %v186 = vunpack.c.l.b16 %v43
  %v187 = vunpack.c.l.b16 %v44
  %v188 = vunpack.c.l.b16 %v45
  %v189 = vunpack.c.l.b16 %v46
  %v190 = vunpack.c.l.b16 %v47
  %v191 = vunpack.c.l.b16 %v48
  %v192 = vunpack.c.l.b16 %v49
  %v193 = vunpack.c.l.b16 %v50
  %v194 = vunpack.c.l.b16 %v51
  %v195 = vunpack.c.l.b16 %v52
  %v196 = vunpack.c.l.b16 %v53
  %v197 = vunpack.c.l.b16 %v54
  %v198 = vunpack.c.l.b16 %v55
  %v199 = vunpack.c.l.b16 %v56
  %v200 = vunpack.c.l.b16 %v57
  %v201 = vunpack.c.l.b16 %v58
  %v202 = vunpack.c.l.b16 %v59
  %v203 = vunpack.c.l.b16 %v60
  %v204 = vunpack.c.l.b16 %v61
  %v205 = vunpack.c.l.b16 %v62
  %v206 = vunpack.c.l.b16 %v63
  %v207 = vunpack.c.l.b16 %v64
  %v208 = vunpack.c.l.b16 %v65
  %v209 = vunpack.c.l.b16 %v66
  %v210 = vunpack.c.l.b16 %v67
  %v211 = vunpack.c.l.b16 %v68
  %v212 = vunpack.c.l.b16 %v69
  %v213 = vunpack.c.l.b16 %v70
  %v214 = vunpack.c.l.b16 %v71
  %v215 = vunpack.c.l.b16 %v72
  %v216 = vunpack.c.l.b16 %v73
  %v217 = vunpack.c.l.b16 %v74
  %v218 = vunpack.c.l.b16 %v75
  %v219 = vunpack.c.l.b16 %v76
  %v220 = vunpack.c.l.b16 %v77
  %v221 = vunpack.c.l.b16 %v78
  %v222 = vpack.c.b16 %v159, %v158
  %v223 = vpack.c.b16 %v161, %v160
  %v224 = vpack.c.b16 %v163, %v162
  %v225 = vpack.c.b16 %v165, %v164
  %v226 = vpack.c.b16 %v167, %v166
  %v227 = vpack.c.b16 %v169, %v168
  %v228 = vpack.c.b16 %v171, %v170
  %v229 = vpack.c.b16 %v173, %v172
  %v230 = vpack.c.b16 %v175, %v174
  %v231 = vpack.c.b16 %v177, %v176
  %v232 = vpack.c.b16 %v179, %v178
  %v233 = vpack.c.b16 %v181, %v180
  %v234 = vpack.c.b16 %v183, %v182
  %v235 = vpack.c.b16 %v185, %v184
  %v236 = vpack.c.b16 %v187, %v186
  %v237 = vpack.c.b16 %v189, %v188
  %v238 = vpack.c.b16 %v191, %v190
  %v239 = vpack.c.b16 %v193, %v192
  %v240 = vpack.c.b16 %v195, %v194
  %v241 = vpack.c.b16 %v197, %v196
  %v242 = vpack.c.b16 %v199, %v198
  %v243 = vpack.c.b16 %v201, %v200
  %v244 = vpack.c.b16 %v203, %v202
  %v245 = vpack.c.b16 %v205, %v204
  %v246 = vpack.c.b16 %v207, %v206
  %v247 = vpack.c.b16 %v209, %v208
  %v248 = vpack.c.b16 %v211, %v210
  %v249 = vpack.c.b16 %v213, %v212
  %v250 = vpack.c.b16 %v215, %v214
  %v251 = vpack.c.b16 %v217, %v216
  %v252 = vpack.c.b16 %v219, %v218
  %v253 = vpack.c.b16 %v221, %v220
  %v262 = vunpack.c.l.b16 %v79
  %v263 = vunpack.c.l.b16 %v80
  %v264 = vunpack.c.l.b16 %v81
  %v265 = vunpack.c.l.b16 %v82
  %v266 = vunpack.c.l.b16 %v83
  %v267 = vunpack.c.l.b16 %v84
  %v268 = vunpack.c.l.b16 %v85
  %v269 = vunpack.c.l.b16 %v86
  %v270 = vpack.c.b16 %v263, %v262
  %v271 = vpack.c.b16 %v265, %v264
  %v272 = vpack.c.b16 %v267, %v266
  %v273 = vpack.c.b16 %v269, %v268
  %vm278 = vcmask 523264
  %v280 = vsel %vm278, %v222, 0
  %v283 = vsel %vm278, %v223, 0
  %v286 = vsel %vm278, %v224, 0
  %v289 = vsel %vm278, %v225, 0
  %v292 = vsel %vm278, %v226, 0
  %v295 = vsel %vm278, %v227, 0
  %v298 = vsel %vm278, %v228, 0
  %v301 = vsel %vm278, %v229, 0
  %v304 = vsel %vm278, %v230, 0
  %v307 = vsel %vm278, %v231, 0
  %v310 = vsel %vm278, %v232, 0
  %v313 = vsel %vm278, %v233, 0
  %v316 = vsel %vm278, %v234, 0
  %v319 = vsel %vm278, %v235, 0
  %v322 = vsel %vm278, %v236, 0
  %v325 = vsel %vm278, %v237, 0
  %v328 = vsel %vm278, %v238, 0
  %v331 = vsel %vm278, %v239, 0
  %v334 = vsel %vm278, %v240, 0
  %v337 = vsel %vm278, %v241, 0
  %v340 = vsel %vm278, %v242, 0
  %v343 = vsel %vm278, %v243, 0
  %v346 = vsel %vm278, %v244, 0
  %v349 = vsel %vm278, %v245, 0
  %v352 = vsel %vm278, %v246, 0
  %v355 = vsel %vm278, %v247, 0
  %v358 = vsel %vm278, %v248, 0
  %v361 = vsel %vm278, %v249, 0
  %v364 = vsel %vm278, %v250, 0
  %v367 = vsel %vm278, %v251, 0
  %v370 = vsel %vm278, %v252, 0
  %v373 = vsel %vm278, %v253, 0
  %375 = vmatprep.subr.bf16.mxu0 0
  %376 = vmatpush1.bf16.msra.mxu0 0
  %377 = vmatprep.subr.bf16.mxu0 0
  %378 = vmatpush1.bf16.msra.mxu0 0
  %379 = vmatprep.subr.bf16.mxu0 0
  %380 = vmatpush1.bf16.msra.mxu0 0
  %381 = vmatprep.subr.bf16.mxu0 0
  %382 = vmatpush1.bf16.msra.mxu0 0
  %383 = vmatprep.subr.bf16.mxu0 0
  %384 = vmatpush1.bf16.msra.mxu0 %v273
  %385 = vmatprep.subr.bf16.mxu0 0
  %386 = vmatpush1.bf16.msra.mxu0 %v272
  %387 = vmatprep.subr.bf16.mxu0 0
  %388 = vmatpush1.bf16.msra.mxu0 %v271
  %389 = vmatprep.subr.bf16.mxu0 0
  %390 = vmatpush1.bf16.msra.mxu0 %v270
  %391 = vmatprep.subr.bf16.mxu0 0
  %392 = vmatpush2.bf16.msra.mxu0 0
  %393 = vmatprep.subr.bf16.mxu0 0
  %394 = vmatpush2.bf16.msra.mxu0 0
  %395 = vmatprep.subr.bf16.mxu0 0
  %396 = vmatpush2.bf16.msra.mxu0 0
  %397 = vmatprep.subr.bf16.mxu0 0
  %398 = vmatpush2.bf16.msra.mxu0 0
  %399 = vmatprep.subr.bf16.mxu0 0
  %400 = vmatpush2.bf16.msra.mxu0 0
  %401 = vmatprep.subr.bf16.mxu0 0
  %402 = vmatpush2.bf16.msra.mxu0 0
  %403 = vmatprep.subr.bf16.mxu0 0
  %404 = vmatpush2.bf16.msra.mxu0 0
  %405 = vmatprep.subr.bf16.mxu0 0
  %406 = vmatpush2.bf16.msra.mxu0 0
  %407 = vmatprep.mubr.bf16.mxu0 0
  %408 = vmatmul.mubr.bf16.gmra.mxu0 %v280
  %v409 = vpop.f32.mrf.mxu0
  %v410 = vadd.f32 %v92, %v409
  %v411 = vpop.f32.mrf.mxu0
  %v412 = vpop.f32.mrf.mxu0
  %v413 = vadd.f32 %v92, %v412
  %v414 = vpop.f32.mrf.mxu0
  %415 = vmatprep.mubr.bf16.mxu0 0
  %416 = vmatmul.mubr.bf16.gmra.mxu0 %v283
  %v417 = vpop.f32.mrf.mxu0
  %v418 = vadd.f32 %v92, %v417
  %v419 = vpop.f32.mrf.mxu0
  %v420 = vpop.f32.mrf.mxu0
  %v421 = vadd.f32 %v92, %v420
  %v422 = vpop.f32.mrf.mxu0
  %423 = vmatprep.mubr.bf16.mxu0 0
  %424 = vmatmul.mubr.bf16.gmra.mxu0 %v286
  %v425 = vpop.f32.mrf.mxu0
  %v426 = vadd.f32 %v92, %v425
  %v427 = vpop.f32.mrf.mxu0
  %v428 = vpop.f32.mrf.mxu0
  %v429 = vadd.f32 %v92, %v428
  %v430 = vpop.f32.mrf.mxu0
  %431 = vmatprep.mubr.bf16.mxu0 0
  %432 = vmatmul.mubr.bf16.gmra.mxu0 %v289
  %v433 = vpop.f32.mrf.mxu0
  %v434 = vadd.f32 %v92, %v433
  %v435 = vpop.f32.mrf.mxu0
  %v436 = vpop.f32.mrf.mxu0
  %v437 = vadd.f32 %v92, %v436
  %v438 = vpop.f32.mrf.mxu0
  %439 = vmatprep.mubr.bf16.mxu0 0
  %440 = vmatmul.mubr.bf16.gmra.mxu0 %v292
  %v441 = vpop.f32.mrf.mxu0
  %v442 = vadd.f32 %v92, %v441
  %v443 = vpop.f32.mrf.mxu0
  %v444 = vpop.f32.mrf.mxu0
  %v445 = vadd.f32 %v92, %v444
  %v446 = vpop.f32.mrf.mxu0
  %447 = vmatprep.mubr.bf16.mxu0 0
  %448 = vmatmul.mubr.bf16.gmra.mxu0 %v295
  %v449 = vpop.f32.mrf.mxu0
  %v450 = vadd.f32 %v92, %v449
  %v451 = vpop.f32.mrf.mxu0
  %v452 = vpop.f32.mrf.mxu0
  %v453 = vadd.f32 %v92, %v452
  %v454 = vpop.f32.mrf.mxu0
  %455 = vmatprep.mubr.bf16.mxu0 0
  %456 = vmatmul.mubr.bf16.gmra.mxu0 %v298
  %v457 = vpop.f32.mrf.mxu0
  %v458 = vadd.f32 %v92, %v457
  %v459 = vpop.f32.mrf.mxu0
  %v460 = vpop.f32.mrf.mxu0
  %v461 = vadd.f32 %v92, %v460
  %v462 = vpop.f32.mrf.mxu0
  %463 = vmatprep.mubr.bf16.mxu0 0
  %464 = vmatmul.mubr.bf16.gmra.mxu0 %v301
  %v465 = vpop.f32.mrf.mxu0
  %v466 = vadd.f32 %v92, %v465
  %v467 = vpop.f32.mrf.mxu0
  %v468 = vpop.f32.mrf.mxu0
  %v469 = vadd.f32 %v92, %v468
  %v470 = vpop.f32.mrf.mxu0
  %471 = vmatprep.mubr.bf16.mxu0 0
  %472 = vmatmul.mubr.bf16.gmra.mxu0 %v304
  %v473 = vpop.f32.mrf.mxu0
  %v474 = vadd.f32 %v92, %v473
  %v475 = vpop.f32.mrf.mxu0
  %v476 = vpop.f32.mrf.mxu0
  %v477 = vadd.f32 %v92, %v476
  %v478 = vpop.f32.mrf.mxu0
  %479 = vmatprep.mubr.bf16.mxu0 0
  %480 = vmatmul.mubr.bf16.gmra.mxu0 %v307
  %v481 = vpop.f32.mrf.mxu0
  %v482 = vadd.f32 %v92, %v481
  %v483 = vpop.f32.mrf.mxu0
  %v484 = vpop.f32.mrf.mxu0
  %v485 = vadd.f32 %v92, %v484
  %v486 = vpop.f32.mrf.mxu0
  %487 = vmatprep.mubr.bf16.mxu0 0
  %488 = vmatmul.mubr.bf16.gmra.mxu0 %v310
  %v489 = vpop.f32.mrf.mxu0
  %v490 = vadd.f32 %v92, %v489
  %v491 = vpop.f32.mrf.mxu0
  %v492 = vpop.f32.mrf.mxu0
  %v493 = vadd.f32 %v92, %v492
  %v494 = vpop.f32.mrf.mxu0
  %495 = vmatprep.mubr.bf16.mxu0 0
  %496 = vmatmul.mubr.bf16.gmra.mxu0 %v313
  %v497 = vpop.f32.mrf.mxu0
  %v498 = vadd.f32 %v92, %v497
  %v499 = vpop.f32.mrf.mxu0
  %v500 = vpop.f32.mrf.mxu0
  %v501 = vadd.f32 %v92, %v500
  %v502 = vpop.f32.mrf.mxu0
  %503 = vmatprep.mubr.bf16.mxu0 0
  %504 = vmatmul.mubr.bf16.gmra.mxu0 %v316
  %v505 = vpop.f32.mrf.mxu0
  %v506 = vadd.f32 %v92, %v505
  %v507 = vpop.f32.mrf.mxu0
  %v508 = vpop.f32.mrf.mxu0
  %v509 = vadd.f32 %v92, %v508
  %v510 = vpop.f32.mrf.mxu0
  %511 = vmatprep.mubr.bf16.mxu0 0
  %512 = vmatmul.mubr.bf16.gmra.mxu0 %v319
  %v513 = vpop.f32.mrf.mxu0
  %v514 = vadd.f32 %v92, %v513
  %v515 = vpop.f32.mrf.mxu0
  %v516 = vpop.f32.mrf.mxu0
  %v517 = vadd.f32 %v92, %v516
  %v518 = vpop.f32.mrf.mxu0
  %519 = vmatprep.mubr.bf16.mxu0 0
  %520 = vmatmul.mubr.bf16.gmra.mxu0 %v322
  %v521 = vpop.f32.mrf.mxu0
  %v522 = vadd.f32 %v92, %v521
  %v523 = vpop.f32.mrf.mxu0
  %v524 = vpop.f32.mrf.mxu0
  %v525 = vadd.f32 %v92, %v524
  %v526 = vpop.f32.mrf.mxu0
  %527 = vmatprep.mubr.bf16.mxu0 0
  %528 = vmatmul.mubr.bf16.gmra.mxu0 %v325
  %v529 = vpop.f32.mrf.mxu0
  %v530 = vadd.f32 %v92, %v529
  %v531 = vpop.f32.mrf.mxu0
  %v532 = vpop.f32.mrf.mxu0
  %v533 = vadd.f32 %v92, %v532
  %v534 = vpop.f32.mrf.mxu0
  %535 = vmatprep.mubr.bf16.mxu0 0
  %536 = vmatmul.mubr.bf16.gmra.mxu0 %v328
  %v537 = vpop.f32.mrf.mxu0
  %v538 = vadd.f32 %v92, %v537
  %v539 = vpop.f32.mrf.mxu0
  %v540 = vpop.f32.mrf.mxu0
  %v541 = vadd.f32 %v92, %v540
  %v542 = vpop.f32.mrf.mxu0
  %543 = vmatprep.mubr.bf16.mxu0 0
  %544 = vmatmul.mubr.bf16.gmra.mxu0 %v331
  %v545 = vpop.f32.mrf.mxu0
  %v546 = vadd.f32 %v92, %v545
  %v547 = vpop.f32.mrf.mxu0
  %v548 = vpop.f32.mrf.mxu0
  %v549 = vadd.f32 %v92, %v548
  %v550 = vpop.f32.mrf.mxu0
  %551 = vmatprep.mubr.bf16.mxu0 0
  %552 = vmatmul.mubr.bf16.gmra.mxu0 %v334
  %v553 = vpop.f32.mrf.mxu0
  %v554 = vadd.f32 %v92, %v553
  %v555 = vpop.f32.mrf.mxu0
  %v556 = vpop.f32.mrf.mxu0
  %v557 = vadd.f32 %v92, %v556
  %v558 = vpop.f32.mrf.mxu0
  %559 = vmatprep.mubr.bf16.mxu0 0
  %560 = vmatmul.mubr.bf16.gmra.mxu0 %v337
  %v561 = vpop.f32.mrf.mxu0
  %v562 = vadd.f32 %v92, %v561
  %v563 = vpop.f32.mrf.mxu0
  %v564 = vpop.f32.mrf.mxu0
  %v565 = vadd.f32 %v92, %v564
  %v566 = vpop.f32.mrf.mxu0
  %567 = vmatprep.mubr.bf16.mxu0 0
  %568 = vmatmul.mubr.bf16.gmra.mxu0 %v340
  %v569 = vpop.f32.mrf.mxu0
  %v570 = vadd.f32 %v92, %v569
  %v571 = vpop.f32.mrf.mxu0
  %v572 = vpop.f32.mrf.mxu0
  %v573 = vadd.f32 %v92, %v572
  %v574 = vpop.f32.mrf.mxu0
  %575 = vmatprep.mubr.bf16.mxu0 0
  %576 = vmatmul.mubr.bf16.gmra.mxu0 %v343
  %v577 = vpop.f32.mrf.mxu0
  %v578 = vadd.f32 %v92, %v577
  %v579 = vpop.f32.mrf.mxu0
  %v580 = vpop.f32.mrf.mxu0
  %v581 = vadd.f32 %v92, %v580
  %v582 = vpop.f32.mrf.mxu0
  %583 = vmatprep.mubr.bf16.mxu0 0
  %584 = vmatmul.mubr.bf16.gmra.mxu0 %v346
  %v585 = vpop.f32.mrf.mxu0
  %v586 = vadd.f32 %v92, %v585
  %v587 = vpop.f32.mrf.mxu0
  %v588 = vpop.f32.mrf.mxu0
  %v589 = vadd.f32 %v92, %v588
  %v590 = vpop.f32.mrf.mxu0
  %591 = vmatprep.mubr.bf16.mxu0 0
  %592 = vmatmul.mubr.bf16.gmra.mxu0 %v349
  %v593 = vpop.f32.mrf.mxu0
  %v594 = vadd.f32 %v92, %v593
  %v595 = vpop.f32.mrf.mxu0
  %v596 = vpop.f32.mrf.mxu0
  %v597 = vadd.f32 %v92, %v596
  %v598 = vpop.f32.mrf.mxu0
  %599 = vmatprep.mubr.bf16.mxu0 0
  %600 = vmatmul.mubr.bf16.gmra.mxu0 %v352
  %v601 = vpop.f32.mrf.mxu0
  %v602 = vadd.f32 %v92, %v601
  %v603 = vpop.f32.mrf.mxu0
  %v604 = vpop.f32.mrf.mxu0
  %v605 = vadd.f32 %v92, %v604
  %v606 = vpop.f32.mrf.mxu0
  %607 = vmatprep.mubr.bf16.mxu0 0
  %608 = vmatmul.mubr.bf16.gmra.mxu0 %v355
  %v609 = vpop.f32.mrf.mxu0
  %v610 = vadd.f32 %v92, %v609
  %v611 = vpop.f32.mrf.mxu0
  %v612 = vpop.f32.mrf.mxu0
  %v613 = vadd.f32 %v92, %v612
  %v614 = vpop.f32.mrf.mxu0
  %615 = vmatprep.mubr.bf16.mxu0 0
  %616 = vmatmul.mubr.bf16.gmra.mxu0 %v358
  %v617 = vpop.f32.mrf.mxu0
  %v618 = vadd.f32 %v92, %v617
  %v619 = vpop.f32.mrf.mxu0
  %v620 = vpop.f32.mrf.mxu0
  %v621 = vadd.f32 %v92, %v620
  %v622 = vpop.f32.mrf.mxu0
  %623 = vmatprep.mubr.bf16.mxu0 0
  %624 = vmatmul.mubr.bf16.gmra.mxu0 %v361
  %v625 = vpop.f32.mrf.mxu0
  %v626 = vadd.f32 %v92, %v625
  %v627 = vpop.f32.mrf.mxu0
  %v628 = vpop.f32.mrf.mxu0
  %v629 = vadd.f32 %v92, %v628
  %v630 = vpop.f32.mrf.mxu0
  %631 = vmatprep.mubr.bf16.mxu0 0
  %632 = vmatmul.mubr.bf16.gmra.mxu0 %v364
  %v633 = vpop.f32.mrf.mxu0
  %v634 = vadd.f32 %v92, %v633
  %v635 = vpop.f32.mrf.mxu0
  %v636 = vpop.f32.mrf.mxu0
  %v637 = vadd.f32 %v92, %v636
  %v638 = vpop.f32.mrf.mxu0
  %639 = vmatprep.mubr.bf16.mxu0 0
  %640 = vmatmul.mubr.bf16.gmra.mxu0 %v367
  %v641 = vpop.f32.mrf.mxu0
  %v642 = vadd.f32 %v92, %v641
  %v643 = vpop.f32.mrf.mxu0
  %v644 = vpop.f32.mrf.mxu0
  %v645 = vadd.f32 %v92, %v644
  %v646 = vpop.f32.mrf.mxu0
  %647 = vmatprep.mubr.bf16.mxu0 0
  %648 = vmatmul.mubr.bf16.gmra.mxu0 %v370
  %v649 = vpop.f32.mrf.mxu0
  %v650 = vadd.f32 %v92, %v649
  %v651 = vpop.f32.mrf.mxu0
  %v652 = vpop.f32.mrf.mxu0
  %v653 = vadd.f32 %v92, %v652
  %v654 = vpop.f32.mrf.mxu0
  %655 = vmatprep.mubr.bf16.mxu0 0
  %656 = vmatmul.mubr.bf16.gmra.mxu0 %v373
  %v657 = vpop.f32.mrf.mxu0
  %v658 = vadd.f32 %v92, %v657
  %v659 = vpop.f32.mrf.mxu0
  %v660 = vpop.f32.mrf.mxu0
  %v661 = vadd.f32 %v92, %v660
  %v662 = vpop.f32.mrf.mxu0
  %663 = vdwg.mxu0
  %v664 = vmax.f32 %v410, 0.0
  %v665 = vmax.f32 %v413, 0.0
  %v666 = vmax.f32 %v418, 0.0
  %v667 = vmax.f32 %v421, 0.0
  %v668 = vmax.f32 %v426, 0.0
  %v669 = vmax.f32 %v429, 0.0
  %v670 = vmax.f32 %v434, 0.0
  %v671 = vmax.f32 %v437, 0.0
  %v672 = vmax.f32 %v442, 0.0
  %v673 = vmax.f32 %v445, 0.0
  %v674 = vmax.f32 %v450, 0.0
  %v675 = vmax.f32 %v453, 0.0
  %v676 = vmax.f32 %v458, 0.0
  %v677 = vmax.f32 %v461, 0.0
  %v678 = vmax.f32 %v466, 0.0
  %v679 = vmax.f32 %v469, 0.0
  %v680 = vmax.f32 %v474, 0.0
  %v681 = vmax.f32 %v477, 0.0
  %v682 = vmax.f32 %v482, 0.0
  %v683 = vmax.f32 %v485, 0.0
  %v684 = vmax.f32 %v490, 0.0
  %v685 = vmax.f32 %v493, 0.0
  %v686 = vmax.f32 %v498, 0.0
  %v687 = vmax.f32 %v501, 0.0
  %v688 = vmax.f32 %v506, 0.0
  %v689 = vmax.f32 %v509, 0.0
  %v690 = vmax.f32 %v514, 0.0
  %v691 = vmax.f32 %v517, 0.0
  %v692 = vmax.f32 %v522, 0.0
  %v693 = vmax.f32 %v525, 0.0
  %v694 = vmax.f32 %v530, 0.0
  %v695 = vmax.f32 %v533, 0.0
  %v696 = vmax.f32 %v538, 0.0
  %v697 = vmax.f32 %v541, 0.0
  %v698 = vmax.f32 %v546, 0.0
  %v699 = vmax.f32 %v549, 0.0
  %v700 = vmax.f32 %v554, 0.0
  %v701 = vmax.f32 %v557, 0.0
  %v702 = vmax.f32 %v562, 0.0
  %v703 = vmax.f32 %v565, 0.0
  %v704 = vmax.f32 %v570, 0.0
  %v705 = vmax.f32 %v573, 0.0
  %v706 = vmax.f32 %v578, 0.0
  %v707 = vmax.f32 %v581, 0.0
  %v708 = vmax.f32 %v586, 0.0
  %v709 = vmax.f32 %v589, 0.0
  %v710 = vmax.f32 %v594, 0.0
  %v711 = vmax.f32 %v597, 0.0
  %v712 = vmax.f32 %v602, 0.0
  %v713 = vmax.f32 %v605, 0.0
  %v714 = vmax.f32 %v610, 0.0
  %v715 = vmax.f32 %v613, 0.0
  %v716 = vmax.f32 %v618, 0.0
  %v717 = vmax.f32 %v621, 0.0
  %v718 = vmax.f32 %v626, 0.0
  %v719 = vmax.f32 %v629, 0.0
  %v720 = vmax.f32 %v634, 0.0
  %v721 = vmax.f32 %v637, 0.0
  %v722 = vmax.f32 %v642, 0.0
  %v723 = vmax.f32 %v645, 0.0
  %v724 = vmax.f32 %v650, 0.0
  %v725 = vmax.f32 %v653, 0.0
  %v726 = vmax.f32 %v658, 0.0
  %v727 = vmax.f32 %v661, 0.0
  %v728 = vpack.c.bf16 %v665, %v664
  %v729 = vpack.c.bf16 %v667, %v666
  %v730 = vpack.c.bf16 %v669, %v668
  %v731 = vpack.c.bf16 %v671, %v670
  %v732 = vpack.c.bf16 %v673, %v672
  %v733 = vpack.c.bf16 %v675, %v674
  %v734 = vpack.c.bf16 %v677, %v676
  %v735 = vpack.c.bf16 %v679, %v678
  %v736 = vpack.c.bf16 %v681, %v680
  %v737 = vpack.c.bf16 %v683, %v682
  %v738 = vpack.c.bf16 %v685, %v684
  %v739 = vpack.c.bf16 %v687, %v686
  %v740 = vpack.c.bf16 %v689, %v688
  %v741 = vpack.c.bf16 %v691, %v690
  %v742 = vpack.c.bf16 %v693, %v692
  %v743 = vpack.c.bf16 %v695, %v694
  %v744 = vpack.c.bf16 %v697, %v696
  %v745 = vpack.c.bf16 %v699, %v698
  %v746 = vpack.c.bf16 %v701, %v700
  %v747 = vpack.c.bf16 %v703, %v702
  %v748 = vpack.c.bf16 %v705, %v704
  %v749 = vpack.c.bf16 %v707, %v706
  %v750 = vpack.c.bf16 %v709, %v708
  %v751 = vpack.c.bf16 %v711, %v710
  %v752 = vpack.c.bf16 %v713, %v712
  %v753 = vpack.c.bf16 %v715, %v714
  %v754 = vpack.c.bf16 %v717, %v716
  %v755 = vpack.c.bf16 %v719, %v718
  %v756 = vpack.c.bf16 %v721, %v720
  %v757 = vpack.c.bf16 %v723, %v722
  %v758 = vpack.c.bf16 %v725, %v724
  %v759 = vpack.c.bf16 %v727, %v726
  %v792 = vunpack.c.l.b16 %v728
  %v793 = vunpack.c.h.b16 %v728
  %v794 = vunpack.c.l.b16 %v729
  %v795 = vunpack.c.h.b16 %v729
  %v796 = vunpack.c.l.b16 %v730
  %v797 = vunpack.c.h.b16 %v730
  %v798 = vunpack.c.l.b16 %v731
  %v799 = vunpack.c.h.b16 %v731
  %v800 = vunpack.c.l.b16 %v732
  %v801 = vunpack.c.h.b16 %v732
  %v802 = vunpack.c.l.b16 %v733
  %v803 = vunpack.c.h.b16 %v733
  %v804 = vunpack.c.l.b16 %v734
  %v805 = vunpack.c.h.b16 %v734
  %v806 = vunpack.c.l.b16 %v735
  %v807 = vunpack.c.h.b16 %v735
  %v808 = vunpack.c.l.b16 %v736
  %v809 = vunpack.c.h.b16 %v736
  %v810 = vunpack.c.l.b16 %v737
  %v811 = vunpack.c.h.b16 %v737
  %v812 = vunpack.c.l.b16 %v738
  %v813 = vunpack.c.h.b16 %v738
  %v814 = vunpack.c.l.b16 %v739
  %v815 = vunpack.c.h.b16 %v739
  %v816 = vunpack.c.l.b16 %v740
  %v817 = vunpack.c.h.b16 %v740
  %v818 = vunpack.c.l.b16 %v741
  %v819 = vunpack.c.h.b16 %v741
  %v820 = vunpack.c.l.b16 %v742
  %v821 = vunpack.c.h.b16 %v742
  %v822 = vunpack.c.l.b16 %v743
  %v823 = vunpack.c.h.b16 %v743
  %v824 = vunpack.c.l.b16 %v744
  %v825 = vunpack.c.h.b16 %v744
  %v826 = vunpack.c.l.b16 %v745
  %v827 = vunpack.c.h.b16 %v745
  %v828 = vunpack.c.l.b16 %v746
  %v829 = vunpack.c.h.b16 %v746
  %v830 = vunpack.c.l.b16 %v747
  %v831 = vunpack.c.h.b16 %v747
  %v832 = vunpack.c.l.b16 %v748
  %v833 = vunpack.c.h.b16 %v748
  %v834 = vunpack.c.l.b16 %v749
  %v835 = vunpack.c.h.b16 %v749
  %v836 = vunpack.c.l.b16 %v750
  %v837 = vunpack.c.h.b16 %v750
  %v838 = vunpack.c.l.b16 %v751
  %v839 = vunpack.c.h.b16 %v751
  %v840 = vunpack.c.l.b16 %v752
  %v841 = vunpack.c.h.b16 %v752
  %v842 = vunpack.c.l.b16 %v753
  %v843 = vunpack.c.h.b16 %v753
  %v844 = vunpack.c.l.b16 %v754
  %v845 = vunpack.c.h.b16 %v754
  %v846 = vunpack.c.l.b16 %v755
  %v847 = vunpack.c.h.b16 %v755
  %v848 = vunpack.c.l.b16 %v756
  %v849 = vunpack.c.h.b16 %v756
  %v850 = vunpack.c.l.b16 %v757
  %v851 = vunpack.c.h.b16 %v757
  %v852 = vunpack.c.l.b16 %v758
  %v853 = vunpack.c.h.b16 %v758
  %v854 = vunpack.c.l.b16 %v759
  %v855 = vunpack.c.h.b16 %v759
  %v856 = vpack.c.b16 %v792, %v792
  %v857 = vpack.c.b16 %v793, %v793
  %v858 = vpack.c.b16 %v794, %v794
  %v859 = vpack.c.b16 %v795, %v795
  %v860 = vpack.c.b16 %v796, %v796
  %v861 = vpack.c.b16 %v797, %v797
  %v862 = vpack.c.b16 %v798, %v798
  %v863 = vpack.c.b16 %v799, %v799
  %v864 = vpack.c.b16 %v800, %v800
  %v865 = vpack.c.b16 %v801, %v801
  %v866 = vpack.c.b16 %v802, %v802
  %v867 = vpack.c.b16 %v803, %v803
  %v868 = vpack.c.b16 %v804, %v804
  %v869 = vpack.c.b16 %v805, %v805
  %v870 = vpack.c.b16 %v806, %v806
  %v871 = vpack.c.b16 %v807, %v807
  %v872 = vpack.c.b16 %v808, %v808
  %v873 = vpack.c.b16 %v809, %v809
  %v874 = vpack.c.b16 %v810, %v810
  %v875 = vpack.c.b16 %v811, %v811
  %v876 = vpack.c.b16 %v812, %v812
  %v877 = vpack.c.b16 %v813, %v813
  %v878 = vpack.c.b16 %v814, %v814
  %v879 = vpack.c.b16 %v815, %v815
  %v880 = vpack.c.b16 %v816, %v816
  %v881 = vpack.c.b16 %v817, %v817
  %v882 = vpack.c.b16 %v818, %v818
  %v883 = vpack.c.b16 %v819, %v819
  %v884 = vpack.c.b16 %v820, %v820
  %v885 = vpack.c.b16 %v821, %v821
  %v886 = vpack.c.b16 %v822, %v822
  %v887 = vpack.c.b16 %v823, %v823
  %v888 = vpack.c.b16 %v824, %v824
  %v889 = vpack.c.b16 %v825, %v825
  %v890 = vpack.c.b16 %v826, %v826
  %v891 = vpack.c.b16 %v827, %v827
  %v892 = vpack.c.b16 %v828, %v828
  %v893 = vpack.c.b16 %v829, %v829
  %v894 = vpack.c.b16 %v830, %v830
  %v895 = vpack.c.b16 %v831, %v831
  %v896 = vpack.c.b16 %v832, %v832
  %v897 = vpack.c.b16 %v833, %v833
  %v898 = vpack.c.b16 %v834, %v834
  %v899 = vpack.c.b16 %v835, %v835
  %v900 = vpack.c.b16 %v836, %v836
  %v901 = vpack.c.b16 %v837, %v837
  %v902 = vpack.c.b16 %v838, %v838
  %v903 = vpack.c.b16 %v839, %v839
  %v904 = vpack.c.b16 %v840, %v840
  %v905 = vpack.c.b16 %v841, %v841
  %v906 = vpack.c.b16 %v842, %v842
  %v907 = vpack.c.b16 %v843, %v843
  %v908 = vpack.c.b16 %v844, %v844
  %v909 = vpack.c.b16 %v845, %v845
  %v910 = vpack.c.b16 %v846, %v846
  %v911 = vpack.c.b16 %v847, %v847
  %v912 = vpack.c.b16 %v848, %v848
  %v913 = vpack.c.b16 %v849, %v849
  %v914 = vpack.c.b16 %v850, %v850
  %v915 = vpack.c.b16 %v851, %v851
  %v916 = vpack.c.b16 %v852, %v852
  %v917 = vpack.c.b16 %v853, %v853
  %v918 = vpack.c.b16 %v854, %v854
  %v919 = vpack.c.b16 %v855, %v855
  %vm984 = vcmask 519168
  %985 = vst.msk [vmem:[%s3] sm:$0xf] %vm984, %v856
  %986 = vst.msk [vmem:[%s3 + $0x4] sm:$0xf] %vm984, %v857
  %987 = vst.msk [vmem:[%s3 + $0x8] sm:$0xf] %vm984, %v858
  %988 = vst.msk [vmem:[%s3 + $0xc] sm:$0xf] %vm984, %v859
  %989 = vst.msk [vmem:[%s3 + $0x10] sm:$0xf] %vm984, %v860
  %990 = vst.msk [vmem:[%s3 + $0x14] sm:$0xf] %vm984, %v861
  %991 = vst.msk [vmem:[%s3 + $0x18] sm:$0xf] %vm984, %v862
  %992 = vst.msk [vmem:[%s3 + $0x1c] sm:$0xf] %vm984, %v863
  %993 = vst.msk [vmem:[%s3 + $0x20] sm:$0xf] %vm984, %v864
  %994 = vst.msk [vmem:[%s3 + $0x24] sm:$0xf] %vm984, %v865
  %995 = vst.msk [vmem:[%s3 + $0x28] sm:$0xf] %vm984, %v866
  %996 = vst.msk [vmem:[%s3 + $0x2c] sm:$0xf] %vm984, %v867
  %997 = vst.msk [vmem:[%s3 + $0x30] sm:$0xf] %vm984, %v868
  %998 = vst.msk [vmem:[%s3 + $0x34] sm:$0xf] %vm984, %v869
  %999 = vst.msk [vmem:[%s3 + $0x38] sm:$0xf] %vm984, %v870
  %1000 = vst.msk [vmem:[%s3 + $0x3c] sm:$0xf] %vm984, %v871
  %1001 = vst.msk [vmem:[%s3 + $0x40] sm:$0xf] %vm984, %v872
  %1002 = vst.msk [vmem:[%s3 + $0x44] sm:$0xf] %vm984, %v873
  %1003 = vst.msk [vmem:[%s3 + $0x48] sm:$0xf] %vm984, %v874
  %1004 = vst.msk [vmem:[%s3 + $0x4c] sm:$0xf] %vm984, %v875
  %1005 = vst.msk [vmem:[%s3 + $0x50] sm:$0xf] %vm984, %v876
  %1006 = vst.msk [vmem:[%s3 + $0x54] sm:$0xf] %vm984, %v877
  %1007 = vst.msk [vmem:[%s3 + $0x58] sm:$0xf] %vm984, %v878
  %1008 = vst.msk [vmem:[%s3 + $0x5c] sm:$0xf] %vm984, %v879
  %1009 = vst.msk [vmem:[%s3 + $0x60] sm:$0xf] %vm984, %v880
  %1010 = vst.msk [vmem:[%s3 + $0x64] sm:$0xf] %vm984, %v881
  %1011 = vst.msk [vmem:[%s3 + $0x68] sm:$0xf] %vm984, %v882
  %1012 = vst.msk [vmem:[%s3 + $0x6c] sm:$0xf] %vm984, %v883
  %1013 = vst.msk [vmem:[%s3 + $0x70] sm:$0xf] %vm984, %v884
  %1014 = vst.msk [vmem:[%s3 + $0x74] sm:$0xf] %vm984, %v885
  %1015 = vst.msk [vmem:[%s3 + $0x78] sm:$0xf] %vm984, %v886
  %1016 = vst.msk [vmem:[%s3 + $0x7c] sm:$0xf] %vm984, %v887
  %1017 = vst.msk [vmem:[%s3 + $0x80] sm:$0xf] %vm984, %v888
  %1018 = vst.msk [vmem:[%s3 + $0x84] sm:$0xf] %vm984, %v889
  %1019 = vst.msk [vmem:[%s3 + $0x88] sm:$0xf] %vm984, %v890
  %1020 = vst.msk [vmem:[%s3 + $0x8c] sm:$0xf] %vm984, %v891
  %1021 = vst.msk [vmem:[%s3 + $0x90] sm:$0xf] %vm984, %v892
  %1022 = vst.msk [vmem:[%s3 + $0x94] sm:$0xf] %vm984, %v893
  %1023 = vst.msk [vmem:[%s3 + $0x98] sm:$0xf] %vm984, %v894
  %1024 = vst.msk [vmem:[%s3 + $0x9c] sm:$0xf] %vm984, %v895
  %1025 = vst.msk [vmem:[%s3 + $0xa0] sm:$0xf] %vm984, %v896
  %1026 = vst.msk [vmem:[%s3 + $0xa4] sm:$0xf] %vm984, %v897
  %1027 = vst.msk [vmem:[%s3 + $0xa8] sm:$0xf] %vm984, %v898
  %1028 = vst.msk [vmem:[%s3 + $0xac] sm:$0xf] %vm984, %v899
  %1029 = vst.msk [vmem:[%s3 + $0xb0] sm:$0xf] %vm984, %v900
  %1030 = vst.msk [vmem:[%s3 + $0xb4] sm:$0xf] %vm984, %v901
  %1031 = vst.msk [vmem:[%s3 + $0xb8] sm:$0xf] %vm984, %v902
  %1032 = vst.msk [vmem:[%s3 + $0xbc] sm:$0xf] %vm984, %v903
  %1033 = vst.msk [vmem:[%s3 + $0xc0] sm:$0xf] %vm984, %v904
  %1034 = vst.msk [vmem:[%s3 + $0xc4] sm:$0xf] %vm984, %v905
  %1035 = vst.msk [vmem:[%s3 + $0xc8] sm:$0xf] %vm984, %v906
  %1036 = vst.msk [vmem:[%s3 + $0xcc] sm:$0xf] %vm984, %v907
  %1037 = vst.msk [vmem:[%s3 + $0xd0] sm:$0xf] %vm984, %v908
  %1038 = vst.msk [vmem:[%s3 + $0xd4] sm:$0xf] %vm984, %v909
  %1039 = vst.msk [vmem:[%s3 + $0xd8] sm:$0xf] %vm984, %v910
  %1040 = vst.msk [vmem:[%s3 + $0xdc] sm:$0xf] %vm984, %v911
  %1041 = vst.msk [vmem:[%s3 + $0xe0] sm:$0xf] %vm984, %v912
  %1042 = vst.msk [vmem:[%s3 + $0xe4] sm:$0xf] %vm984, %v913
  %1043 = vst.msk [vmem:[%s3 + $0xe8] sm:$0xf] %vm984, %v914
  %1044 = vst.msk [vmem:[%s3 + $0xec] sm:$0xf] %vm984, %v915
  %1045 = vst.msk [vmem:[%s3 + $0xf0] sm:$0xf] %vm984, %v916
  %1046 = vst.msk [vmem:[%s3 + $0xf4] sm:$0xf] %vm984, %v917
  %1047 = vst.msk [vmem:[%s3 + $0xf8] sm:$0xf] %vm984, %v918
  %1048 = vst.msk [vmem:[%s3 + $0xfc] sm:$0xf] %vm984, %v919
  // Predicated region
  $region14: #{downsample_forward_nhwc.3} parent=0 // pred_check
    _
  $region15: #{downsample_forward_nhwc.3} parent=0 // pred_check_branch
    %1050 = sbr.rel (0) target = $region17
  $region16: #{downsample_forward_nhwc.3} parent=0 // pred_region
    _
  $region17: #{downsample_forward_nhwc.3} parent=0 // pred_fallthru
    _
  // Predicated region
  $region18: #{downsample_forward_nhwc.3} parent=0 // pred_check
    _
  $region19: #{downsample_forward_nhwc.3} parent=0 // pred_check_branch
    %1052 = sbr.rel (0) target = $region21
  $region20: #{downsample_forward_nhwc.3} parent=0 // pred_region
    _
  $region21: #{downsample_forward_nhwc.3} parent=0 // pred_fallthru
    _

// kernel: downsample_forward_nhwc.4
$region0: #{downsample_forward_nhwc.4}
  #allocation0 [shape = 'u32[]', space=smem, size = 0x4, offset = 0x4, fixed_abs, tag = 'smem constant byte address 0x4 - core index']
  #allocation1 [shape = 'u32[144,128]{1,0:T(1,128)}', space=vmem, size = 0x12000, scoped, tag = 'internal scratch']
  %s0 = inlined_call_operand.vmem [shape: bf16[256,48], index: 0, kind: input, shape index: {}]
  %s1 = inlined_call_operand.vmem [shape: bf16[48,16], index: 1, kind: input, shape index: {}]
  %s2 = inlined_call_operand.vmem [shape: f32[1,16], index: 2, kind: input, shape index: {}]
  %s3 = inlined_call_operand.vmem [shape: bf16[256,16], index: 3, kind: output, shape index: {}]
  %s4 = sld [smem:[#allocation0]]
  $region22: #{downsample_forward_nhwc.4} parent=0
    _
  %s6 = ssub.s32 1, %s4
  %s7 = scalar_select 0, %s6, %s4
  // Predicated region
  $region2: #{downsample_forward_nhwc.4} parent=0 // pred_check
    _
  $region3: #{downsample_forward_nhwc.4} parent=0 // pred_check_branch
    %9 = sbr.rel (0) target = $region5
  $region4: #{downsample_forward_nhwc.4} parent=0 // pred_region
    _
  $region5: #{downsample_forward_nhwc.4} parent=0 // pred_fallthru
    _
  // Predicated region
  $region6: #{downsample_forward_nhwc.4} parent=0 // pred_check
    _
  $region7: #{downsample_forward_nhwc.4} parent=0 // pred_check_branch
    %11 = sbr.rel (0) target = $region9
  $region8: #{downsample_forward_nhwc.4} parent=0 // pred_region
    _
  $region9: #{downsample_forward_nhwc.4} parent=0 // pred_fallthru
    _
  // Predicated region
  $region10: #{downsample_forward_nhwc.4} parent=0 // pred_check
    _
  $region11: #{downsample_forward_nhwc.4} parent=0 // pred_check_branch
    %13 = sbr.rel (0) target = $region13
  $region12: #{downsample_forward_nhwc.4} parent=0 // pred_region
    _
  $region13: #{downsample_forward_nhwc.4} parent=0 // pred_fallthru
    _
  %v15 = vld [vmem:[%s0] sm:$0xf]
  %v16 = vld [vmem:[%s0 + $0x4] sm:$0xf]
  %v17 = vld [vmem:[%s0 + $0x8] sm:$0xf]
  %v18 = vld [vmem:[%s0 + $0xc] sm:$0xf]
  %v19 = vld [vmem:[%s0 + $0x10] sm:$0xf]
  %v20 = vld [vmem:[%s0 + $0x14] sm:$0xf]
  %v21 = vld [vmem:[%s0 + $0x18] sm:$0xf]
  %v22 = vld [vmem:[%s0 + $0x1c] sm:$0xf]
  %v23 = vld [vmem:[%s0 + $0x20] sm:$0xf]
  %v24 = vld [vmem:[%s0 + $0x24] sm:$0xf]
  %v25 = vld [vmem:[%s0 + $0x28] sm:$0xf]
  %v26 = vld [vmem:[%s0 + $0x2c] sm:$0xf]
  %v27 = vld [vmem:[%s0 + $0x30] sm:$0xf]
  %v28 = vld [vmem:[%s0 + $0x34] sm:$0xf]
  %v29 = vld [vmem:[%s0 + $0x38] sm:$0xf]
  %v30 = vld [vmem:[%s0 + $0x3c] sm:$0xf]
  %v31 = vld [vmem:[%s0 + $0x40] sm:$0xf]
  %v32 = vld [vmem:[%s0 + $0x44] sm:$0xf]
  %v33 = vld [vmem:[%s0 + $0x48] sm:$0xf]
  %v34 = vld [vmem:[%s0 + $0x4c] sm:$0xf]
  %v35 = vld [vmem:[%s0 + $0x50] sm:$0xf]
  %v36 = vld [vmem:[%s0 + $0x54] sm:$0xf]
  %v37 = vld [vmem:[%s0 + $0x58] sm:$0xf]
  %v38 = vld [vmem:[%s0 + $0x5c] sm:$0xf]
  %v39 = vld [vmem:[%s0 + $0x60] sm:$0xf]
  %v40 = vld [vmem:[%s0 + $0x64] sm:$0xf]
  %v41 = vld [vmem:[%s0 + $0x68] sm:$0xf]
  %v42 = vld [vmem:[%s0 + $0x6c] sm:$0xf]
  %v43 = vld [vmem:[%s0 + $0x70] sm:$0xf]
  %v44 = vld [vmem:[%s0 + $0x74] sm:$0xf]
  %v45 = vld [vmem:[%s0 + $0x78] sm:$0xf]
  %v46 = vld [vmem:[%s0 + $0x7c] sm:$0xf]
  %v47 = vld [vmem:[%s1] sm:$0xf]
  %v48 = vld [vmem:[%s1 + $0x4] sm:$0xf]
  %v49 = vld [vmem:[%s1 + $0x8] sm:$0xf]
  %v50 = vld [vmem:[%s1 + $0xc] sm:$0xf]
  %v51 = vld [vmem:[%s1 + $0x10] sm:$0xf]
  %v52 = vld [vmem:[%s1 + $0x14] sm:$0xf]
  %v53 = vld [vmem:[%s2] sm:$0x1]
  %v55 = vlaneseq
  %v56 = vshrl.u32 %v55, 7
  %v57 = vsub.s32 0, %v56
  %v58 = vrot.slane %v53, %v57
  %v92 = vunpack.c.l.b16 %v15
  %v93 = vunpack.c.l.b16 %v16
  %v94 = vunpack.c.l.b16 %v17
  %v95 = vunpack.c.l.b16 %v18
  %v96 = vunpack.c.l.b16 %v19
  %v97 = vunpack.c.l.b16 %v20
  %v98 = vunpack.c.l.b16 %v21
  %v99 = vunpack.c.l.b16 %v22
  %v100 = vunpack.c.l.b16 %v23
  %v101 = vunpack.c.l.b16 %v24
  %v102 = vunpack.c.l.b16 %v25
  %v103 = vunpack.c.l.b16 %v26
  %v104 = vunpack.c.l.b16 %v27
  %v105 = vunpack.c.l.b16 %v28
  %v106 = vunpack.c.l.b16 %v29
  %v107 = vunpack.c.l.b16 %v30
  %v108 = vunpack.c.l.b16 %v31
  %v109 = vunpack.c.l.b16 %v32
  %v110 = vunpack.c.l.b16 %v33
  %v111 = vunpack.c.l.b16 %v34
  %v112 = vunpack.c.l.b16 %v35
  %v113 = vunpack.c.l.b16 %v36
  %v114 = vunpack.c.l.b16 %v37
  %v115 = vunpack.c.l.b16 %v38
  %v116 = vunpack.c.l.b16 %v39
  %v117 = vunpack.c.l.b16 %v40
  %v118 = vunpack.c.l.b16 %v41
  %v119 = vunpack.c.l.b16 %v42
  %v120 = vunpack.c.l.b16 %v43
  %v121 = vunpack.c.l.b16 %v44
  %v122 = vunpack.c.l.b16 %v45
  %v123 = vunpack.c.l.b16 %v46
  %v124 = vpack.c.b16 %v93, %v92
  %v125 = vpack.c.b16 %v95, %v94
  %v126 = vpack.c.b16 %v97, %v96
  %v127 = vpack.c.b16 %v99, %v98
  %v128 = vpack.c.b16 %v101, %v100
  %v129 = vpack.c.b16 %v103, %v102
  %v130 = vpack.c.b16 %v105, %v104
  %v131 = vpack.c.b16 %v107, %v106
  %v132 = vpack.c.b16 %v109, %v108
  %v133 = vpack.c.b16 %v111, %v110
  %v134 = vpack.c.b16 %v113, %v112
  %v135 = vpack.c.b16 %v115, %v114
  %v136 = vpack.c.b16 %v117, %v116
  %v137 = vpack.c.b16 %v119, %v118
  %v138 = vpack.c.b16 %v121, %v120
  %v139 = vpack.c.b16 %v123, %v122
  %v146 = vunpack.c.l.b16 %v47
  %v147 = vunpack.c.l.b16 %v48
  %v148 = vunpack.c.l.b16 %v49
  %v149 = vunpack.c.l.b16 %v50
  %v150 = vunpack.c.l.b16 %v51
  %v151 = vunpack.c.l.b16 %v52
  %v152 = vpack.c.b16 %v147, %v146
  %v153 = vpack.c.b16 %v149, %v148
  %v154 = vpack.c.b16 %v151, %v150
  %vm158 = vcmask 392192
  %v160 = vsel %vm158, %v124, 0
  %v163 = vsel %vm158, %v125, 0
  %v166 = vsel %vm158, %v126, 0
  %v169 = vsel %vm158, %v127, 0
  %v172 = vsel %vm158, %v128, 0
  %v175 = vsel %vm158, %v129, 0
  %v178 = vsel %vm158, %v130, 0
  %v181 = vsel %vm158, %v131, 0
  %v184 = vsel %vm158, %v132, 0
  %v187 = vsel %vm158, %v133, 0
  %v190 = vsel %vm158, %v134, 0
  %v193 = vsel %vm158, %v135, 0
  %v196 = vsel %vm158, %v136, 0
  %v199 = vsel %vm158, %v137, 0
  %v202 = vsel %vm158, %v138, 0
  %v205 = vsel %vm158, %v139, 0
  %207 = vmatprep.subr.bf16.mxu0 0
  %208 = vmatpush1.bf16.msra.mxu0 0
  %209 = vmatprep.subr.bf16.mxu0 0
  %210 = vmatpush1.bf16.msra.mxu0 0
  %211 = vmatprep.subr.bf16.mxu0 0
  %212 = vmatpush1.bf16.msra.mxu0 0
  %213 = vmatprep.subr.bf16.mxu0 0
  %214 = vmatpush1.bf16.msra.mxu0 0
  %215 = vmatprep.subr.bf16.mxu0 0
  %216 = vmatpush1.bf16.msra.mxu0 0
  %217 = vmatprep.subr.bf16.mxu0 0
  %218 = vmatpush1.bf16.msra.mxu0 %v154
  %219 = vmatprep.subr.bf16.mxu0 0
  %220 = vmatpush1.bf16.msra.mxu0 %v153
  %221 = vmatprep.subr.bf16.mxu0 0
  %222 = vmatpush1.bf16.msra.mxu0 %v152
  %223 = vmatprep.subr.bf16.mxu0 0
  %224 = vmatpush2.bf16.msra.mxu0 0
  %225 = vmatprep.subr.bf16.mxu0 0
  %226 = vmatpush2.bf16.msra.mxu0 0
  %227 = vmatprep.subr.bf16.mxu0 0
  %228 = vmatpush2.bf16.msra.mxu0 0
  %229 = vmatprep.subr.bf16.mxu0 0
  %230 = vmatpush2.bf16.msra.mxu0 0
  %231 = vmatprep.subr.bf16.mxu0 0
  %232 = vmatpush2.bf16.msra.mxu0 0
  %233 = vmatprep.subr.bf16.mxu0 0
  %234 = vmatpush2.bf16.msra.mxu0 0
  %235 = vmatprep.subr.bf16.mxu0 0
  %236 = vmatpush2.bf16.msra.mxu0 0
  %237 = vmatprep.subr.bf16.mxu0 0
  %238 = vmatpush2.bf16.msra.mxu0 0
  %239 = vmatprep.mubr.bf16.mxu0 0
  %240 = vmatmul.mubr.bf16.gmra.mxu0 %v160
  %v241 = vpop.f32.mrf.mxu0
  %v242 = vadd.f32 %v58, %v241
  %v243 = vpop.f32.mrf.mxu0
  %v244 = vpop.f32.mrf.mxu0
  %v245 = vadd.f32 %v58, %v244
  %v246 = vpop.f32.mrf.mxu0
  %247 = vmatprep.mubr.bf16.mxu0 0
  %248 = vmatmul.mubr.bf16.gmra.mxu0 %v163
  %v249 = vpop.f32.mrf.mxu0
  %v250 = vadd.f32 %v58, %v249
  %v251 = vpop.f32.mrf.mxu0
  %v252 = vpop.f32.mrf.mxu0
  %v253 = vadd.f32 %v58, %v252
  %v254 = vpop.f32.mrf.mxu0
  %255 = vmatprep.mubr.bf16.mxu0 0
  %256 = vmatmul.mubr.bf16.gmra.mxu0 %v166
  %v257 = vpop.f32.mrf.mxu0
  %v258 = vadd.f32 %v58, %v257
  %v259 = vpop.f32.mrf.mxu0
  %v260 = vpop.f32.mrf.mxu0
  %v261 = vadd.f32 %v58, %v260
  %v262 = vpop.f32.mrf.mxu0
  %263 = vmatprep.mubr.bf16.mxu0 0
  %264 = vmatmul.mubr.bf16.gmra.mxu0 %v169
  %v265 = vpop.f32.mrf.mxu0
  %v266 = vadd.f32 %v58, %v265
  %v267 = vpop.f32.mrf.mxu0
  %v268 = vpop.f32.mrf.mxu0
  %v269 = vadd.f32 %v58, %v268
  %v270 = vpop.f32.mrf.mxu0
  %271 = vmatprep.mubr.bf16.mxu0 0
  %272 = vmatmul.mubr.bf16.gmra.mxu0 %v172
  %v273 = vpop.f32.mrf.mxu0
  %v274 = vadd.f32 %v58, %v273
  %v275 = vpop.f32.mrf.mxu0
  %v276 = vpop.f32.mrf.mxu0
  %v277 = vadd.f32 %v58, %v276
  %v278 = vpop.f32.mrf.mxu0
  %279 = vmatprep.mubr.bf16.mxu0 0
  %280 = vmatmul.mubr.bf16.gmra.mxu0 %v175
  %v281 = vpop.f32.mrf.mxu0
  %v282 = vadd.f32 %v58, %v281
  %v283 = vpop.f32.mrf.mxu0
  %v284 = vpop.f32.mrf.mxu0
  %v285 = vadd.f32 %v58, %v284
  %v286 = vpop.f32.mrf.mxu0
  %287 = vmatprep.mubr.bf16.mxu0 0
  %288 = vmatmul.mubr.bf16.gmra.mxu0 %v178
  %v289 = vpop.f32.mrf.mxu0
  %v290 = vadd.f32 %v58, %v289
  %v291 = vpop.f32.mrf.mxu0
  %v292 = vpop.f32.mrf.mxu0
  %v293 = vadd.f32 %v58, %v292
  %v294 = vpop.f32.mrf.mxu0
  %295 = vmatprep.mubr.bf16.mxu0 0
  %296 = vmatmul.mubr.bf16.gmra.mxu0 %v181
  %v297 = vpop.f32.mrf.mxu0
  %v298 = vadd.f32 %v58, %v297
  %v299 = vpop.f32.mrf.mxu0
  %v300 = vpop.f32.mrf.mxu0
  %v301 = vadd.f32 %v58, %v300
  %v302 = vpop.f32.mrf.mxu0
  %303 = vmatprep.mubr.bf16.mxu0 0
  %304 = vmatmul.mubr.bf16.gmra.mxu0 %v184
  %v305 = vpop.f32.mrf.mxu0
  %v306 = vadd.f32 %v58, %v305
  %v307 = vpop.f32.mrf.mxu0
  %v308 = vpop.f32.mrf.mxu0
  %v309 = vadd.f32 %v58, %v308
  %v310 = vpop.f32.mrf.mxu0
  %311 = vmatprep.mubr.bf16.mxu0 0
  %312 = vmatmul.mubr.bf16.gmra.mxu0 %v187
  %v313 = vpop.f32.mrf.mxu0
  %v314 = vadd.f32 %v58, %v313
  %v315 = vpop.f32.mrf.mxu0
  %v316 = vpop.f32.mrf.mxu0
  %v317 = vadd.f32 %v58, %v316
  %v318 = vpop.f32.mrf.mxu0
  %319 = vmatprep.mubr.bf16.mxu0 0
  %320 = vmatmul.mubr.bf16.gmra.mxu0 %v190
  %v321 = vpop.f32.mrf.mxu0
  %v322 = vadd.f32 %v58, %v321
  %v323 = vpop.f32.mrf.mxu0
  %v324 = vpop.f32.mrf.mxu0
  %v325 = vadd.f32 %v58, %v324
  %v326 = vpop.f32.mrf.mxu0
  %327 = vmatprep.mubr.bf16.mxu0 0
  %328 = vmatmul.mubr.bf16.gmra.mxu0 %v193
  %v329 = vpop.f32.mrf.mxu0
  %v330 = vadd.f32 %v58, %v329
  %v331 = vpop.f32.mrf.mxu0
  %v332 = vpop.f32.mrf.mxu0
  %v333 = vadd.f32 %v58, %v332
  %v334 = vpop.f32.mrf.mxu0
  %335 = vmatprep.mubr.bf16.mxu0 0
  %336 = vmatmul.mubr.bf16.gmra.mxu0 %v196
  %v337 = vpop.f32.mrf.mxu0
  %v338 = vadd.f32 %v58, %v337
  %v339 = vpop.f32.mrf.mxu0
  %v340 = vpop.f32.mrf.mxu0
  %v341 = vadd.f32 %v58, %v340
  %v342 = vpop.f32.mrf.mxu0
  %343 = vmatprep.mubr.bf16.mxu0 0
  %344 = vmatmul.mubr.bf16.gmra.mxu0 %v199
  %v345 = vpop.f32.mrf.mxu0
  %v346 = vadd.f32 %v58, %v345
  %v347 = vpop.f32.mrf.mxu0
  %v348 = vpop.f32.mrf.mxu0
  %v349 = vadd.f32 %v58, %v348
  %v350 = vpop.f32.mrf.mxu0
  %351 = vmatprep.mubr.bf16.mxu0 0
  %352 = vmatmul.mubr.bf16.gmra.mxu0 %v202
  %v353 = vpop.f32.mrf.mxu0
  %v354 = vadd.f32 %v58, %v353
  %v355 = vpop.f32.mrf.mxu0
  %v356 = vpop.f32.mrf.mxu0
  %v357 = vadd.f32 %v58, %v356
  %v358 = vpop.f32.mrf.mxu0
  %359 = vmatprep.mubr.bf16.mxu0 0
  %360 = vmatmul.mubr.bf16.gmra.mxu0 %v205
  %v361 = vpop.f32.mrf.mxu0
  %v362 = vadd.f32 %v58, %v361
  %v363 = vpop.f32.mrf.mxu0
  %v364 = vpop.f32.mrf.mxu0
  %v365 = vadd.f32 %v58, %v364
  %v366 = vpop.f32.mrf.mxu0
  %367 = vdwg.mxu0
  %v368 = vmax.f32 %v242, 0.0
  %v369 = vmax.f32 %v245, 0.0
  %v370 = vmax.f32 %v250, 0.0
  %v371 = vmax.f32 %v253, 0.0
  %v372 = vmax.f32 %v258, 0.0
  %v373 = vmax.f32 %v261, 0.0
  %v374 = vmax.f32 %v266, 0.0
  %v375 = vmax.f32 %v269, 0.0
  %v376 = vmax.f32 %v274, 0.0
  %v377 = vmax.f32 %v277, 0.0
  %v378 = vmax.f32 %v282, 0.0
  %v379 = vmax.f32 %v285, 0.0
  %v380 = vmax.f32 %v290, 0.0
  %v381 = vmax.f32 %v293, 0.0
  %v382 = vmax.f32 %v298, 0.0
  %v383 = vmax.f32 %v301, 0.0
  %v384 = vmax.f32 %v306, 0.0
  %v385 = vmax.f32 %v309, 0.0
  %v386 = vmax.f32 %v314, 0.0
  %v387 = vmax.f32 %v317, 0.0
  %v388 = vmax.f32 %v322, 0.0
  %v389 = vmax.f32 %v325, 0.0
  %v390 = vmax.f32 %v330, 0.0
  %v391 = vmax.f32 %v333, 0.0
  %v392 = vmax.f32 %v338, 0.0
  %v393 = vmax.f32 %v341, 0.0
  %v394 = vmax.f32 %v346, 0.0
  %v395 = vmax.f32 %v349, 0.0
  %v396 = vmax.f32 %v354, 0.0
  %v397 = vmax.f32 %v357, 0.0
  %v398 = vmax.f32 %v362, 0.0
  %v399 = vmax.f32 %v365, 0.0
  %v400 = vpack.c.bf16 %v369, %v368
  %v401 = vpack.c.bf16 %v371, %v370
  %v402 = vpack.c.bf16 %v373, %v372
  %v403 = vpack.c.bf16 %v375, %v374
  %v404 = vpack.c.bf16 %v377, %v376
  %v405 = vpack.c.bf16 %v379, %v378
  %v406 = vpack.c.bf16 %v381, %v380
  %v407 = vpack.c.bf16 %v383, %v382
  %v408 = vpack.c.bf16 %v385, %v384
  %v409 = vpack.c.bf16 %v387, %v386
  %v410 = vpack.c.bf16 %v389, %v388
  %v411 = vpack.c.bf16 %v391, %v390
  %v412 = vpack.c.bf16 %v393, %v392
  %v413 = vpack.c.bf16 %v395, %v394
  %v414 = vpack.c.bf16 %v397, %v396
  %v415 = vpack.c.bf16 %v399, %v398
  %v432 = vunpack.c.l.b16 %v400
  %v433 = vunpack.c.h.b16 %v400
  %v434 = vunpack.c.l.b16 %v401
  %v435 = vunpack.c.h.b16 %v401
  %v436 = vunpack.c.l.b16 %v402
  %v437 = vunpack.c.h.b16 %v402
  %v438 = vunpack.c.l.b16 %v403
  %v439 = vunpack.c.h.b16 %v403
  %v440 = vunpack.c.l.b16 %v404
  %v441 = vunpack.c.h.b16 %v404
  %v442 = vunpack.c.l.b16 %v405
  %v443 = vunpack.c.h.b16 %v405
  %v444 = vunpack.c.l.b16 %v406
  %v445 = vunpack.c.h.b16 %v406
  %v446 = vunpack.c.l.b16 %v407
  %v447 = vunpack.c.h.b16 %v407
  %v448 = vunpack.c.l.b16 %v408
  %v449 = vunpack.c.h.b16 %v408
  %v450 = vunpack.c.l.b16 %v409
  %v451 = vunpack.c.h.b16 %v409
  %v452 = vunpack.c.l.b16 %v410
  %v453 = vunpack.c.h.b16 %v410
  %v454 = vunpack.c.l.b16 %v411
  %v455 = vunpack.c.h.b16 %v411
  %v456 = vunpack.c.l.b16 %v412
  %v457 = vunpack.c.h.b16 %v412
  %v458 = vunpack.c.l.b16 %v413
  %v459 = vunpack.c.h.b16 %v413
  %v460 = vunpack.c.l.b16 %v414
  %v461 = vunpack.c.h.b16 %v414
  %v462 = vunpack.c.l.b16 %v415
  %v463 = vunpack.c.h.b16 %v415
  %v464 = vpack.c.b16 %v432, %v432
  %v465 = vpack.c.b16 %v433, %v433
  %v466 = vpack.c.b16 %v434, %v434
  %v467 = vpack.c.b16 %v435, %v435
  %v468 = vpack.c.b16 %v436, %v436
  %v469 = vpack.c.b16 %v437, %v437
  %v470 = vpack.c.b16 %v438, %v438
  %v471 = vpack.c.b16 %v439, %v439
  %v472 = vpack.c.b16 %v440, %v440
  %v473 = vpack.c.b16 %v441, %v441
  %v474 = vpack.c.b16 %v442, %v442
  %v475 = vpack.c.b16 %v443, %v443
  %v476 = vpack.c.b16 %v444, %v444
  %v477 = vpack.c.b16 %v445, %v445
  %v478 = vpack.c.b16 %v446, %v446
  %v479 = vpack.c.b16 %v447, %v447
  %v480 = vpack.c.b16 %v448, %v448
  %v481 = vpack.c.b16 %v449, %v449
  %v482 = vpack.c.b16 %v450, %v450
  %v483 = vpack.c.b16 %v451, %v451
  %v484 = vpack.c.b16 %v452, %v452
  %v485 = vpack.c.b16 %v453, %v453
  %v486 = vpack.c.b16 %v454, %v454
  %v487 = vpack.c.b16 %v455, %v455
  %v488 = vpack.c.b16 %v456, %v456
  %v489 = vpack.c.b16 %v457, %v457
  %v490 = vpack.c.b16 %v458, %v458
  %v491 = vpack.c.b16 %v459, %v459
  %v492 = vpack.c.b16 %v460, %v460
  %v493 = vpack.c.b16 %v461, %v461
  %v494 = vpack.c.b16 %v462, %v462
  %v495 = vpack.c.b16 %v463, %v463
  %vm528 = vcmask 125952
  %529 = vst.msk [vmem:[%s3] sm:$0xf] %vm528, %v464
  %530 = vst.msk [vmem:[%s3 + $0x4] sm:$0xf] %vm528, %v465
  %531 = vst.msk [vmem:[%s3 + $0x8] sm:$0xf] %vm528, %v466
  %532 = vst.msk [vmem:[%s3 + $0xc] sm:$0xf] %vm528, %v467
  %533 = vst.msk [vmem:[%s3 + $0x10] sm:$0xf] %vm528, %v468
  %534 = vst.msk [vmem:[%s3 + $0x14] sm:$0xf] %vm528, %v469
  %535 = vst.msk [vmem:[%s3 + $0x18] sm:$0xf] %vm528, %v470
  %536 = vst.msk [vmem:[%s3 + $0x1c] sm:$0xf] %vm528, %v471
  %537 = vst.msk [vmem:[%s3 + $0x20] sm:$0xf] %vm528, %v472
  %538 = vst.msk [vmem:[%s3 + $0x24] sm:$0xf] %vm528, %v473
  %539 = vst.msk [vmem:[%s3 + $0x28] sm:$0xf] %vm528, %v474
  %540 = vst.msk [vmem:[%s3 + $0x2c] sm:$0xf] %vm528, %v475
  %541 = vst.msk [vmem:[%s3 + $0x30] sm:$0xf] %vm528, %v476
  %542 = vst.msk [vmem:[%s3 + $0x34] sm:$0xf] %vm528, %v477
  %543 = vst.msk [vmem:[%s3 + $0x38] sm:$0xf] %vm528, %v478
  %544 = vst.msk [vmem:[%s3 + $0x3c] sm:$0xf] %vm528, %v479
  %545 = vst.msk [vmem:[%s3 + $0x40] sm:$0xf] %vm528, %v480
  %546 = vst.msk [vmem:[%s3 + $0x44] sm:$0xf] %vm528, %v481
  %547 = vst.msk [vmem:[%s3 + $0x48] sm:$0xf] %vm528, %v482
  %548 = vst.msk [vmem:[%s3 + $0x4c] sm:$0xf] %vm528, %v483
  %549 = vst.msk [vmem:[%s3 + $0x50] sm:$0xf] %vm528, %v484
  %550 = vst.msk [vmem:[%s3 + $0x54] sm:$0xf] %vm528, %v485
  %551 = vst.msk [vmem:[%s3 + $0x58] sm:$0xf] %vm528, %v486
  %552 = vst.msk [vmem:[%s3 + $0x5c] sm:$0xf] %vm528, %v487
  %553 = vst.msk [vmem:[%s3 + $0x60] sm:$0xf] %vm528, %v488
  %554 = vst.msk [vmem:[%s3 + $0x64] sm:$0xf] %vm528, %v489
  %555 = vst.msk [vmem:[%s3 + $0x68] sm:$0xf] %vm528, %v490
  %556 = vst.msk [vmem:[%s3 + $0x6c] sm:$0xf] %vm528, %v491
  %557 = vst.msk [vmem:[%s3 + $0x70] sm:$0xf] %vm528, %v492
  %558 = vst.msk [vmem:[%s3 + $0x74] sm:$0xf] %vm528, %v493
  %559 = vst.msk [vmem:[%s3 + $0x78] sm:$0xf] %vm528, %v494
  %560 = vst.msk [vmem:[%s3 + $0x7c] sm:$0xf] %vm528, %v495
  // Predicated region
  $region14: #{downsample_forward_nhwc.4} parent=0 // pred_check
    _
  $region15: #{downsample_forward_nhwc.4} parent=0 // pred_check_branch
    %562 = sbr.rel (0) target = $region17
  $region16: #{downsample_forward_nhwc.4} parent=0 // pred_region
    _
  $region17: #{downsample_forward_nhwc.4} parent=0 // pred_fallthru
    _
  // Predicated region
  $region18: #{downsample_forward_nhwc.4} parent=0 // pred_check
    _
  $region19: #{downsample_forward_nhwc.4} parent=0 // pred_check_branch
    %564 = sbr.rel (0) target = $region21
  $region20: #{downsample_forward_nhwc.4} parent=0 // pred_region
    _
  $region21: #{downsample_forward_nhwc.4} parent=0 // pred_fallthru
    _

// kernel: downsample_forward_nhwc.5
$region0: #{downsample_forward_nhwc.5}
  #allocation0 [shape = 'u32[]', space=smem, size = 0x4, offset = 0x4, fixed_abs, tag = 'smem constant byte address 0x4 - core index']
  #allocation1 [shape = 'u32[144,128]{1,0:T(1,128)}', space=vmem, size = 0x12000, scoped, tag = 'internal scratch']
  %s0 = inlined_call_operand.vmem [shape: f32[9,128,64], index: 0, kind: input, shape index: {}]
  %s1 = inlined_call_operand.vmem [shape: bf16[128,288], index: 1, kind: input, shape index: {}]
  %s2 = inlined_call_operand.vmem [shape: bf16[128,144], index: 2, kind: input, shape index: {}]
  %s3 = inlined_call_operand.vmem [shape: bf16[128,48], index: 3, kind: input, shape index: {}]
  %s4 = inlined_call_operand.vmem [shape: bf16[288,64], index: 4, kind: input, shape index: {}]
  %s5 = inlined_call_operand.vmem [shape: bf16[288,16], index: 5, kind: input, shape index: {}]
  %s6 = inlined_call_operand.vmem [shape: bf16[16,64], index: 6, kind: input, shape index: {}]
  %s7 = inlined_call_operand.vmem [shape: bf16[144,64], index: 7, kind: input, shape index: {}]
  %s8 = inlined_call_operand.vmem [shape: bf16[48,64], index: 8, kind: input, shape index: {}]
  %s9 = inlined_call_operand.vmem [shape: bf16[64,64], index: 9, kind: input, shape index: {}]
  %s10 = inlined_call_operand.vmem [shape: f32[3,64], index: 10, kind: input, shape index: {}]
  %s11 = inlined_call_operand.hbm [shape: f32[128,128], index: 11, kind: output, shape index: {}]
  %s12 = sld [smem:[#allocation0]]
  $region54: #{downsample_forward_nhwc.5} parent=0
    _
  %s14 = ssub.s32 1, %s12
  %s15 = scalar_select 0, %s14, %s12
  $region1: #{downsample_forward_nhwc.5} parent=0
    #allocation2 [shape = 'u8[65536]{0}', space=vmem, size = 0x10000, scoped, tag = 'output window, operand 0, single buffered']
    #allocation3 [shape = 's32[1]{0}', space=sflag, size = 0x4, scoped, tag = 'scoped memory for downsample_forward_nhwc.5']
    %16 = vsyncpa [#allocation3], 0
    // Predicated region
    $region2: #{downsample_forward_nhwc.5} parent=1 // pred_check
      _
    $region3: #{downsample_forward_nhwc.5} parent=1 // pred_check_branch
      %18 = sbr.rel (0) target = $region5
    $region4: #{downsample_forward_nhwc.5} parent=1 // pred_region
      _
    $region5: #{downsample_forward_nhwc.5} parent=1 // pred_fallthru
      _
    // Predicated region
    $region6: #{downsample_forward_nhwc.5} parent=1 // pred_check
      _
    $region7: #{downsample_forward_nhwc.5} parent=1 // pred_check_branch
      %20 = sbr.rel (0) target = $region9
    $region8: #{downsample_forward_nhwc.5} parent=1 // pred_region
      _
    $region9: #{downsample_forward_nhwc.5} parent=1 // pred_fallthru
      _
    // Predicated region
    $region10: #{downsample_forward_nhwc.5} parent=1 // pred_check
      _
    $region11: #{downsample_forward_nhwc.5} parent=1 // pred_check_branch
      %22 = sbr.rel (0) target = $region13
    $region12: #{downsample_forward_nhwc.5} parent=1 // pred_region
      _
    $region13: #{downsample_forward_nhwc.5} parent=1 // pred_fallthru
      _
    // Predicated region
    $region14: #{downsample_forward_nhwc.5} parent=1 // pred_check
      _
    $region15: #{downsample_forward_nhwc.5} parent=1 // pred_check_branch
      %24 = sbr.rel (0) target = $region17
    $region16: #{downsample_forward_nhwc.5} parent=1 // pred_region
      _
    $region17: #{downsample_forward_nhwc.5} parent=1 // pred_fallthru
      _
    // Predicated region
    $region18: #{downsample_forward_nhwc.5} parent=1 // pred_check
      _
    $region19: #{downsample_forward_nhwc.5} parent=1 // pred_check_branch
      %26 = sbr.rel (0) target = $region21
    $region20: #{downsample_forward_nhwc.5} parent=1 // pred_region
      _
    $region21: #{downsample_forward_nhwc.5} parent=1 // pred_fallthru
      _
    // Predicated region
    $region22: #{downsample_forward_nhwc.5} parent=1 // pred_check
      _
    $region23: #{downsample_forward_nhwc.5} parent=1 // pred_check_branch
      %28 = sbr.rel (0) target = $region25
    $region24: #{downsample_forward_nhwc.5} parent=1 // pred_region
      _
    $region25: #{downsample_forward_nhwc.5} parent=1 // pred_fallthru
      _
    // Predicated region
    $region26: #{downsample_forward_nhwc.5} parent=1 // pred_check
      _
    $region27: #{downsample_forward_nhwc.5} parent=1 // pred_check_branch
      %30 = sbr.rel (0) target = $region29
    $region28: #{downsample_forward_nhwc.5} parent=1 // pred_region
      _
    $region29: #{downsample_forward_nhwc.5} parent=1 // pred_fallthru
      _
    // Predicated region
    $region30: #{downsample_forward_nhwc.5} parent=1 // pred_check
      _
    $region31: #{downsample_forward_nhwc.5} parent=1 // pred_check_branch
      %32 = sbr.rel (0) target = $region33
    $region32: #{downsample_forward_nhwc.5} parent=1 // pred_region
      _
    $region33: #{downsample_forward_nhwc.5} parent=1 // pred_fallthru
      _
    // Predicated region
    $region34: #{downsample_forward_nhwc.5} parent=1 // pred_check
      _
    $region35: #{downsample_forward_nhwc.5} parent=1 // pred_check_branch
      %34 = sbr.rel (0) target = $region37
    $region36: #{downsample_forward_nhwc.5} parent=1 // pred_region
      _
    $region37: #{downsample_forward_nhwc.5} parent=1 // pred_fallthru
      _
    // Predicated region
    $region38: #{downsample_forward_nhwc.5} parent=1 // pred_check
      _
    $region39: #{downsample_forward_nhwc.5} parent=1 // pred_check_branch
      %36 = sbr.rel (0) target = $region41
    $region40: #{downsample_forward_nhwc.5} parent=1 // pred_region
      _
    $region41: #{downsample_forward_nhwc.5} parent=1 // pred_fallthru
      _
    // Predicated region
    $region42: #{downsample_forward_nhwc.5} parent=1 // pred_check
      _
    $region43: #{downsample_forward_nhwc.5} parent=1 // pred_check_branch
      %38 = sbr.rel (0) target = $region45
    $region44: #{downsample_forward_nhwc.5} parent=1 // pred_region
      _
    $region45: #{downsample_forward_nhwc.5} parent=1 // pred_fallthru
      _
    %v40 = vld [vmem:[%s10] sm:$0x7]
    %v41 = vld [vmem:[%s1] sm:$0xff]
    %v42 = vld [vmem:[%s1 + $0x8] sm:$0xf]
    %v43 = vld [vmem:[%s1 + $0xc] sm:$0xff]
    %v44 = vld [vmem:[%s1 + $0x14] sm:$0xf]
    %v45 = vld [vmem:[%s1 + $0x18] sm:$0xff]
    %v46 = vld [vmem:[%s1 + $0x20] sm:$0xf]
    %v47 = vld [vmem:[%s1 + $0x24] sm:$0xff]
    %v48 = vld [vmem:[%s1 + $0x2c] sm:$0xf]
    %v49 = vld [vmem:[%s1 + $0x30] sm:$0xff]
    %v50 = vld [vmem:[%s1 + $0x38] sm:$0xf]
    %v51 = vld [vmem:[%s1 + $0x3c] sm:$0xff]
    %v52 = vld [vmem:[%s1 + $0x44] sm:$0xf]
    %v53 = vld [vmem:[%s1 + $0x48] sm:$0xff]
    %v54 = vld [vmem:[%s1 + $0x50] sm:$0xf]
    %v55 = vld [vmem:[%s1 + $0x54] sm:$0xff]
    %v56 = vld [vmem:[%s1 + $0x5c] sm:$0xf]
    %v57 = vld [vmem:[%s1 + $0x60] sm:$0xff]
    %v58 = vld [vmem:[%s1 + $0x68] sm:$0xf]
    %v59 = vld [vmem:[%s1 + $0x6c] sm:$0xff]
    %v60 = vld [vmem:[%s1 + $0x74] sm:$0xf]
    %v61 = vld [vmem:[%s1 + $0x78] sm:$0xff]
    %v62 = vld [vmem:[%s1 + $0x80] sm:$0xf]
    %v63 = vld [vmem:[%s1 + $0x84] sm:$0xff]
    %v64 = vld [vmem:[%s1 + $0x8c] sm:$0xf]
    %v65 = vld [vmem:[%s1 + $0x90] sm:$0xff]
    %v66 = vld [vmem:[%s1 + $0x98] sm:$0xf]
    %v67 = vld [vmem:[%s1 + $0x9c] sm:$0xff]
    %v68 = vld [vmem:[%s1 + $0xa4] sm:$0xf]
    %v69 = vld [vmem:[%s1 + $0xa8] sm:$0xff]
    %v70 = vld [vmem:[%s1 + $0xb0] sm:$0xf]
    %v71 = vld [vmem:[%s1 + $0xb4] sm:$0xff]
    %v72 = vld [vmem:[%s1 + $0xbc] sm:$0xf]
    %v73 = vld [vmem:[%s5] sm:$0xf]
    %v74 = vld [vmem:[%s5 + $0x4] sm:$0xf]
    %v75 = vld [vmem:[%s5 + $0x8] sm:$0xf]
    %v76 = vld [vmem:[%s5 + $0xc] sm:$0xf]
    %v77 = vld [vmem:[%s5 + $0x10] sm:$0xf]
    %v78 = vld [vmem:[%s5 + $0x14] sm:$0xf]
    %v79 = vld [vmem:[%s5 + $0x18] sm:$0xf]
    %v80 = vld [vmem:[%s5 + $0x1c] sm:$0xf]
    %v81 = vld [vmem:[%s5 + $0x20] sm:$0xf]
    %v82 = vld [vmem:[%s5 + $0x24] sm:$0xf]
    %v83 = vld [vmem:[%s5 + $0x28] sm:$0xf]
    %v84 = vld [vmem:[%s5 + $0x2c] sm:$0xf]
    %v85 = vld [vmem:[%s5 + $0x30] sm:$0xf]
    %v86 = vld [vmem:[%s5 + $0x34] sm:$0xf]
    %v87 = vld [vmem:[%s5 + $0x38] sm:$0xf]
    %v88 = vld [vmem:[%s5 + $0x3c] sm:$0xf]
    %v89 = vld [vmem:[%s5 + $0x40] sm:$0xf]
    %v90 = vld [vmem:[%s5 + $0x44] sm:$0xf]
    %v91 = vld [vmem:[%s5 + $0x48] sm:$0xf]
    %v92 = vld [vmem:[%s5 + $0x4c] sm:$0xf]
    %v93 = vld [vmem:[%s5 + $0x50] sm:$0xf]
    %v94 = vld [vmem:[%s5 + $0x54] sm:$0xf]
    %v95 = vld [vmem:[%s5 + $0x58] sm:$0xf]
    %v96 = vld [vmem:[%s5 + $0x5c] sm:$0xf]
    %v97 = vld [vmem:[%s5 + $0x60] sm:$0xf]
    %v98 = vld [vmem:[%s5 + $0x64] sm:$0xf]
    %v99 = vld [vmem:[%s5 + $0x68] sm:$0xf]
    %v100 = vld [vmem:[%s5 + $0x6c] sm:$0xf]
    %v101 = vld [vmem:[%s5 + $0x70] sm:$0xf]
    %v102 = vld [vmem:[%s5 + $0x74] sm:$0xf]
    %v103 = vld [vmem:[%s5 + $0x78] sm:$0xf]
    %v104 = vld [vmem:[%s5 + $0x7c] sm:$0xf]
    %v105 = vld [vmem:[%s5 + $0x80] sm:$0xf]
    %v106 = vld [vmem:[%s5 + $0x84] sm:$0xf]
    %v107 = vld [vmem:[%s5 + $0x88] sm:$0xf]
    %v108 = vld [vmem:[%s5 + $0x8c] sm:$0xf]
    %v109 = vlaneseq
    %v110 = vshrl.u32 %v109, 7
    %v111 = vsub.s32 0, %v110
    %v112 = vrot.slane %v40, %v111
    %v145 = vunpack.c.l.b16 %v41
    %v146 = vunpack.c.h.b16 %v41
    %v147 = vunpack.c.l.b16 %v42
    %v148 = vunpack.c.l.b16 %v43
    %v149 = vunpack.c.h.b16 %v43
    %v150 = vunpack.c.l.b16 %v44
    %v151 = vunpack.c.l.b16 %v45
    %v152 = vunpack.c.h.b16 %v45
    %v153 = vunpack.c.l.b16 %v46
    %v154 = vunpack.c.l.b16 %v47
    %v155 = vunpack.c.h.b16 %v47
    %v156 = vunpack.c.l.b16 %v48
    %v157 = vunpack.c.l.b16 %v49
    %v158 = vunpack.c.h.b16 %v49
    %v159 = vunpack.c.l.b16 %v50
    %v160 = vunpack.c.l.b16 %v51
    %v161 = vunpack.c.h.b16 %v51
    %v162 = vunpack.c.l.b16 %v52
    %v163 = vunpack.c.l.b16 %v53
    %v164 = vunpack.c.h.b16 %v53
    %v165 = vunpack.c.l.b16 %v54
    %v166 = vunpack.c.l.b16 %v55
    %v167 = vunpack.c.h.b16 %v55
    %v168 = vunpack.c.l.b16 %v56
    %v169 = vunpack.c.l.b16 %v57
    %v170 = vunpack.c.h.b16 %v57
    %v171 = vunpack.c.l.b16 %v58
    %v172 = vunpack.c.l.b16 %v59
    %v173 = vunpack.c.h.b16 %v59
    %v174 = vunpack.c.l.b16 %v60
    %v175 = vunpack.c.l.b16 %v61
    %v176 = vunpack.c.h.b16 %v61
    %v177 = vunpack.c.l.b16 %v62
    %v178 = vunpack.c.l.b16 %v63
    %v179 = vunpack.c.h.b16 %v63
    %v180 = vunpack.c.l.b16 %v64
    %v181 = vunpack.c.l.b16 %v65
    %v182 = vunpack.c.h.b16 %v65
    %v183 = vunpack.c.l.b16 %v66
    %v184 = vunpack.c.l.b16 %v67
    %v185 = vunpack.c.h.b16 %v67
    %v186 = vunpack.c.l.b16 %v68
    %v187 = vunpack.c.l.b16 %v69
    %v188 = vunpack.c.h.b16 %v69
    %v189 = vunpack.c.l.b16 %v70
    %v190 = vunpack.c.l.b16 %v71
    %v191 = vunpack.c.h.b16 %v71
    %v192 = vunpack.c.l.b16 %v72
    %v193 = vpack.c.b16 %v148, %v145
    %v194 = vpack.c.b16 %v149, %v146
    %v195 = vpack.c.b16 %v150, %v147
    %v196 = vpack.c.b16 %v154, %v151
    %v197 = vpack.c.b16 %v155, %v152
    %v198 = vpack.c.b16 %v156, %v153
    %v199 = vpack.c.b16 %v160, %v157
    %v200 = vpack.c.b16 %v161, %v158
    %v201 = vpack.c.b16 %v162, %v159
    %v202 = vpack.c.b16 %v166, %v163
    %v203 = vpack.c.b16 %v167, %v164
    %v204 = vpack.c.b16 %v168, %v165
    %v205 = vpack.c.b16 %v172, %v169
    %v206 = vpack.c.b16 %v173, %v170
    %v207 = vpack.c.b16 %v174, %v171
    %v208 = vpack.c.b16 %v178, %v175
    %v209 = vpack.c.b16 %v179, %v176
    %v210 = vpack.c.b16 %v180, %v177
    %v211 = vpack.c.b16 %v184, %v181
    %v212 = vpack.c.b16 %v185, %v182
    %v213 = vpack.c.b16 %v186, %v183
    %v214 = vpack.c.b16 %v190, %v187
    %v215 = vpack.c.b16 %v191, %v188
    %v216 = vpack.c.b16 %v192, %v189
    %v269 = vunpack.c.l.b16 %v73
    %v270 = vunpack.c.l.b16 %v74
    %v271 = vunpack.c.l.b16 %v75
    %v272 = vunpack.c.l.b16 %v76
    %v273 = vunpack.c.l.b16 %v77
    %v274 = vunpack.c.l.b16 %v78
    %v275 = vunpack.c.l.b16 %v79
    %v276 = vunpack.c.l.b16 %v80
    %v277 = vunpack.c.l.b16 %v81
    %v278 = vunpack.c.l.b16 %v82
    %v279 = vunpack.c.l.b16 %v83
    %v280 = vunpack.c.l.b16 %v84
    %v281 = vunpack.c.l.b16 %v85
    %v282 = vunpack.c.l.b16 %v86
    %v283 = vunpack.c.l.b16 %v87
    %v284 = vunpack.c.l.b16 %v88
    %v285 = vunpack.c.l.b16 %v89
    %v286 = vunpack.c.l.b16 %v90
    %v287 = vunpack.c.l.b16 %v91
    %v288 = vunpack.c.l.b16 %v92
    %v289 = vunpack.c.l.b16 %v93
    %v290 = vunpack.c.l.b16 %v94
    %v291 = vunpack.c.l.b16 %v95
    %v292 = vunpack.c.l.b16 %v96
    %v293 = vunpack.c.l.b16 %v97
    %v294 = vunpack.c.l.b16 %v98
    %v295 = vunpack.c.l.b16 %v99
    %v296 = vunpack.c.l.b16 %v100
    %v297 = vunpack.c.l.b16 %v101
    %v298 = vunpack.c.l.b16 %v102
    %v299 = vunpack.c.l.b16 %v103
    %v300 = vunpack.c.l.b16 %v104
    %v301 = vunpack.c.l.b16 %v105
    %v302 = vunpack.c.l.b16 %v106
    %v303 = vunpack.c.l.b16 %v107
    %v304 = vunpack.c.l.b16 %v108
    %v305 = vpack.c.b16 %v270, %v269
    %v306 = vpack.c.b16 %v272, %v271
    %v307 = vpack.c.b16 %v274, %v273
    %v308 = vpack.c.b16 %v276, %v275
    %v309 = vpack.c.b16 %v278, %v277
    %v310 = vpack.c.b16 %v280, %v279
    %v311 = vpack.c.b16 %v282, %v281
    %v312 = vpack.c.b16 %v284, %v283
    %v313 = vpack.c.b16 %v286, %v285
    %v314 = vpack.c.b16 %v288, %v287
    %v315 = vpack.c.b16 %v290, %v289
    %v316 = vpack.c.b16 %v292, %v291
    %v317 = vpack.c.b16 %v294, %v293
    %v318 = vpack.c.b16 %v296, %v295
    %v319 = vpack.c.b16 %v298, %v297
    %v320 = vpack.c.b16 %v300, %v299
    %v321 = vpack.c.b16 %v302, %v301
    %v322 = vpack.c.b16 %v304, %v303
    %vm341 = vcmask 261120
    %v343 = vsel %vm341, %v195, 0
    %v346 = vsel %vm341, %v198, 0
    %v349 = vsel %vm341, %v201, 0
    %v352 = vsel %vm341, %v204, 0
    %v355 = vsel %vm341, %v207, 0
    %v358 = vsel %vm341, %v210, 0
    %v361 = vsel %vm341, %v213, 0
    %v364 = vsel %vm341, %v216, 0
    %366 = vmatprep.subr.bf16.mxu0 0
    %367 = vmatpush1.bf16.msra.mxu0 %v312
    %368 = vmatprep.subr.bf16.mxu0 0
    %369 = vmatpush1.bf16.msra.mxu0 %v311
    %370 = vmatprep.subr.bf16.mxu0 0
    %371 = vmatpush1.bf16.msra.mxu0 %v310
    %372 = vmatprep.subr.bf16.mxu0 0
    %373 = vmatpush1.bf16.msra.mxu0 %v309
    %374 = vmatprep.subr.bf16.mxu0 0
    %375 = vmatpush1.bf16.msra.mxu0 %v308
    %376 = vmatprep.subr.bf16.mxu0 0
    %377 = vmatpush1.bf16.msra.mxu0 %v307
    %378 = vmatprep.subr.bf16.mxu0 0
    %379 = vmatpush1.bf16.msra.mxu0 %v306
    %380 = vmatprep.subr.bf16.mxu0 0
    %381 = vmatpush1.bf16.msra.mxu0 %v305
    %382 = vmatprep.subr.bf16.mxu0 0
    %383 = vmatpush2.bf16.msra.mxu0 %v320
    %384 = vmatprep.subr.bf16.mxu0 0
    %385 = vmatpush2.bf16.msra.mxu0 %v319
    %386 = vmatprep.subr.bf16.mxu0 0
    %387 = vmatpush2.bf16.msra.mxu0 %v318
    %388 = vmatprep.subr.bf16.mxu0 0
    %389 = vmatpush2.bf16.msra.mxu0 %v317
    %390 = vmatprep.subr.bf16.mxu0 0
    %391 = vmatpush2.bf16.msra.mxu0 %v316
    %392 = vmatprep.subr.bf16.mxu0 0
    %393 = vmatpush2.bf16.msra.mxu0 %v315
    %394 = vmatprep.subr.bf16.mxu0 0
    %395 = vmatpush2.bf16.msra.mxu0 %v314
    %396 = vmatprep.subr.bf16.mxu0 0
    %397 = vmatpush2.bf16.msra.mxu0 %v313
    %398 = vmatprep.mubr.bf16.mxu0 %v194
    %399 = vmatmul.mubr.bf16.gmra.mxu0 %v193
    %v400 = vpop.f32.mrf.mxu0
    %v401 = vadd.f32 %v112, %v400
    %v402 = vpop.f32.mrf.mxu0
    %v403 = vpop.f32.mrf.mxu0
    %v404 = vadd.f32 %v112, %v403
    %v405 = vpop.f32.mrf.mxu0
    %406 = vmatprep.mubr.bf16.mxu0 %v197
    %407 = vmatmul.mubr.bf16.gmra.mxu0 %v196
    %v408 = vpop.f32.mrf.mxu0
    %v409 = vadd.f32 %v112, %v408
    %v410 = vpop.f32.mrf.mxu0
    %v411 = vpop.f32.mrf.mxu0
    %v412 = vadd.f32 %v112, %v411
    %v413 = vpop.f32.mrf.mxu0
    %414 = vmatprep.mubr.bf16.mxu0 %v200
    %415 = vmatmul.mubr.bf16.gmra.mxu0 %v199
    %v416 = vpop.f32.mrf.mxu0
    %v417 = vadd.f32 %v112, %v416
    %v418 = vpop.f32.mrf.mxu0
    %v419 = vpop.f32.mrf.mxu0
    %v420 = vadd.f32 %v112, %v419
    %v421 = vpop.f32.mrf.mxu0
    %422 = vmatprep.mubr.bf16.mxu0 %v203
    %423 = vmatmul.mubr.bf16.gmra.mxu0 %v202
    %v424 = vpop.f32.mrf.mxu0
    %v425 = vadd.f32 %v112, %v424
    %v426 = vpop.f32.mrf.mxu0
    %v427 = vpop.f32.mrf.mxu0
    %v428 = vadd.f32 %v112, %v427
    %v429 = vpop.f32.mrf.mxu0
    %430 = vmatprep.mubr.bf16.mxu0 %v206
    %431 = vmatmul.mubr.bf16.gmra.mxu0 %v205
    %v432 = vpop.f32.mrf.mxu0
    %v433 = vadd.f32 %v112, %v432
    %v434 = vpop.f32.mrf.mxu0
    %v435 = vpop.f32.mrf.mxu0
    %v436 = vadd.f32 %v112, %v435
    %v437 = vpop.f32.mrf.mxu0
    %438 = vmatprep.mubr.bf16.mxu0 %v209
    %439 = vmatmul.mubr.bf16.gmra.mxu0 %v208
    %v440 = vpop.f32.mrf.mxu0
    %v441 = vadd.f32 %v112, %v440
    %v442 = vpop.f32.mrf.mxu0
    %v443 = vpop.f32.mrf.mxu0
    %v444 = vadd.f32 %v112, %v443
    %v445 = vpop.f32.mrf.mxu0
    %446 = vmatprep.mubr.bf16.mxu0 %v212
    %447 = vmatmul.mubr.bf16.gmra.mxu0 %v211
    %v448 = vpop.f32.mrf.mxu0
    %v449 = vadd.f32 %v112, %v448
    %v450 = vpop.f32.mrf.mxu0
    %v451 = vpop.f32.mrf.mxu0
    %v452 = vadd.f32 %v112, %v451
    %v453 = vpop.f32.mrf.mxu0
    %454 = vmatprep.mubr.bf16.mxu0 %v215
    %455 = vmatmul.mubr.bf16.gmra.mxu0 %v214
    %v456 = vpop.f32.mrf.mxu0
    %v457 = vadd.f32 %v112, %v456
    %v458 = vpop.f32.mrf.mxu0
    %v459 = vpop.f32.mrf.mxu0
    %v460 = vadd.f32 %v112, %v459
    %v461 = vpop.f32.mrf.mxu0
    %462 = vdwg.mxu0
    %463 = vmatprep.subr.bf16.mxu0 0
    %464 = vmatpush1.bf16.msra.mxu0 0
    %465 = vmatprep.subr.bf16.mxu0 0
    %466 = vmatpush1.bf16.msra.mxu0 0
    %467 = vmatprep.subr.bf16.mxu0 0
    %468 = vmatpush1.bf16.msra.mxu0 0
    %469 = vmatprep.subr.bf16.mxu0 0
    %470 = vmatpush1.bf16.msra.mxu0 0
    %471 = vmatprep.subr.bf16.mxu0 0
    %472 = vmatpush1.bf16.msra.mxu0 0
    %473 = vmatprep.subr.bf16.mxu0 0
    %474 = vmatpush1.bf16.msra.mxu0 0
    %475 = vmatprep.subr.bf16.mxu0 0
    %476 = vmatpush1.bf16.msra.mxu0 %v322
    %477 = vmatprep.subr.bf16.mxu0 0
    %478 = vmatpush1.bf16.msra.mxu0 %v321
    %479 = vmatprep.subr.bf16.mxu0 0
    %480 = vmatpush2.bf16.msra.mxu0 0
    %481 = vmatprep.subr.bf16.mxu0 0
    %482 = vmatpush2.bf16.msra.mxu0 0
    %483 = vmatprep.subr.bf16.mxu0 0
    %484 = vmatpush2.bf16.msra.mxu0 0
    %485 = vmatprep.subr.bf16.mxu0 0
    %486 = vmatpush2.bf16.msra.mxu0 0
    %487 = vmatprep.subr.bf16.mxu0 0
    %488 = vmatpush2.bf16.msra.mxu0 0
    %489 = vmatprep.subr.bf16.mxu0 0
    %490 = vmatpush2.bf16.msra.mxu0 0
    %491 = vmatprep.subr.bf16.mxu0 0
    %492 = vmatpush2.bf16.msra.mxu0 0
    %493 = vmatprep.subr.bf16.mxu0 0
    %494 = vmatpush2.bf16.msra.mxu0 0
    %495 = vmatprep.mubr.bf16.mxu0 0
    %496 = vmatmul.mubr.bf16.gmra.mxu0 %v343
    %v497 = vpop.f32.mrf.mxu0
    %v498 = vadd.f32 %v401, %v497
    %v499 = vpop.f32.mrf.mxu0
    %v500 = vpop.f32.mrf.mxu0
    %v501 = vadd.f32 %v404, %v500
    %v502 = vpop.f32.mrf.mxu0
    %503 = vmatprep.mubr.bf16.mxu0 0
    %504 = vmatmul.mubr.bf16.gmra.mxu0 %v346
    %v505 = vpop.f32.mrf.mxu0
    %v506 = vadd.f32 %v409, %v505
    %v507 = vpop.f32.mrf.mxu0
    %v508 = vpop.f32.mrf.mxu0
    %v509 = vadd.f32 %v412, %v508
    %v510 = vpop.f32.mrf.mxu0
    %511 = vmatprep.mubr.bf16.mxu0 0
    %512 = vmatmul.mubr.bf16.gmra.mxu0 %v349
    %v513 = vpop.f32.mrf.mxu0
    %v514 = vadd.f32 %v417, %v513
    %v515 = vpop.f32.mrf.mxu0
    %v516 = vpop.f32.mrf.mxu0
    %v517 = vadd.f32 %v420, %v516
    %v518 = vpop.f32.mrf.mxu0
    %519 = vmatprep.mubr.bf16.mxu0 0
    %520 = vmatmul.mubr.bf16.gmra.mxu0 %v352
    %v521 = vpop.f32.mrf.mxu0
    %v522 = vadd.f32 %v425, %v521
    %v523 = vpop.f32.mrf.mxu0
    %v524 = vpop.f32.mrf.mxu0
    %v525 = vadd.f32 %v428, %v524
    %v526 = vpop.f32.mrf.mxu0
    %527 = vmatprep.mubr.bf16.mxu0 0
    %528 = vmatmul.mubr.bf16.gmra.mxu0 %v355
    %v529 = vpop.f32.mrf.mxu0
    %v530 = vadd.f32 %v433, %v529
    %v531 = vpop.f32.mrf.mxu0
    %v532 = vpop.f32.mrf.mxu0
    %v533 = vadd.f32 %v436, %v532
    %v534 = vpop.f32.mrf.mxu0
    %535 = vmatprep.mubr.bf16.mxu0 0
    %536 = vmatmul.mubr.bf16.gmra.mxu0 %v358
    %v537 = vpop.f32.mrf.mxu0
    %v538 = vadd.f32 %v441, %v537
    %v539 = vpop.f32.mrf.mxu0
    %v540 = vpop.f32.mrf.mxu0
    %v541 = vadd.f32 %v444, %v540
    %v542 = vpop.f32.mrf.mxu0
    %543 = vmatprep.mubr.bf16.mxu0 0
    %544 = vmatmul.mubr.bf16.gmra.mxu0 %v361
    %v545 = vpop.f32.mrf.mxu0
    %v546 = vadd.f32 %v449, %v545
    %v547 = vpop.f32.mrf.mxu0
    %v548 = vpop.f32.mrf.mxu0
    %v549 = vadd.f32 %v452, %v548
    %v550 = vpop.f32.mrf.mxu0
    %551 = vmatprep.mubr.bf16.mxu0 0
    %552 = vmatmul.mubr.bf16.gmra.mxu0 %v364
    %v553 = vpop.f32.mrf.mxu0
    %v554 = vadd.f32 %v457, %v553
    %v555 = vpop.f32.mrf.mxu0
    %v556 = vpop.f32.mrf.mxu0
    %v557 = vadd.f32 %v460, %v556
    %v558 = vpop.f32.mrf.mxu0
    %559 = vdwg.mxu0
    %v560 = vmax.f32 %v498, 0.0
    %v561 = vmax.f32 %v501, 0.0
    %v562 = vmax.f32 %v506, 0.0
    %v563 = vmax.f32 %v509, 0.0
    %v564 = vmax.f32 %v514, 0.0
    %v565 = vmax.f32 %v517, 0.0
    %v566 = vmax.f32 %v522, 0.0
    %v567 = vmax.f32 %v525, 0.0
    %v568 = vmax.f32 %v530, 0.0
    %v569 = vmax.f32 %v533, 0.0
    %v570 = vmax.f32 %v538, 0.0
    %v571 = vmax.f32 %v541, 0.0
    %v572 = vmax.f32 %v546, 0.0
    %v573 = vmax.f32 %v549, 0.0
    %v574 = vmax.f32 %v554, 0.0
    %v575 = vmax.f32 %v557, 0.0
    %v576 = vld [vmem:[%s4] sm:$0xf]
    %v577 = vld [vmem:[%s4 + $0x4] sm:$0xf]
    %v578 = vld [vmem:[%s4 + $0x8] sm:$0xf]
    %v579 = vld [vmem:[%s4 + $0xc] sm:$0xf]
    %v580 = vld [vmem:[%s4 + $0x10] sm:$0xf]
    %v581 = vld [vmem:[%s4 + $0x14] sm:$0xf]
    %v582 = vld [vmem:[%s4 + $0x18] sm:$0xf]
    %v583 = vld [vmem:[%s4 + $0x1c] sm:$0xf]
    %v584 = vld [vmem:[%s4 + $0x20] sm:$0xf]
    %v585 = vld [vmem:[%s4 + $0x24] sm:$0xf]
    %v586 = vld [vmem:[%s4 + $0x28] sm:$0xf]
    %v587 = vld [vmem:[%s4 + $0x2c] sm:$0xf]
    %v588 = vld [vmem:[%s4 + $0x30] sm:$0xf]
    %v589 = vld [vmem:[%s4 + $0x34] sm:$0xf]
    %v590 = vld [vmem:[%s4 + $0x38] sm:$0xf]
    %v591 = vld [vmem:[%s4 + $0x3c] sm:$0xf]
    %v592 = vld [vmem:[%s4 + $0x40] sm:$0xf]
    %v593 = vld [vmem:[%s4 + $0x44] sm:$0xf]
    %v594 = vld [vmem:[%s4 + $0x48] sm:$0xf]
    %v595 = vld [vmem:[%s4 + $0x4c] sm:$0xf]
    %v596 = vld [vmem:[%s4 + $0x50] sm:$0xf]
    %v597 = vld [vmem:[%s4 + $0x54] sm:$0xf]
    %v598 = vld [vmem:[%s4 + $0x58] sm:$0xf]
    %v599 = vld [vmem:[%s4 + $0x5c] sm:$0xf]
    %v600 = vld [vmem:[%s4 + $0x60] sm:$0xf]
    %v601 = vld [vmem:[%s4 + $0x64] sm:$0xf]
    %v602 = vld [vmem:[%s4 + $0x68] sm:$0xf]
    %v603 = vld [vmem:[%s4 + $0x6c] sm:$0xf]
    %v604 = vld [vmem:[%s4 + $0x70] sm:$0xf]
    %v605 = vld [vmem:[%s4 + $0x74] sm:$0xf]
    %v606 = vld [vmem:[%s4 + $0x78] sm:$0xf]
    %v607 = vld [vmem:[%s4 + $0x7c] sm:$0xf]
    %v608 = vld [vmem:[%s4 + $0x80] sm:$0xf]
    %v609 = vld [vmem:[%s4 + $0x84] sm:$0xf]
    %v610 = vld [vmem:[%s4 + $0x88] sm:$0xf]
    %v611 = vld [vmem:[%s4 + $0x8c] sm:$0xf]
    %v612 = vpack.c.bf16 %v561, %v560
    %v613 = vpack.c.bf16 %v563, %v562
    %v614 = vpack.c.bf16 %v565, %v564
    %v615 = vpack.c.bf16 %v567, %v566
    %v616 = vpack.c.bf16 %v569, %v568
    %v617 = vpack.c.bf16 %v571, %v570
    %v618 = vpack.c.bf16 %v573, %v572
    %v619 = vpack.c.bf16 %v575, %v574
    %v620 = vld [vmem:[%s6] sm:$0xf]
    %v621 = vld [vmem:[%s6 + $0x4] sm:$0xf]
    %v624 = vunpack.c.l.b16 %v620
    %v625 = vunpack.c.l.b16 %v621
    %v626 = vpack.c.b16 %v625, %v624
    %vm628 = vcmask 130048
    %v630 = vsel %vm628, %v612, 0
    %v633 = vsel %vm628, %v613, 0
    %v636 = vsel %vm628, %v614, 0
    %v639 = vsel %vm628, %v615, 0
    %v642 = vsel %vm628, %v616, 0
    %v645 = vsel %vm628, %v617, 0
    %v648 = vsel %vm628, %v618, 0
    %v651 = vsel %vm628, %v619, 0
    %653 = vmatprep.subr.bf16.mxu0 0
    %654 = vmatpush1.bf16.msra.mxu0 0
    %655 = vmatprep.subr.bf16.mxu0 0
    %656 = vmatpush1.bf16.msra.mxu0 0
    %657 = vmatprep.subr.bf16.mxu0 0
    %658 = vmatpush1.bf16.msra.mxu0 0
    %659 = vmatprep.subr.bf16.mxu0 0
    %660 = vmatpush1.bf16.msra.mxu0 0
    %661 = vmatprep.subr.bf16.mxu0 0
    %662 = vmatpush1.bf16.msra.mxu0 0
    %663 = vmatprep.subr.bf16.mxu0 0
    %664 = vmatpush1.bf16.msra.mxu0 0
    %665 = vmatprep.subr.bf16.mxu0 0
    %666 = vmatpush1.bf16.msra.mxu0 0
    %667 = vmatprep.subr.bf16.mxu0 0
    %668 = vmatpush1.bf16.msra.mxu0 %v626
    %669 = vmatprep.subr.bf16.mxu0 0
    %670 = vmatpush2.bf16.msra.mxu0 0
    %671 = vmatprep.subr.bf16.mxu0 0
    %672 = vmatpush2.bf16.msra.mxu0 0
    %673 = vmatprep.subr.bf16.mxu0 0
    %674 = vmatpush2.bf16.msra.mxu0 0
    %675 = vmatprep.subr.bf16.mxu0 0
    %676 = vmatpush2.bf16.msra.mxu0 0
    %677 = vmatprep.subr.bf16.mxu0 0
    %678 = vmatpush2.bf16.msra.mxu0 0
    %679 = vmatprep.subr.bf16.mxu0 0
    %680 = vmatpush2.bf16.msra.mxu0 0
    %681 = vmatprep.subr.bf16.mxu0 0
    %682 = vmatpush2.bf16.msra.mxu0 0
    %683 = vmatprep.subr.bf16.mxu0 0
    %684 = vmatpush2.bf16.msra.mxu0 0
    %685 = vmatprep.mubr.bf16.mxu0 0
    %686 = vmatmul.mubr.bf16.gmra.mxu0 %v630
    %v687 = vpop.f32.mrf.mxu0
    %v688 = vadd.f32 0.0, %v687
    %v689 = vpop.f32.mrf.mxu0
    %v690 = vpop.f32.mrf.mxu0
    %v691 = vadd.f32 0.0, %v690
    %v692 = vpop.f32.mrf.mxu0
    %693 = vmatprep.mubr.bf16.mxu0 0
    %694 = vmatmul.mubr.bf16.gmra.mxu0 %v633
    %v695 = vpop.f32.mrf.mxu0
    %v696 = vadd.f32 0.0, %v695
    %v697 = vpop.f32.mrf.mxu0
    %v698 = vpop.f32.mrf.mxu0
    %v699 = vadd.f32 0.0, %v698
    %v700 = vpop.f32.mrf.mxu0
    %701 = vmatprep.mubr.bf16.mxu0 0
    %702 = vmatmul.mubr.bf16.gmra.mxu0 %v636
    %v703 = vpop.f32.mrf.mxu0
    %v704 = vadd.f32 0.0, %v703
    %v705 = vpop.f32.mrf.mxu0
    %v706 = vpop.f32.mrf.mxu0
    %v707 = vadd.f32 0.0, %v706
    %v708 = vpop.f32.mrf.mxu0
    %709 = vmatprep.mubr.bf16.mxu0 0
    %710 = vmatmul.mubr.bf16.gmra.mxu0 %v639
    %v711 = vpop.f32.mrf.mxu0
    %v712 = vadd.f32 0.0, %v711
    %v713 = vpop.f32.mrf.mxu0
    %v714 = vpop.f32.mrf.mxu0
    %v715 = vadd.f32 0.0, %v714
    %v716 = vpop.f32.mrf.mxu0
    %717 = vmatprep.mubr.bf16.mxu0 0
    %718 = vmatmul.mubr.bf16.gmra.mxu0 %v642
    %v719 = vpop.f32.mrf.mxu0
    %v720 = vadd.f32 0.0, %v719
    %v721 = vpop.f32.mrf.mxu0
    %v722 = vpop.f32.mrf.mxu0
    %v723 = vadd.f32 0.0, %v722
    %v724 = vpop.f32.mrf.mxu0
    %725 = vmatprep.mubr.bf16.mxu0 0
    %726 = vmatmul.mubr.bf16.gmra.mxu0 %v645
    %v727 = vpop.f32.mrf.mxu0
    %v728 = vadd.f32 0.0, %v727
    %v729 = vpop.f32.mrf.mxu0
    %v730 = vpop.f32.mrf.mxu0
    %v731 = vadd.f32 0.0, %v730
    %v732 = vpop.f32.mrf.mxu0
    %733 = vmatprep.mubr.bf16.mxu0 0
    %734 = vmatmul.mubr.bf16.gmra.mxu0 %v648
    %v735 = vpop.f32.mrf.mxu0
    %v736 = vadd.f32 0.0, %v735
    %v737 = vpop.f32.mrf.mxu0
    %v738 = vpop.f32.mrf.mxu0
    %v739 = vadd.f32 0.0, %v738
    %v740 = vpop.f32.mrf.mxu0
    %741 = vmatprep.mubr.bf16.mxu0 0
    %742 = vmatmul.mubr.bf16.gmra.mxu0 %v651
    %v743 = vpop.f32.mrf.mxu0
    %v744 = vadd.f32 0.0, %v743
    %v745 = vpop.f32.mrf.mxu0
    %v746 = vpop.f32.mrf.mxu0
    %v747 = vadd.f32 0.0, %v746
    %v748 = vpop.f32.mrf.mxu0
    %749 = vdwg.mxu0
    %v786 = vunpack.c.l.b16 %v576
    %v787 = vunpack.c.l.b16 %v577
    %v788 = vunpack.c.l.b16 %v578
    %v789 = vunpack.c.l.b16 %v579
    %v790 = vunpack.c.l.b16 %v580
    %v791 = vunpack.c.l.b16 %v581
    %v792 = vunpack.c.l.b16 %v582
    %v793 = vunpack.c.l.b16 %v583
    %v794 = vunpack.c.l.b16 %v584
    %v795 = vunpack.c.l.b16 %v585
    %v796 = vunpack.c.l.b16 %v586
    %v797 = vunpack.c.l.b16 %v587
    %v798 = vunpack.c.l.b16 %v588
    %v799 = vunpack.c.l.b16 %v589
    %v800 = vunpack.c.l.b16 %v590
    %v801 = vunpack.c.l.b16 %v591
    %v802 = vunpack.c.l.b16 %v592
    %v803 = vunpack.c.l.b16 %v593
    %v804 = vunpack.c.l.b16 %v594
    %v805 = vunpack.c.l.b16 %v595
    %v806 = vunpack.c.l.b16 %v596
    %v807 = vunpack.c.l.b16 %v597
    %v808 = vunpack.c.l.b16 %v598
    %v809 = vunpack.c.l.b16 %v599
    %v810 = vunpack.c.l.b16 %v600
    %v811 = vunpack.c.l.b16 %v601
    %v812 = vunpack.c.l.b16 %v602
    %v813 = vunpack.c.l.b16 %v603
    %v814 = vunpack.c.l.b16 %v604
    %v815 = vunpack.c.l.b16 %v605
    %v816 = vunpack.c.l.b16 %v606
    %v817 = vunpack.c.l.b16 %v607
    %v818 = vunpack.c.l.b16 %v608
    %v819 = vunpack.c.l.b16 %v609
    %v820 = vunpack.c.l.b16 %v610
    %v821 = vunpack.c.l.b16 %v611
    %v822 = vpack.c.b16 %v787, %v786
    %v823 = vpack.c.b16 %v789, %v788
    %v824 = vpack.c.b16 %v791, %v790
    %v825 = vpack.c.b16 %v793, %v792
    %v826 = vpack.c.b16 %v795, %v794
    %v827 = vpack.c.b16 %v797, %v796
    %v828 = vpack.c.b16 %v799, %v798
    %v829 = vpack.c.b16 %v801, %v800
    %v830 = vpack.c.b16 %v803, %v802
    %v831 = vpack.c.b16 %v805, %v804
    %v832 = vpack.c.b16 %v807, %v806
    %v833 = vpack.c.b16 %v809, %v808
    %v834 = vpack.c.b16 %v811, %v810
    %v835 = vpack.c.b16 %v813, %v812
    %v836 = vpack.c.b16 %v815, %v814
    %v837 = vpack.c.b16 %v817, %v816
    %v838 = vpack.c.b16 %v819, %v818
    %v839 = vpack.c.b16 %v821, %v820
    %858 = vmatprep.subr.bf16.mxu0 0
    %859 = vmatpush1.bf16.msra.mxu0 %v829
    %860 = vmatprep.subr.bf16.mxu0 0
    %861 = vmatpush1.bf16.msra.mxu0 %v828
    %862 = vmatprep.subr.bf16.mxu0 0
    %863 = vmatpush1.bf16.msra.mxu0 %v827
    %864 = vmatprep.subr.bf16.mxu0 0
    %865 = vmatpush1.bf16.msra.mxu0 %v826
    %866 = vmatprep.subr.bf16.mxu0 0
    %867 = vmatpush1.bf16.msra.mxu0 %v825
    %868 = vmatprep.subr.bf16.mxu0 0
    %869 = vmatpush1.bf16.msra.mxu0 %v824
    %870 = vmatprep.subr.bf16.mxu0 0
    %871 = vmatpush1.bf16.msra.mxu0 %v823
    %872 = vmatprep.subr.bf16.mxu0 0
    %873 = vmatpush1.bf16.msra.mxu0 %v822
    %874 = vmatprep.subr.bf16.mxu0 0
    %875 = vmatpush2.bf16.msra.mxu0 %v837
    %876 = vmatprep.subr.bf16.mxu0 0
    %877 = vmatpush2.bf16.msra.mxu0 %v836
    %878 = vmatprep.subr.bf16.mxu0 0
    %879 = vmatpush2.bf16.msra.mxu0 %v835
    %880 = vmatprep.subr.bf16.mxu0 0
    %881 = vmatpush2.bf16.msra.mxu0 %v834
    %882 = vmatprep.subr.bf16.mxu0 0
    %883 = vmatpush2.bf16.msra.mxu0 %v833
    %884 = vmatprep.subr.bf16.mxu0 0
    %885 = vmatpush2.bf16.msra.mxu0 %v832
    %886 = vmatprep.subr.bf16.mxu0 0
    %887 = vmatpush2.bf16.msra.mxu0 %v831
    %888 = vmatprep.subr.bf16.mxu0 0
    %889 = vmatpush2.bf16.msra.mxu0 %v830
    %890 = vmatprep.mubr.bf16.mxu0 %v194
    %891 = vmatmul.mubr.bf16.gmra.mxu0 %v193
    %v892 = vpop.f32.mrf.mxu0
    %v893 = vadd.f32 %v688, %v892
    %v894 = vpop.f32.mrf.mxu0
    %v895 = vpop.f32.mrf.mxu0
    %v896 = vadd.f32 %v691, %v895
    %v897 = vpop.f32.mrf.mxu0
    %898 = vmatprep.mubr.bf16.mxu0 %v197
    %899 = vmatmul.mubr.bf16.gmra.mxu0 %v196
    %v900 = vpop.f32.mrf.mxu0
    %v901 = vadd.f32 %v696, %v900
    %v902 = vpop.f32.mrf.mxu0
    %v903 = vpop.f32.mrf.mxu0
    %v904 = vadd.f32 %v699, %v903
    %v905 = vpop.f32.mrf.mxu0
    %906 = vmatprep.mubr.bf16.mxu0 %v200
    %907 = vmatmul.mubr.bf16.gmra.mxu0 %v199
    %v908 = vpop.f32.mrf.mxu0
    %v909 = vadd.f32 %v704, %v908
    %v910 = vpop.f32.mrf.mxu0
    %v911 = vpop.f32.mrf.mxu0
    %v912 = vadd.f32 %v707, %v911
    %v913 = vpop.f32.mrf.mxu0
    %914 = vmatprep.mubr.bf16.mxu0 %v203
    %915 = vmatmul.mubr.bf16.gmra.mxu0 %v202
    %v916 = vpop.f32.mrf.mxu0
    %v917 = vadd.f32 %v712, %v916
    %v918 = vpop.f32.mrf.mxu0
    %v919 = vpop.f32.mrf.mxu0
    %v920 = vadd.f32 %v715, %v919
    %v921 = vpop.f32.mrf.mxu0
    %922 = vmatprep.mubr.bf16.mxu0 %v206
    %923 = vmatmul.mubr.bf16.gmra.mxu0 %v205
    %v924 = vpop.f32.mrf.mxu0
    %v925 = vadd.f32 %v720, %v924
    %v926 = vpop.f32.mrf.mxu0
    %v927 = vpop.f32.mrf.mxu0
    %v928 = vadd.f32 %v723, %v927
    %v929 = vpop.f32.mrf.mxu0
    %930 = vmatprep.mubr.bf16.mxu0 %v209
    %931 = vmatmul.mubr.bf16.gmra.mxu0 %v208
    %v932 = vpop.f32.mrf.mxu0
    %v933 = vadd.f32 %v728, %v932
    %v934 = vpop.f32.mrf.mxu0
    %v935 = vpop.f32.mrf.mxu0
    %v936 = vadd.f32 %v731, %v935
    %v937 = vpop.f32.mrf.mxu0
    %938 = vmatprep.mubr.bf16.mxu0 %v212
    %939 = vmatmul.mubr.bf16.gmra.mxu0 %v211
    %v940 = vpop.f32.mrf.mxu0
    %v941 = vadd.f32 %v736, %v940
    %v942 = vpop.f32.mrf.mxu0
    %v943 = vpop.f32.mrf.mxu0
    %v944 = vadd.f32 %v739, %v943
    %v945 = vpop.f32.mrf.mxu0
    %946 = vmatprep.mubr.bf16.mxu0 %v215
    %947 = vmatmul.mubr.bf16.gmra.mxu0 %v214
    %v948 = vpop.f32.mrf.mxu0
    %v949 = vadd.f32 %v744, %v948
    %v950 = vpop.f32.mrf.mxu0
    %v951 = vpop.f32.mrf.mxu0
    %v952 = vadd.f32 %v747, %v951
    %v953 = vpop.f32.mrf.mxu0
    %954 = vdwg.mxu0
    %955 = vmatprep.subr.bf16.mxu0 0
    %956 = vmatpush1.bf16.msra.mxu0 0
    %957 = vmatprep.subr.bf16.mxu0 0
    %958 = vmatpush1.bf16.msra.mxu0 0
    %959 = vmatprep.subr.bf16.mxu0 0
    %960 = vmatpush1.bf16.msra.mxu0 0
    %961 = vmatprep.subr.bf16.mxu0 0
    %962 = vmatpush1.bf16.msra.mxu0 0
    %963 = vmatprep.subr.bf16.mxu0 0
    %964 = vmatpush1.bf16.msra.mxu0 0
    %965 = vmatprep.subr.bf16.mxu0 0
    %966 = vmatpush1.bf16.msra.mxu0 0
    %967 = vmatprep.subr.bf16.mxu0 0
    %968 = vmatpush1.bf16.msra.mxu0 %v839
    %969 = vmatprep.subr.bf16.mxu0 0
    %970 = vmatpush1.bf16.msra.mxu0 %v838
    %971 = vmatprep.subr.bf16.mxu0 0
    %972 = vmatpush2.bf16.msra.mxu0 0
    %973 = vmatprep.subr.bf16.mxu0 0
    %974 = vmatpush2.bf16.msra.mxu0 0
    %975 = vmatprep.subr.bf16.mxu0 0
    %976 = vmatpush2.bf16.msra.mxu0 0
    %977 = vmatprep.subr.bf16.mxu0 0
    %978 = vmatpush2.bf16.msra.mxu0 0
    %979 = vmatprep.subr.bf16.mxu0 0
    %980 = vmatpush2.bf16.msra.mxu0 0
    %981 = vmatprep.subr.bf16.mxu0 0
    %982 = vmatpush2.bf16.msra.mxu0 0
    %983 = vmatprep.subr.bf16.mxu0 0
    %984 = vmatpush2.bf16.msra.mxu0 0
    %985 = vmatprep.subr.bf16.mxu0 0
    %986 = vmatpush2.bf16.msra.mxu0 0
    %987 = vmatprep.mubr.bf16.mxu0 0
    %988 = vmatmul.mubr.bf16.gmra.mxu0 %v343
    %v989 = vpop.f32.mrf.mxu0
    %v990 = vadd.f32 %v893, %v989
    %v991 = vpop.f32.mrf.mxu0
    %v992 = vpop.f32.mrf.mxu0
    %v993 = vadd.f32 %v896, %v992
    %v994 = vpop.f32.mrf.mxu0
    %995 = vmatprep.mubr.bf16.mxu0 0
    %996 = vmatmul.mubr.bf16.gmra.mxu0 %v346
    %v997 = vpop.f32.mrf.mxu0
    %v998 = vadd.f32 %v901, %v997
    %v999 = vpop.f32.mrf.mxu0
    %v1000 = vpop.f32.mrf.mxu0
    %v1001 = vadd.f32 %v904, %v1000
    %v1002 = vpop.f32.mrf.mxu0
    %1003 = vmatprep.mubr.bf16.mxu0 0
    %1004 = vmatmul.mubr.bf16.gmra.mxu0 %v349
    %v1005 = vpop.f32.mrf.mxu0
    %v1006 = vadd.f32 %v909, %v1005
    %v1007 = vpop.f32.mrf.mxu0
    %v1008 = vpop.f32.mrf.mxu0
    %v1009 = vadd.f32 %v912, %v1008
    %v1010 = vpop.f32.mrf.mxu0
    %1011 = vmatprep.mubr.bf16.mxu0 0
    %1012 = vmatmul.mubr.bf16.gmra.mxu0 %v352
    %v1013 = vpop.f32.mrf.mxu0
    %v1014 = vadd.f32 %v917, %v1013
    %v1015 = vpop.f32.mrf.mxu0
    %v1016 = vpop.f32.mrf.mxu0
    %v1017 = vadd.f32 %v920, %v1016
    %v1018 = vpop.f32.mrf.mxu0
    %1019 = vmatprep.mubr.bf16.mxu0 0
    %1020 = vmatmul.mubr.bf16.gmra.mxu0 %v355
    %v1021 = vpop.f32.mrf.mxu0
    %v1022 = vadd.f32 %v925, %v1021
    %v1023 = vpop.f32.mrf.mxu0
    %v1024 = vpop.f32.mrf.mxu0
    %v1025 = vadd.f32 %v928, %v1024
    %v1026 = vpop.f32.mrf.mxu0
    %1027 = vmatprep.mubr.bf16.mxu0 0
    %1028 = vmatmul.mubr.bf16.gmra.mxu0 %v358
    %v1029 = vpop.f32.mrf.mxu0
    %v1030 = vadd.f32 %v933, %v1029
    %v1031 = vpop.f32.mrf.mxu0
    %v1032 = vpop.f32.mrf.mxu0
    %v1033 = vadd.f32 %v936, %v1032
    %v1034 = vpop.f32.mrf.mxu0
    %1035 = vmatprep.mubr.bf16.mxu0 0
    %1036 = vmatmul.mubr.bf16.gmra.mxu0 %v361
    %v1037 = vpop.f32.mrf.mxu0
    %v1038 = vadd.f32 %v941, %v1037
    %v1039 = vpop.f32.mrf.mxu0
    %v1040 = vpop.f32.mrf.mxu0
    %v1041 = vadd.f32 %v944, %v1040
    %v1042 = vpop.f32.mrf.mxu0
    %1043 = vmatprep.mubr.bf16.mxu0 0
    %1044 = vmatmul.mubr.bf16.gmra.mxu0 %v364
    %v1045 = vpop.f32.mrf.mxu0
    %v1046 = vadd.f32 %v949, %v1045
    %v1047 = vpop.f32.mrf.mxu0
    %v1048 = vpop.f32.mrf.mxu0
    %v1049 = vadd.f32 %v952, %v1048
    %v1050 = vpop.f32.mrf.mxu0
    %1051 = vdwg.mxu0
    %v1052 = vld [vmem:[%s2] sm:$0xff]
    %v1053 = vld [vmem:[%s2 + $0x8] sm:$0xff]
    %v1054 = vld [vmem:[%s2 + $0x10] sm:$0xff]
    %v1055 = vld [vmem:[%s2 + $0x18] sm:$0xff]
    %v1056 = vld [vmem:[%s2 + $0x20] sm:$0xff]
    %v1057 = vld [vmem:[%s2 + $0x28] sm:$0xff]
    %v1058 = vld [vmem:[%s2 + $0x30] sm:$0xff]
    %v1059 = vld [vmem:[%s2 + $0x38] sm:$0xff]
    %v1060 = vld [vmem:[%s2 + $0x40] sm:$0xff]
    %v1061 = vld [vmem:[%s2 + $0x48] sm:$0xff]
    %v1062 = vld [vmem:[%s2 + $0x50] sm:$0xff]
    %v1063 = vld [vmem:[%s2 + $0x58] sm:$0xff]
    %v1064 = vld [vmem:[%s2 + $0x60] sm:$0xff]
    %v1065 = vld [vmem:[%s2 + $0x68] sm:$0xff]
    %v1066 = vld [vmem:[%s2 + $0x70] sm:$0xff]
    %v1067 = vld [vmem:[%s2 + $0x78] sm:$0xff]
    %v1068 = vld [vmem:[%s7] sm:$0xf]
    %v1069 = vld [vmem:[%s7 + $0x4] sm:$0xf]
    %v1070 = vld [vmem:[%s7 + $0x8] sm:$0xf]
    %v1071 = vld [vmem:[%s7 + $0xc] sm:$0xf]
    %v1072 = vld [vmem:[%s7 + $0x10] sm:$0xf]
    %v1073 = vld [vmem:[%s7 + $0x14] sm:$0xf]
    %v1074 = vld [vmem:[%s7 + $0x18] sm:$0xf]
    %v1075 = vld [vmem:[%s7 + $0x1c] sm:$0xf]
    %v1076 = vld [vmem:[%s7 + $0x20] sm:$0xf]
    %v1077 = vld [vmem:[%s7 + $0x24] sm:$0xf]
    %v1078 = vld [vmem:[%s7 + $0x28] sm:$0xf]
    %v1079 = vld [vmem:[%s7 + $0x2c] sm:$0xf]
    %v1080 = vld [vmem:[%s7 + $0x30] sm:$0xf]
    %v1081 = vld [vmem:[%s7 + $0x34] sm:$0xf]
    %v1082 = vld [vmem:[%s7 + $0x38] sm:$0xf]
    %v1083 = vld [vmem:[%s7 + $0x3c] sm:$0xf]
    %v1084 = vld [vmem:[%s7 + $0x40] sm:$0xf]
    %v1085 = vld [vmem:[%s7 + $0x44] sm:$0xf]
    %v1102 = vunpack.c.l.b16 %v1052
    %v1103 = vunpack.c.h.b16 %v1052
    %v1104 = vunpack.c.l.b16 %v1053
    %v1105 = vunpack.c.h.b16 %v1053
    %v1106 = vunpack.c.l.b16 %v1054
    %v1107 = vunpack.c.h.b16 %v1054
    %v1108 = vunpack.c.l.b16 %v1055
    %v1109 = vunpack.c.h.b16 %v1055
    %v1110 = vunpack.c.l.b16 %v1056
    %v1111 = vunpack.c.h.b16 %v1056
    %v1112 = vunpack.c.l.b16 %v1057
    %v1113 = vunpack.c.h.b16 %v1057
    %v1114 = vunpack.c.l.b16 %v1058
    %v1115 = vunpack.c.h.b16 %v1058
    %v1116 = vunpack.c.l.b16 %v1059
    %v1117 = vunpack.c.h.b16 %v1059
    %v1118 = vunpack.c.l.b16 %v1060
    %v1119 = vunpack.c.h.b16 %v1060
    %v1120 = vunpack.c.l.b16 %v1061
    %v1121 = vunpack.c.h.b16 %v1061
    %v1122 = vunpack.c.l.b16 %v1062
    %v1123 = vunpack.c.h.b16 %v1062
    %v1124 = vunpack.c.l.b16 %v1063
    %v1125 = vunpack.c.h.b16 %v1063
    %v1126 = vunpack.c.l.b16 %v1064
    %v1127 = vunpack.c.h.b16 %v1064
    %v1128 = vunpack.c.l.b16 %v1065
    %v1129 = vunpack.c.h.b16 %v1065
    %v1130 = vunpack.c.l.b16 %v1066
    %v1131 = vunpack.c.h.b16 %v1066
    %v1132 = vunpack.c.l.b16 %v1067
    %v1133 = vunpack.c.h.b16 %v1067
    %v1134 = vpack.c.b16 %v1104, %v1102
    %v1135 = vpack.c.b16 %v1105, %v1103
    %v1136 = vpack.c.b16 %v1108, %v1106
    %v1137 = vpack.c.b16 %v1109, %v1107
    %v1138 = vpack.c.b16 %v1112, %v1110
    %v1139 = vpack.c.b16 %v1113, %v1111
    %v1140 = vpack.c.b16 %v1116, %v1114
    %v1141 = vpack.c.b16 %v1117, %v1115
    %v1142 = vpack.c.b16 %v1120, %v1118
    %v1143 = vpack.c.b16 %v1121, %v1119
    %v1144 = vpack.c.b16 %v1124, %v1122
    %v1145 = vpack.c.b16 %v1125, %v1123
    %v1146 = vpack.c.b16 %v1128, %v1126
    %v1147 = vpack.c.b16 %v1129, %v1127
    %v1148 = vpack.c.b16 %v1132, %v1130
    %v1149 = vpack.c.b16 %v1133, %v1131
    %v1176 = vunpack.c.l.b16 %v1068
    %v1177 = vunpack.c.l.b16 %v1069
    %v1178 = vunpack.c.l.b16 %v1070
    %v1179 = vunpack.c.l.b16 %v1071
    %v1180 = vunpack.c.l.b16 %v1072
    %v1181 = vunpack.c.l.b16 %v1073
    %v1182 = vunpack.c.l.b16 %v1074
    %v1183 = vunpack.c.l.b16 %v1075
    %v1184 = vunpack.c.l.b16 %v1076
    %v1185 = vunpack.c.l.b16 %v1077
    %v1186 = vunpack.c.l.b16 %v1078
    %v1187 = vunpack.c.l.b16 %v1079
    %v1188 = vunpack.c.l.b16 %v1080
    %v1189 = vunpack.c.l.b16 %v1081
    %v1190 = vunpack.c.l.b16 %v1082
    %v1191 = vunpack.c.l.b16 %v1083
    %v1192 = vunpack.c.l.b16 %v1084
    %v1193 = vunpack.c.l.b16 %v1085
    %v1194 = vpack.c.b16 %v1177, %v1176
    %v1195 = vpack.c.b16 %v1179, %v1178
    %v1196 = vpack.c.b16 %v1181, %v1180
    %v1197 = vpack.c.b16 %v1183, %v1182
    %v1198 = vpack.c.b16 %v1185, %v1184
    %v1199 = vpack.c.b16 %v1187, %v1186
    %v1200 = vpack.c.b16 %v1189, %v1188
    %v1201 = vpack.c.b16 %v1191, %v1190
    %v1202 = vpack.c.b16 %v1193, %v1192
    %v1213 = vsel %vm628, %v1135, 0
    %v1216 = vsel %vm628, %v1137, 0
    %v1219 = vsel %vm628, %v1139, 0
    %v1222 = vsel %vm628, %v1141, 0
    %v1225 = vsel %vm628, %v1143, 0
    %v1228 = vsel %vm628, %v1145, 0
    %v1231 = vsel %vm628, %v1147, 0
    %v1234 = vsel %vm628, %v1149, 0
    %1236 = vmatprep.subr.bf16.mxu0 0
    %1237 = vmatpush1.bf16.msra.mxu0 %v1201
    %1238 = vmatprep.subr.bf16.mxu0 0
    %1239 = vmatpush1.bf16.msra.mxu0 %v1200
    %1240 = vmatprep.subr.bf16.mxu0 0
    %1241 = vmatpush1.bf16.msra.mxu0 %v1199
    %1242 = vmatprep.subr.bf16.mxu0 0
    %1243 = vmatpush1.bf16.msra.mxu0 %v1198
    %1244 = vmatprep.subr.bf16.mxu0 0
    %1245 = vmatpush1.bf16.msra.mxu0 %v1197
    %1246 = vmatprep.subr.bf16.mxu0 0
    %1247 = vmatpush1.bf16.msra.mxu0 %v1196
    %1248 = vmatprep.subr.bf16.mxu0 0
    %1249 = vmatpush1.bf16.msra.mxu0 %v1195
    %1250 = vmatprep.subr.bf16.mxu0 0
    %1251 = vmatpush1.bf16.msra.mxu0 %v1194
    %1252 = vmatprep.subr.bf16.mxu0 0
    %1253 = vmatpush2.bf16.msra.mxu0 0
    %1254 = vmatprep.subr.bf16.mxu0 0
    %1255 = vmatpush2.bf16.msra.mxu0 0
    %1256 = vmatprep.subr.bf16.mxu0 0
    %1257 = vmatpush2.bf16.msra.mxu0 0
    %1258 = vmatprep.subr.bf16.mxu0 0
    %1259 = vmatpush2.bf16.msra.mxu0 0
    %1260 = vmatprep.subr.bf16.mxu0 0
    %1261 = vmatpush2.bf16.msra.mxu0 0
    %1262 = vmatprep.subr.bf16.mxu0 0
    %1263 = vmatpush2.bf16.msra.mxu0 0
    %1264 = vmatprep.subr.bf16.mxu0 0
    %1265 = vmatpush2.bf16.msra.mxu0 0
    %1266 = vmatprep.subr.bf16.mxu0 0
    %1267 = vmatpush2.bf16.msra.mxu0 %v1202
    %1268 = vmatprep.mubr.bf16.mxu0 %v1213
    %1269 = vmatmul.mubr.bf16.gmra.mxu0 %v1134
    %v1270 = vpop.f32.mrf.mxu0
    %v1271 = vadd.f32 0.0, %v1270
    %v1272 = vpop.f32.mrf.mxu0
    %v1273 = vpop.f32.mrf.mxu0
    %v1274 = vadd.f32 0.0, %v1273
    %v1275 = vpop.f32.mrf.mxu0
    %1276 = vmatprep.mubr.bf16.mxu0 %v1216
    %1277 = vmatmul.mubr.bf16.gmra.mxu0 %v1136
    %v1278 = vpop.f32.mrf.mxu0
    %v1279 = vadd.f32 0.0, %v1278
    %v1280 = vpop.f32.mrf.mxu0
    %v1281 = vpop.f32.mrf.mxu0
    %v1282 = vadd.f32 0.0, %v1281
    %v1283 = vpop.f32.mrf.mxu0
    %1284 = vmatprep.mubr.bf16.mxu0 %v1219
    %1285 = vmatmul.mubr.bf16.gmra.mxu0 %v1138
    %v1286 = vpop.f32.mrf.mxu0
    %v1287 = vadd.f32 0.0, %v1286
    %v1288 = vpop.f32.mrf.mxu0
    %v1289 = vpop.f32.mrf.mxu0
    %v1290 = vadd.f32 0.0, %v1289
    %v1291 = vpop.f32.mrf.mxu0
    %1292 = vmatprep.mubr.bf16.mxu0 %v1222
    %1293 = vmatmul.mubr.bf16.gmra.mxu0 %v1140
    %v1294 = vpop.f32.mrf.mxu0
    %v1295 = vadd.f32 0.0, %v1294
    %v1296 = vpop.f32.mrf.mxu0
    %v1297 = vpop.f32.mrf.mxu0
    %v1298 = vadd.f32 0.0, %v1297
    %v1299 = vpop.f32.mrf.mxu0
    %1300 = vmatprep.mubr.bf16.mxu0 %v1225
    %1301 = vmatmul.mubr.bf16.gmra.mxu0 %v1142
    %v1302 = vpop.f32.mrf.mxu0
    %v1303 = vadd.f32 0.0, %v1302
    %v1304 = vpop.f32.mrf.mxu0
    %v1305 = vpop.f32.mrf.mxu0
    %v1306 = vadd.f32 0.0, %v1305
    %v1307 = vpop.f32.mrf.mxu0
    %1308 = vmatprep.mubr.bf16.mxu0 %v1228
    %1309 = vmatmul.mubr.bf16.gmra.mxu0 %v1144
    %v1310 = vpop.f32.mrf.mxu0
    %v1311 = vadd.f32 0.0, %v1310
    %v1312 = vpop.f32.mrf.mxu0
    %v1313 = vpop.f32.mrf.mxu0
    %v1314 = vadd.f32 0.0, %v1313
    %v1315 = vpop.f32.mrf.mxu0
    %1316 = vmatprep.mubr.bf16.mxu0 %v1231
    %1317 = vmatmul.mubr.bf16.gmra.mxu0 %v1146
    %v1318 = vpop.f32.mrf.mxu0
    %v1319 = vadd.f32 0.0, %v1318
    %v1320 = vpop.f32.mrf.mxu0
    %v1321 = vpop.f32.mrf.mxu0
    %v1322 = vadd.f32 0.0, %v1321
    %v1323 = vpop.f32.mrf.mxu0
    %1324 = vmatprep.mubr.bf16.mxu0 %v1234
    %1325 = vmatmul.mubr.bf16.gmra.mxu0 %v1148
    %v1326 = vpop.f32.mrf.mxu0
    %v1327 = vadd.f32 0.0, %v1326
    %v1328 = vpop.f32.mrf.mxu0
    %v1329 = vpop.f32.mrf.mxu0
    %v1330 = vadd.f32 0.0, %v1329
    %v1331 = vpop.f32.mrf.mxu0
    %1332 = vdwg.mxu0
    %v1333 = vadd.f32 %v990, %v1271
    %v1334 = vadd.f32 %v993, %v1274
    %v1335 = vadd.f32 %v998, %v1279
    %v1336 = vadd.f32 %v1001, %v1282
    %v1337 = vadd.f32 %v1006, %v1287
    %v1338 = vadd.f32 %v1009, %v1290
    %v1339 = vadd.f32 %v1014, %v1295
    %v1340 = vadd.f32 %v1017, %v1298
    %v1341 = vadd.f32 %v1022, %v1303
    %v1342 = vadd.f32 %v1025, %v1306
    %v1343 = vadd.f32 %v1030, %v1311
    %v1344 = vadd.f32 %v1033, %v1314
    %v1345 = vadd.f32 %v1038, %v1319
    %v1346 = vadd.f32 %v1041, %v1322
    %v1347 = vadd.f32 %v1046, %v1327
    %v1348 = vadd.f32 %v1049, %v1330
    %v1349 = vld [vmem:[%s3] sm:$0xf]
    %v1350 = vld [vmem:[%s3 + $0x4] sm:$0xf]
    %v1351 = vld [vmem:[%s3 + $0x8] sm:$0xf]
    %v1352 = vld [vmem:[%s3 + $0xc] sm:$0xf]
    %v1353 = vld [vmem:[%s3 + $0x10] sm:$0xf]
    %v1354 = vld [vmem:[%s3 + $0x14] sm:$0xf]
    %v1355 = vld [vmem:[%s3 + $0x18] sm:$0xf]
    %v1356 = vld [vmem:[%s3 + $0x1c] sm:$0xf]
    %v1357 = vld [vmem:[%s3 + $0x20] sm:$0xf]
    %v1358 = vld [vmem:[%s3 + $0x24] sm:$0xf]
    %v1359 = vld [vmem:[%s3 + $0x28] sm:$0xf]
    %v1360 = vld [vmem:[%s3 + $0x2c] sm:$0xf]
    %v1361 = vld [vmem:[%s3 + $0x30] sm:$0xf]
    %v1362 = vld [vmem:[%s3 + $0x34] sm:$0xf]
    %v1363 = vld [vmem:[%s3 + $0x38] sm:$0xf]
    %v1364 = vld [vmem:[%s3 + $0x3c] sm:$0xf]
    %v1365 = vld [vmem:[%s8] sm:$0xf]
    %v1366 = vld [vmem:[%s8 + $0x4] sm:$0xf]
    %v1367 = vld [vmem:[%s8 + $0x8] sm:$0xf]
    %v1368 = vld [vmem:[%s8 + $0xc] sm:$0xf]
    %v1369 = vld [vmem:[%s8 + $0x10] sm:$0xf]
    %v1370 = vld [vmem:[%s8 + $0x14] sm:$0xf]
    %v1387 = vunpack.c.l.b16 %v1349
    %v1388 = vunpack.c.l.b16 %v1350
    %v1389 = vunpack.c.l.b16 %v1351
    %v1390 = vunpack.c.l.b16 %v1352
    %v1391 = vunpack.c.l.b16 %v1353
    %v1392 = vunpack.c.l.b16 %v1354
    %v1393 = vunpack.c.l.b16 %v1355
    %v1394 = vunpack.c.l.b16 %v1356
    %v1395 = vunpack.c.l.b16 %v1357
    %v1396 = vunpack.c.l.b16 %v1358
    %v1397 = vunpack.c.l.b16 %v1359
    %v1398 = vunpack.c.l.b16 %v1360
    %v1399 = vunpack.c.l.b16 %v1361
    %v1400 = vunpack.c.l.b16 %v1362
    %v1401 = vunpack.c.l.b16 %v1363
    %v1402 = vunpack.c.l.b16 %v1364
    %v1403 = vpack.c.b16 %v1388, %v1387
    %v1404 = vpack.c.b16 %v1390, %v1389
    %v1405 = vpack.c.b16 %v1392, %v1391
    %v1406 = vpack.c.b16 %v1394, %v1393
    %v1407 = vpack.c.b16 %v1396, %v1395
    %v1408 = vpack.c.b16 %v1398, %v1397
    %v1409 = vpack.c.b16 %v1400, %v1399
    %v1410 = vpack.c.b16 %v1402, %v1401
    %v1417 = vunpack.c.l.b16 %v1365
    %v1418 = vunpack.c.l.b16 %v1366
    %v1419 = vunpack.c.l.b16 %v1367
    %v1420 = vunpack.c.l.b16 %v1368
    %v1421 = vunpack.c.l.b16 %v1369
    %v1422 = vunpack.c.l.b16 %v1370
    %v1423 = vpack.c.b16 %v1418, %v1417
    %v1424 = vpack.c.b16 %v1420, %v1419
    %v1425 = vpack.c.b16 %v1422, %v1421
    %vm1429 = vcmask 392192
    %v1431 = vsel %vm1429, %v1403, 0
    %v1434 = vsel %vm1429, %v1404, 0
    %v1437 = vsel %vm1429, %v1405, 0
    %v1440 = vsel %vm1429, %v1406, 0
    %v1443 = vsel %vm1429, %v1407, 0
    %v1446 = vsel %vm1429, %v1408, 0
    %v1449 = vsel %vm1429, %v1409, 0
    %v1452 = vsel %vm1429, %v1410, 0
    %1454 = vmatprep.subr.bf16.mxu0 0
    %1455 = vmatpush1.bf16.msra.mxu0 0
    %1456 = vmatprep.subr.bf16.mxu0 0
    %1457 = vmatpush1.bf16.msra.mxu0 0
    %1458 = vmatprep.subr.bf16.mxu0 0
    %1459 = vmatpush1.bf16.msra.mxu0 0
    %1460 = vmatprep.subr.bf16.mxu0 0
    %1461 = vmatpush1.bf16.msra.mxu0 0
    %1462 = vmatprep.subr.bf16.mxu0 0
    %1463 = vmatpush1.bf16.msra.mxu0 0
    %1464 = vmatprep.subr.bf16.mxu0 0
    %1465 = vmatpush1.bf16.msra.mxu0 %v1425
    %1466 = vmatprep.subr.bf16.mxu0 0
    %1467 = vmatpush1.bf16.msra.mxu0 %v1424
    %1468 = vmatprep.subr.bf16.mxu0 0
    %1469 = vmatpush1.bf16.msra.mxu0 %v1423
    %1470 = vmatprep.subr.bf16.mxu0 0
    %1471 = vmatpush2.bf16.msra.mxu0 0
    %1472 = vmatprep.subr.bf16.mxu0 0
    %1473 = vmatpush2.bf16.msra.mxu0 0
    %1474 = vmatprep.subr.bf16.mxu0 0
    %1475 = vmatpush2.bf16.msra.mxu0 0
    %1476 = vmatprep.subr.bf16.mxu0 0
    %1477 = vmatpush2.bf16.msra.mxu0 0
    %1478 = vmatprep.subr.bf16.mxu0 0
    %1479 = vmatpush2.bf16.msra.mxu0 0
    %1480 = vmatprep.subr.bf16.mxu0 0
    %1481 = vmatpush2.bf16.msra.mxu0 0
    %1482 = vmatprep.subr.bf16.mxu0 0
    %1483 = vmatpush2.bf16.msra.mxu0 0
    %1484 = vmatprep.subr.bf16.mxu0 0
    %1485 = vmatpush2.bf16.msra.mxu0 0
    %1486 = vmatprep.mubr.bf16.mxu0 0
    %1487 = vmatmul.mubr.bf16.gmra.mxu0 %v1431
    %v1488 = vpop.f32.mrf.mxu0
    %v1489 = vadd.f32 0.0, %v1488
    %v1490 = vpop.f32.mrf.mxu0
    %v1491 = vpop.f32.mrf.mxu0
    %v1492 = vadd.f32 0.0, %v1491
    %v1493 = vpop.f32.mrf.mxu0
    %1494 = vmatprep.mubr.bf16.mxu0 0
    %1495 = vmatmul.mubr.bf16.gmra.mxu0 %v1434
    %v1496 = vpop.f32.mrf.mxu0
    %v1497 = vadd.f32 0.0, %v1496
    %v1498 = vpop.f32.mrf.mxu0
    %v1499 = vpop.f32.mrf.mxu0
    %v1500 = vadd.f32 0.0, %v1499
    %v1501 = vpop.f32.mrf.mxu0
    %1502 = vmatprep.mubr.bf16.mxu0 0
    %1503 = vmatmul.mubr.bf16.gmra.mxu0 %v1437
    %v1504 = vpop.f32.mrf.mxu0
    %v1505 = vadd.f32 0.0, %v1504
    %v1506 = vpop.f32.mrf.mxu0
    %v1507 = vpop.f32.mrf.mxu0
    %v1508 = vadd.f32 0.0, %v1507
    %v1509 = vpop.f32.mrf.mxu0
    %1510 = vmatprep.mubr.bf16.mxu0 0
    %1511 = vmatmul.mubr.bf16.gmra.mxu0 %v1440
    %v1512 = vpop.f32.mrf.mxu0
    %v1513 = vadd.f32 0.0, %v1512
    %v1514 = vpop.f32.mrf.mxu0
    %v1515 = vpop.f32.mrf.mxu0
    %v1516 = vadd.f32 0.0, %v1515
    %v1517 = vpop.f32.mrf.mxu0
    %1518 = vmatprep.mubr.bf16.mxu0 0
    %1519 = vmatmul.mubr.bf16.gmra.mxu0 %v1443
    %v1520 = vpop.f32.mrf.mxu0
    %v1521 = vadd.f32 0.0, %v1520
    %v1522 = vpop.f32.mrf.mxu0
    %v1523 = vpop.f32.mrf.mxu0
    %v1524 = vadd.f32 0.0, %v1523
    %v1525 = vpop.f32.mrf.mxu0
    %1526 = vmatprep.mubr.bf16.mxu0 0
    %1527 = vmatmul.mubr.bf16.gmra.mxu0 %v1446
    %v1528 = vpop.f32.mrf.mxu0
    %v1529 = vadd.f32 0.0, %v1528
    %v1530 = vpop.f32.mrf.mxu0
    %v1531 = vpop.f32.mrf.mxu0
    %v1532 = vadd.f32 0.0, %v1531
    %v1533 = vpop.f32.mrf.mxu0
    %1534 = vmatprep.mubr.bf16.mxu0 0
    %1535 = vmatmul.mubr.bf16.gmra.mxu0 %v1449
    %v1536 = vpop.f32.mrf.mxu0
    %v1537 = vadd.f32 0.0, %v1536
    %v1538 = vpop.f32.mrf.mxu0
    %v1539 = vpop.f32.mrf.mxu0
    %v1540 = vadd.f32 0.0, %v1539
    %v1541 = vpop.f32.mrf.mxu0
    %1542 = vmatprep.mubr.bf16.mxu0 0
    %1543 = vmatmul.mubr.bf16.gmra.mxu0 %v1452
    %v1544 = vpop.f32.mrf.mxu0
    %v1545 = vadd.f32 0.0, %v1544
    %v1546 = vpop.f32.mrf.mxu0
    %v1547 = vpop.f32.mrf.mxu0
    %v1548 = vadd.f32 0.0, %v1547
    %v1549 = vpop.f32.mrf.mxu0
    %1550 = vdwg.mxu0
    %v1551 = vadd.f32 %v1333, %v1489
    %v1552 = vadd.f32 %v1334, %v1492
    %v1553 = vadd.f32 %v1335, %v1497
    %v1554 = vadd.f32 %v1336, %v1500
    %v1555 = vadd.f32 %v1337, %v1505
    %v1556 = vadd.f32 %v1338, %v1508
    %v1557 = vadd.f32 %v1339, %v1513
    %v1558 = vadd.f32 %v1340, %v1516
    %v1559 = vadd.f32 %v1341, %v1521
    %v1560 = vadd.f32 %v1342, %v1524
    %v1561 = vadd.f32 %v1343, %v1529
    %v1562 = vadd.f32 %v1344, %v1532
    %v1563 = vadd.f32 %v1345, %v1537
    %v1564 = vadd.f32 %v1346, %v1540
    %v1565 = vadd.f32 %v1347, %v1545
    %v1566 = vadd.f32 %v1348, %v1548
    %v1567 = vlaneseq
    %v1568 = vshrl.u32 %v1567, 7
    %v1569 = vsub.s32 1, %v1568
    %v1570 = vrot.slane %v40, %v1569
    %v1571 = vadd.f32 %v1551, %v1570
    %v1572 = vadd.f32 %v1552, %v1570
    %v1573 = vadd.f32 %v1553, %v1570
    %v1574 = vadd.f32 %v1554, %v1570
    %v1575 = vadd.f32 %v1555, %v1570
    %v1576 = vadd.f32 %v1556, %v1570
    %v1577 = vadd.f32 %v1557, %v1570
    %v1578 = vadd.f32 %v1558, %v1570
    %v1579 = vadd.f32 %v1559, %v1570
    %v1580 = vadd.f32 %v1560, %v1570
    %v1581 = vadd.f32 %v1561, %v1570
    %v1582 = vadd.f32 %v1562, %v1570
    %v1583 = vadd.f32 %v1563, %v1570
    %v1584 = vadd.f32 %v1564, %v1570
    %v1585 = vadd.f32 %v1565, %v1570
    %v1586 = vadd.f32 %v1566, %v1570
    %v1587 = vmax.f32 %v1571, 0.0
    %v1588 = vmax.f32 %v1572, 0.0
    %v1589 = vmax.f32 %v1573, 0.0
    %v1590 = vmax.f32 %v1574, 0.0
    %v1591 = vmax.f32 %v1575, 0.0
    %v1592 = vmax.f32 %v1576, 0.0
    %v1593 = vmax.f32 %v1577, 0.0
    %v1594 = vmax.f32 %v1578, 0.0
    %v1595 = vmax.f32 %v1579, 0.0
    %v1596 = vmax.f32 %v1580, 0.0
    %v1597 = vmax.f32 %v1581, 0.0
    %v1598 = vmax.f32 %v1582, 0.0
    %v1599 = vmax.f32 %v1583, 0.0
    %v1600 = vmax.f32 %v1584, 0.0
    %v1601 = vmax.f32 %v1585, 0.0
    %v1602 = vmax.f32 %v1586, 0.0
    %v1603 = vpack.c.bf16 %v1588, %v1587
    %v1604 = vpack.c.bf16 %v1590, %v1589
    %v1605 = vpack.c.bf16 %v1592, %v1591
    %v1606 = vpack.c.bf16 %v1594, %v1593
    %v1607 = vpack.c.bf16 %v1596, %v1595
    %v1608 = vpack.c.bf16 %v1598, %v1597
    %v1609 = vpack.c.bf16 %v1600, %v1599
    %v1610 = vpack.c.bf16 %v1602, %v1601
    %v1611 = vld [vmem:[%s9] sm:$0xf]
    %v1612 = vld [vmem:[%s9 + $0x4] sm:$0xf]
    %v1613 = vld [vmem:[%s9 + $0x8] sm:$0xf]
    %v1614 = vld [vmem:[%s9 + $0xc] sm:$0xf]
    %v1615 = vld [vmem:[%s9 + $0x10] sm:$0xf]
    %v1616 = vld [vmem:[%s9 + $0x14] sm:$0xf]
    %v1617 = vld [vmem:[%s9 + $0x18] sm:$0xf]
    %v1618 = vld [vmem:[%s9 + $0x1c] sm:$0xf]
    %v1619 = vlaneseq
    %v1620 = vshrl.u32 %v1619, 7
    %v1621 = vsub.s32 2, %v1620
    %v1622 = vrot.slane %v40, %v1621
    %v1631 = vunpack.c.l.b16 %v1611
    %v1632 = vunpack.c.l.b16 %v1612
    %v1633 = vunpack.c.l.b16 %v1613
    %v1634 = vunpack.c.l.b16 %v1614
    %v1635 = vunpack.c.l.b16 %v1615
    %v1636 = vunpack.c.l.b16 %v1616
    %v1637 = vunpack.c.l.b16 %v1617
    %v1638 = vunpack.c.l.b16 %v1618
    %v1639 = vpack.c.b16 %v1632, %v1631
    %v1640 = vpack.c.b16 %v1634, %v1633
    %v1641 = vpack.c.b16 %v1636, %v1635
    %v1642 = vpack.c.b16 %v1638, %v1637
    %vm1647 = vcmask 523264
    %v1649 = vsel %vm1647, %v1603, 0
    %v1652 = vsel %vm1647, %v1604, 0
    %v1655 = vsel %vm1647, %v1605, 0
    %v1658 = vsel %vm1647, %v1606, 0
    %v1661 = vsel %vm1647, %v1607, 0
    %v1664 = vsel %vm1647, %v1608, 0
    %v1667 = vsel %vm1647, %v1609, 0
    %v1670 = vsel %vm1647, %v1610, 0
    %1672 = vmatprep.subr.bf16.mxu0 0
    %1673 = vmatpush1.bf16.msra.mxu0 0
    %1674 = vmatprep.subr.bf16.mxu0 0
    %1675 = vmatpush1.bf16.msra.mxu0 0
    %1676 = vmatprep.subr.bf16.mxu0 0
    %1677 = vmatpush1.bf16.msra.mxu0 0
    %1678 = vmatprep.subr.bf16.mxu0 0
    %1679 = vmatpush1.bf16.msra.mxu0 0
    %1680 = vmatprep.subr.bf16.mxu0 0
    %1681 = vmatpush1.bf16.msra.mxu0 %v1642
    %1682 = vmatprep.subr.bf16.mxu0 0
    %1683 = vmatpush1.bf16.msra.mxu0 %v1641
    %1684 = vmatprep.subr.bf16.mxu0 0
    %1685 = vmatpush1.bf16.msra.mxu0 %v1640
    %1686 = vmatprep.subr.bf16.mxu0 0
    %1687 = vmatpush1.bf16.msra.mxu0 %v1639
    %1688 = vmatprep.subr.bf16.mxu0 0
    %1689 = vmatpush2.bf16.msra.mxu0 0
    %1690 = vmatprep.subr.bf16.mxu0 0
    %1691 = vmatpush2.bf16.msra.mxu0 0
    %1692 = vmatprep.subr.bf16.mxu0 0
    %1693 = vmatpush2.bf16.msra.mxu0 0
    %1694 = vmatprep.subr.bf16.mxu0 0
    %1695 = vmatpush2.bf16.msra.mxu0 0
    %1696 = vmatprep.subr.bf16.mxu0 0
    %1697 = vmatpush2.bf16.msra.mxu0 0
    %1698 = vmatprep.subr.bf16.mxu0 0
    %1699 = vmatpush2.bf16.msra.mxu0 0
    %1700 = vmatprep.subr.bf16.mxu0 0
    %1701 = vmatpush2.bf16.msra.mxu0 0
    %1702 = vmatprep.subr.bf16.mxu0 0
    %1703 = vmatpush2.bf16.msra.mxu0 0
    %1704 = vmatprep.mubr.bf16.mxu0 0
    %1705 = vmatmul.mubr.bf16.gmra.mxu0 %v1649
    %v1706 = vpop.f32.mrf.mxu0
    %v1707 = vadd.f32 %v1622, %v1706
    %v1708 = vpop.f32.mrf.mxu0
    %v1709 = vpop.f32.mrf.mxu0
    %v1710 = vadd.f32 %v1622, %v1709
    %v1711 = vpop.f32.mrf.mxu0
    %1712 = vmatprep.mubr.bf16.mxu0 0
    %1713 = vmatmul.mubr.bf16.gmra.mxu0 %v1652
    %v1714 = vpop.f32.mrf.mxu0
    %v1715 = vadd.f32 %v1622, %v1714
    %v1716 = vpop.f32.mrf.mxu0
    %v1717 = vpop.f32.mrf.mxu0
    %v1718 = vadd.f32 %v1622, %v1717
    %v1719 = vpop.f32.mrf.mxu0
    %1720 = vmatprep.mubr.bf16.mxu0 0
    %1721 = vmatmul.mubr.bf16.gmra.mxu0 %v1655
    %v1722 = vpop.f32.mrf.mxu0
    %v1723 = vadd.f32 %v1622, %v1722
    %v1724 = vpop.f32.mrf.mxu0
    %v1725 = vpop.f32.mrf.mxu0
    %v1726 = vadd.f32 %v1622, %v1725
    %v1727 = vpop.f32.mrf.mxu0
    %1728 = vmatprep.mubr.bf16.mxu0 0
    %1729 = vmatmul.mubr.bf16.gmra.mxu0 %v1658
    %v1730 = vpop.f32.mrf.mxu0
    %v1731 = vadd.f32 %v1622, %v1730
    %v1732 = vpop.f32.mrf.mxu0
    %v1733 = vpop.f32.mrf.mxu0
    %v1734 = vadd.f32 %v1622, %v1733
    %v1735 = vpop.f32.mrf.mxu0
    %1736 = vmatprep.mubr.bf16.mxu0 0
    %1737 = vmatmul.mubr.bf16.gmra.mxu0 %v1661
    %v1738 = vpop.f32.mrf.mxu0
    %v1739 = vadd.f32 %v1622, %v1738
    %v1740 = vpop.f32.mrf.mxu0
    %v1741 = vpop.f32.mrf.mxu0
    %v1742 = vadd.f32 %v1622, %v1741
    %v1743 = vpop.f32.mrf.mxu0
    %1744 = vmatprep.mubr.bf16.mxu0 0
    %1745 = vmatmul.mubr.bf16.gmra.mxu0 %v1664
    %v1746 = vpop.f32.mrf.mxu0
    %v1747 = vadd.f32 %v1622, %v1746
    %v1748 = vpop.f32.mrf.mxu0
    %v1749 = vpop.f32.mrf.mxu0
    %v1750 = vadd.f32 %v1622, %v1749
    %v1751 = vpop.f32.mrf.mxu0
    %1752 = vmatprep.mubr.bf16.mxu0 0
    %1753 = vmatmul.mubr.bf16.gmra.mxu0 %v1667
    %v1754 = vpop.f32.mrf.mxu0
    %v1755 = vadd.f32 %v1622, %v1754
    %v1756 = vpop.f32.mrf.mxu0
    %v1757 = vpop.f32.mrf.mxu0
    %v1758 = vadd.f32 %v1622, %v1757
    %v1759 = vpop.f32.mrf.mxu0
    %1760 = vmatprep.mubr.bf16.mxu0 0
    %1761 = vmatmul.mubr.bf16.gmra.mxu0 %v1670
    %v1762 = vpop.f32.mrf.mxu0
    %v1763 = vadd.f32 %v1622, %v1762
    %v1764 = vpop.f32.mrf.mxu0
    %v1765 = vpop.f32.mrf.mxu0
    %v1766 = vadd.f32 %v1622, %v1765
    %v1767 = vpop.f32.mrf.mxu0
    %1768 = vdwg.mxu0
    %v1769 = vmax.f32 %v1707, 0.0
    %v1770 = vmax.f32 %v1710, 0.0
    %v1771 = vmax.f32 %v1715, 0.0
    %v1772 = vmax.f32 %v1718, 0.0
    %v1773 = vmax.f32 %v1723, 0.0
    %v1774 = vmax.f32 %v1726, 0.0
    %v1775 = vmax.f32 %v1731, 0.0
    %v1776 = vmax.f32 %v1734, 0.0
    %v1777 = vmax.f32 %v1739, 0.0
    %v1778 = vmax.f32 %v1742, 0.0
    %v1779 = vmax.f32 %v1747, 0.0
    %v1780 = vmax.f32 %v1750, 0.0
    %v1781 = vmax.f32 %v1755, 0.0
    %v1782 = vmax.f32 %v1758, 0.0
    %v1783 = vmax.f32 %v1763, 0.0
    %v1784 = vmax.f32 %v1766, 0.0
    %v1785 = vld [vmem:[%s0] sm:$0xff]
    %v1786 = vld [vmem:[%s0 + $0x8] sm:$0xff]
    %v1787 = vld [vmem:[%s0 + $0x10] sm:$0xff]
    %v1788 = vld [vmem:[%s0 + $0x18] sm:$0xff]
    %v1789 = vld [vmem:[%s0 + $0x20] sm:$0xff]
    %v1790 = vld [vmem:[%s0 + $0x28] sm:$0xff]
    %v1791 = vld [vmem:[%s0 + $0x30] sm:$0xff]
    %v1792 = vld [vmem:[%s0 + $0x38] sm:$0xff]
    %v1793 = vld [vmem:[%s0 + $0x40] sm:$0xff]
    %v1794 = vld [vmem:[%s0 + $0x48] sm:$0xff]
    %v1795 = vld [vmem:[%s0 + $0x50] sm:$0xff]
    %v1796 = vld [vmem:[%s0 + $0x58] sm:$0xff]
    %v1797 = vld [vmem:[%s0 + $0x60] sm:$0xff]
    %v1798 = vld [vmem:[%s0 + $0x68] sm:$0xff]
    %v1799 = vld [vmem:[%s0 + $0x70] sm:$0xff]
    %v1800 = vld [vmem:[%s0 + $0x78] sm:$0xff]
    %s1801 = scalar_lea.vmem %s0, 128
    %v1802 = vld [vmem:[%s1801] sm:$0xff]
    %v1803 = vld [vmem:[%s1801 + $0x8] sm:$0xff]
    %v1804 = vld [vmem:[%s1801 + $0x10] sm:$0xff]
    %v1805 = vld [vmem:[%s1801 + $0x18] sm:$0xff]
    %v1806 = vld [vmem:[%s1801 + $0x20] sm:$0xff]
    %v1807 = vld [vmem:[%s1801 + $0x28] sm:$0xff]
    %v1808 = vld [vmem:[%s1801 + $0x30] sm:$0xff]
    %v1809 = vld [vmem:[%s1801 + $0x38] sm:$0xff]
    %v1810 = vld [vmem:[%s1801 + $0x40] sm:$0xff]
    %v1811 = vld [vmem:[%s1801 + $0x48] sm:$0xff]
    %v1812 = vld [vmem:[%s1801 + $0x50] sm:$0xff]
    %v1813 = vld [vmem:[%s1801 + $0x58] sm:$0xff]
    %v1814 = vld [vmem:[%s1801 + $0x60] sm:$0xff]
    %v1815 = vld [vmem:[%s1801 + $0x68] sm:$0xff]
    %v1816 = vld [vmem:[%s1801 + $0x70] sm:$0xff]
    %v1817 = vld [vmem:[%s1801 + $0x78] sm:$0xff]
    %v1818 = vmax.f32 %v1785, %v1802
    %v1819 = vmax.f32 %v1786, %v1803
    %v1820 = vmax.f32 %v1787, %v1804
    %v1821 = vmax.f32 %v1788, %v1805
    %v1822 = vmax.f32 %v1789, %v1806
    %v1823 = vmax.f32 %v1790, %v1807
    %v1824 = vmax.f32 %v1791, %v1808
    %v1825 = vmax.f32 %v1792, %v1809
    %v1826 = vmax.f32 %v1793, %v1810
    %v1827 = vmax.f32 %v1794, %v1811
    %v1828 = vmax.f32 %v1795, %v1812
    %v1829 = vmax.f32 %v1796, %v1813
    %v1830 = vmax.f32 %v1797, %v1814
    %v1831 = vmax.f32 %v1798, %v1815
    %v1832 = vmax.f32 %v1799, %v1816
    %v1833 = vmax.f32 %v1800, %v1817
    %s1834 = scalar_lea.vmem %s0, 256
    %v1835 = vld [vmem:[%s1834] sm:$0xff]
    %v1836 = vld [vmem:[%s1834 + $0x8] sm:$0xff]
    %v1837 = vld [vmem:[%s1834 + $0x10] sm:$0xff]
    %v1838 = vld [vmem:[%s1834 + $0x18] sm:$0xff]
    %v1839 = vld [vmem:[%s1834 + $0x20] sm:$0xff]
    %v1840 = vld [vmem:[%s1834 + $0x28] sm:$0xff]
    %v1841 = vld [vmem:[%s1834 + $0x30] sm:$0xff]
    %v1842 = vld [vmem:[%s1834 + $0x38] sm:$0xff]
    %v1843 = vld [vmem:[%s1834 + $0x40] sm:$0xff]
    %v1844 = vld [vmem:[%s1834 + $0x48] sm:$0xff]
    %v1845 = vld [vmem:[%s1834 + $0x50] sm:$0xff]
    %v1846 = vld [vmem:[%s1834 + $0x58] sm:$0xff]
    %v1847 = vld [vmem:[%s1834 + $0x60] sm:$0xff]
    %v1848 = vld [vmem:[%s1834 + $0x68] sm:$0xff]
    %v1849 = vld [vmem:[%s1834 + $0x70] sm:$0xff]
    %v1850 = vld [vmem:[%s1834 + $0x78] sm:$0xff]
    %v1851 = vmax.f32 %v1818, %v1835
    %v1852 = vmax.f32 %v1819, %v1836
    %v1853 = vmax.f32 %v1820, %v1837
    %v1854 = vmax.f32 %v1821, %v1838
    %v1855 = vmax.f32 %v1822, %v1839
    %v1856 = vmax.f32 %v1823, %v1840
    %v1857 = vmax.f32 %v1824, %v1841
    %v1858 = vmax.f32 %v1825, %v1842
    %v1859 = vmax.f32 %v1826, %v1843
    %v1860 = vmax.f32 %v1827, %v1844
    %v1861 = vmax.f32 %v1828, %v1845
    %v1862 = vmax.f32 %v1829, %v1846
    %v1863 = vmax.f32 %v1830, %v1847
    %v1864 = vmax.f32 %v1831, %v1848
    %v1865 = vmax.f32 %v1832, %v1849
    %v1866 = vmax.f32 %v1833, %v1850
    %s1867 = scalar_lea.vmem %s0, 384
    %v1868 = vld [vmem:[%s1867] sm:$0xff]
    %v1869 = vld [vmem:[%s1867 + $0x8] sm:$0xff]
    %v1870 = vld [vmem:[%s1867 + $0x10] sm:$0xff]
    %v1871 = vld [vmem:[%s1867 + $0x18] sm:$0xff]
    %v1872 = vld [vmem:[%s1867 + $0x20] sm:$0xff]
    %v1873 = vld [vmem:[%s1867 + $0x28] sm:$0xff]
    %v1874 = vld [vmem:[%s1867 + $0x30] sm:$0xff]
    %v1875 = vld [vmem:[%s1867 + $0x38] sm:$0xff]
    %v1876 = vld [vmem:[%s1867 + $0x40] sm:$0xff]
    %v1877 = vld [vmem:[%s1867 + $0x48] sm:$0xff]
    %v1878 = vld [vmem:[%s1867 + $0x50] sm:$0xff]
    %v1879 = vld [vmem:[%s1867 + $0x58] sm:$0xff]
    %v1880 = vld [vmem:[%s1867 + $0x60] sm:$0xff]
    %v1881 = vld [vmem:[%s1867 + $0x68] sm:$0xff]
    %v1882 = vld [vmem:[%s1867 + $0x70] sm:$0xff]
    %v1883 = vld [vmem:[%s1867 + $0x78] sm:$0xff]
    %v1884 = vmax.f32 %v1851, %v1868
    %v1885 = vmax.f32 %v1852, %v1869
    %v1886 = vmax.f32 %v1853, %v1870
    %v1887 = vmax.f32 %v1854, %v1871
    %v1888 = vmax.f32 %v1855, %v1872
    %v1889 = vmax.f32 %v1856, %v1873
    %v1890 = vmax.f32 %v1857, %v1874
    %v1891 = vmax.f32 %v1858, %v1875
    %v1892 = vmax.f32 %v1859, %v1876
    %v1893 = vmax.f32 %v1860, %v1877
    %v1894 = vmax.f32 %v1861, %v1878
    %v1895 = vmax.f32 %v1862, %v1879
    %v1896 = vmax.f32 %v1863, %v1880
    %v1897 = vmax.f32 %v1864, %v1881
    %v1898 = vmax.f32 %v1865, %v1882
    %v1899 = vmax.f32 %v1866, %v1883
    %s1900 = scalar_lea.vmem %s0, 512
    %v1901 = vld [vmem:[%s1900] sm:$0xff]
    %v1902 = vld [vmem:[%s1900 + $0x8] sm:$0xff]
    %v1903 = vld [vmem:[%s1900 + $0x10] sm:$0xff]
    %v1904 = vld [vmem:[%s1900 + $0x18] sm:$0xff]
    %v1905 = vld [vmem:[%s1900 + $0x20] sm:$0xff]
    %v1906 = vld [vmem:[%s1900 + $0x28] sm:$0xff]
    %v1907 = vld [vmem:[%s1900 + $0x30] sm:$0xff]
    %v1908 = vld [vmem:[%s1900 + $0x38] sm:$0xff]
    %v1909 = vld [vmem:[%s1900 + $0x40] sm:$0xff]
    %v1910 = vld [vmem:[%s1900 + $0x48] sm:$0xff]
    %v1911 = vld [vmem:[%s1900 + $0x50] sm:$0xff]
    %v1912 = vld [vmem:[%s1900 + $0x58] sm:$0xff]
    %v1913 = vld [vmem:[%s1900 + $0x60] sm:$0xff]
    %v1914 = vld [vmem:[%s1900 + $0x68] sm:$0xff]
    %v1915 = vld [vmem:[%s1900 + $0x70] sm:$0xff]
    %v1916 = vld [vmem:[%s1900 + $0x78] sm:$0xff]
    %v1917 = vmax.f32 %v1884, %v1901
    %v1918 = vmax.f32 %v1885, %v1902
    %v1919 = vmax.f32 %v1886, %v1903
    %v1920 = vmax.f32 %v1887, %v1904
    %v1921 = vmax.f32 %v1888, %v1905
    %v1922 = vmax.f32 %v1889, %v1906
    %v1923 = vmax.f32 %v1890, %v1907
    %v1924 = vmax.f32 %v1891, %v1908
    %v1925 = vmax.f32 %v1892, %v1909
    %v1926 = vmax.f32 %v1893, %v1910
    %v1927 = vmax.f32 %v1894, %v1911
    %v1928 = vmax.f32 %v1895, %v1912
    %v1929 = vmax.f32 %v1896, %v1913
    %v1930 = vmax.f32 %v1897, %v1914
    %v1931 = vmax.f32 %v1898, %v1915
    %v1932 = vmax.f32 %v1899, %v1916
    %s1933 = scalar_lea.vmem %s0, 640
    %v1934 = vld [vmem:[%s1933] sm:$0xff]
    %v1935 = vld [vmem:[%s1933 + $0x8] sm:$0xff]
    %v1936 = vld [vmem:[%s1933 + $0x10] sm:$0xff]
    %v1937 = vld [vmem:[%s1933 + $0x18] sm:$0xff]
    %v1938 = vld [vmem:[%s1933 + $0x20] sm:$0xff]
    %v1939 = vld [vmem:[%s1933 + $0x28] sm:$0xff]
    %v1940 = vld [vmem:[%s1933 + $0x30] sm:$0xff]
    %v1941 = vld [vmem:[%s1933 + $0x38] sm:$0xff]
    %v1942 = vld [vmem:[%s1933 + $0x40] sm:$0xff]
    %v1943 = vld [vmem:[%s1933 + $0x48] sm:$0xff]
    %v1944 = vld [vmem:[%s1933 + $0x50] sm:$0xff]
    %v1945 = vld [vmem:[%s1933 + $0x58] sm:$0xff]
    %v1946 = vld [vmem:[%s1933 + $0x60] sm:$0xff]
    %v1947 = vld [vmem:[%s1933 + $0x68] sm:$0xff]
    %v1948 = vld [vmem:[%s1933 + $0x70] sm:$0xff]
    %v1949 = vld [vmem:[%s1933 + $0x78] sm:$0xff]
    %v1950 = vmax.f32 %v1917, %v1934
    %v1951 = vmax.f32 %v1918, %v1935
    %v1952 = vmax.f32 %v1919, %v1936
    %v1953 = vmax.f32 %v1920, %v1937
    %v1954 = vmax.f32 %v1921, %v1938
    %v1955 = vmax.f32 %v1922, %v1939
    %v1956 = vmax.f32 %v1923, %v1940
    %v1957 = vmax.f32 %v1924, %v1941
    %v1958 = vmax.f32 %v1925, %v1942
    %v1959 = vmax.f32 %v1926, %v1943
    %v1960 = vmax.f32 %v1927, %v1944
    %v1961 = vmax.f32 %v1928, %v1945
    %v1962 = vmax.f32 %v1929, %v1946
    %v1963 = vmax.f32 %v1930, %v1947
    %v1964 = vmax.f32 %v1931, %v1948
    %v1965 = vmax.f32 %v1932, %v1949
    %s1966 = scalar_lea.vmem %s0, 768
    %v1967 = vld [vmem:[%s1966] sm:$0xff]
    %v1968 = vld [vmem:[%s1966 + $0x8] sm:$0xff]
    %v1969 = vld [vmem:[%s1966 + $0x10] sm:$0xff]
    %v1970 = vld [vmem:[%s1966 + $0x18] sm:$0xff]
    %v1971 = vld [vmem:[%s1966 + $0x20] sm:$0xff]
    %v1972 = vld [vmem:[%s1966 + $0x28] sm:$0xff]
    %v1973 = vld [vmem:[%s1966 + $0x30] sm:$0xff]
    %v1974 = vld [vmem:[%s1966 + $0x38] sm:$0xff]
    %v1975 = vld [vmem:[%s1966 + $0x40] sm:$0xff]
    %v1976 = vld [vmem:[%s1966 + $0x48] sm:$0xff]
    %v1977 = vld [vmem:[%s1966 + $0x50] sm:$0xff]
    %v1978 = vld [vmem:[%s1966 + $0x58] sm:$0xff]
    %v1979 = vld [vmem:[%s1966 + $0x60] sm:$0xff]
    %v1980 = vld [vmem:[%s1966 + $0x68] sm:$0xff]
    %v1981 = vld [vmem:[%s1966 + $0x70] sm:$0xff]
    %v1982 = vld [vmem:[%s1966 + $0x78] sm:$0xff]
    %v1983 = vmax.f32 %v1950, %v1967
    %v1984 = vmax.f32 %v1951, %v1968
    %v1985 = vmax.f32 %v1952, %v1969
    %v1986 = vmax.f32 %v1953, %v1970
    %v1987 = vmax.f32 %v1954, %v1971
    %v1988 = vmax.f32 %v1955, %v1972
    %v1989 = vmax.f32 %v1956, %v1973
    %v1990 = vmax.f32 %v1957, %v1974
    %v1991 = vmax.f32 %v1958, %v1975
    %v1992 = vmax.f32 %v1959, %v1976
    %v1993 = vmax.f32 %v1960, %v1977
    %v1994 = vmax.f32 %v1961, %v1978
    %v1995 = vmax.f32 %v1962, %v1979
    %v1996 = vmax.f32 %v1963, %v1980
    %v1997 = vmax.f32 %v1964, %v1981
    %v1998 = vmax.f32 %v1965, %v1982
    %s1999 = scalar_lea.vmem %s0, 896
    %v2000 = vld [vmem:[%s1999] sm:$0xff]
    %v2001 = vld [vmem:[%s1999 + $0x8] sm:$0xff]
    %v2002 = vld [vmem:[%s1999 + $0x10] sm:$0xff]
    %v2003 = vld [vmem:[%s1999 + $0x18] sm:$0xff]
    %v2004 = vld [vmem:[%s1999 + $0x20] sm:$0xff]
    %v2005 = vld [vmem:[%s1999 + $0x28] sm:$0xff]
    %v2006 = vld [vmem:[%s1999 + $0x30] sm:$0xff]
    %v2007 = vld [vmem:[%s1999 + $0x38] sm:$0xff]
    %v2008 = vld [vmem:[%s1999 + $0x40] sm:$0xff]
    %v2009 = vld [vmem:[%s1999 + $0x48] sm:$0xff]
    %v2010 = vld [vmem:[%s1999 + $0x50] sm:$0xff]
    %v2011 = vld [vmem:[%s1999 + $0x58] sm:$0xff]
    %v2012 = vld [vmem:[%s1999 + $0x60] sm:$0xff]
    %v2013 = vld [vmem:[%s1999 + $0x68] sm:$0xff]
    %v2014 = vld [vmem:[%s1999 + $0x70] sm:$0xff]
    %v2015 = vld [vmem:[%s1999 + $0x78] sm:$0xff]
    %v2016 = vmax.f32 %v1983, %v2000
    %v2017 = vmax.f32 %v1984, %v2001
    %v2018 = vmax.f32 %v1985, %v2002
    %v2019 = vmax.f32 %v1986, %v2003
    %v2020 = vmax.f32 %v1987, %v2004
    %v2021 = vmax.f32 %v1988, %v2005
    %v2022 = vmax.f32 %v1989, %v2006
    %v2023 = vmax.f32 %v1990, %v2007
    %v2024 = vmax.f32 %v1991, %v2008
    %v2025 = vmax.f32 %v1992, %v2009
    %v2026 = vmax.f32 %v1993, %v2010
    %v2027 = vmax.f32 %v1994, %v2011
    %v2028 = vmax.f32 %v1995, %v2012
    %v2029 = vmax.f32 %v1996, %v2013
    %v2030 = vmax.f32 %v1997, %v2014
    %v2031 = vmax.f32 %v1998, %v2015
    %s2032 = scalar_lea.vmem %s0, 1024
    %v2033 = vld [vmem:[%s2032] sm:$0xff]
    %v2034 = vld [vmem:[%s2032 + $0x8] sm:$0xff]
    %v2035 = vld [vmem:[%s2032 + $0x10] sm:$0xff]
    %v2036 = vld [vmem:[%s2032 + $0x18] sm:$0xff]
    %v2037 = vld [vmem:[%s2032 + $0x20] sm:$0xff]
    %v2038 = vld [vmem:[%s2032 + $0x28] sm:$0xff]
    %v2039 = vld [vmem:[%s2032 + $0x30] sm:$0xff]
    %v2040 = vld [vmem:[%s2032 + $0x38] sm:$0xff]
    %v2041 = vld [vmem:[%s2032 + $0x40] sm:$0xff]
    %v2042 = vld [vmem:[%s2032 + $0x48] sm:$0xff]
    %v2043 = vld [vmem:[%s2032 + $0x50] sm:$0xff]
    %v2044 = vld [vmem:[%s2032 + $0x58] sm:$0xff]
    %v2045 = vld [vmem:[%s2032 + $0x60] sm:$0xff]
    %v2046 = vld [vmem:[%s2032 + $0x68] sm:$0xff]
    %v2047 = vld [vmem:[%s2032 + $0x70] sm:$0xff]
    %v2048 = vld [vmem:[%s2032 + $0x78] sm:$0xff]
    %v2049 = vmax.f32 %v2016, %v2033
    %v2050 = vmax.f32 %v2017, %v2034
    %v2051 = vmax.f32 %v2018, %v2035
    %v2052 = vmax.f32 %v2019, %v2036
    %v2053 = vmax.f32 %v2020, %v2037
    %v2054 = vmax.f32 %v2021, %v2038
    %v2055 = vmax.f32 %v2022, %v2039
    %v2056 = vmax.f32 %v2023, %v2040
    %v2057 = vmax.f32 %v2024, %v2041
    %v2058 = vmax.f32 %v2025, %v2042
    %v2059 = vmax.f32 %v2026, %v2043
    %v2060 = vmax.f32 %v2027, %v2044
    %v2061 = vmax.f32 %v2028, %v2045
    %v2062 = vmax.f32 %v2029, %v2046
    %v2063 = vmax.f32 %v2030, %v2047
    %v2064 = vmax.f32 %v2031, %v2048
    %2081 = vrot.lane.b32.xlu0 %v1769, 64
    %v2082 = vpop.permute.xlu0 %2081
    %2083 = vrot.lane.b32.xlu0 %v1770, 64
    %v2084 = vpop.permute.xlu0 %2083
    %2085 = vrot.lane.b32.xlu0 %v1771, 64
    %v2086 = vpop.permute.xlu0 %2085
    %2087 = vrot.lane.b32.xlu0 %v1772, 64
    %v2088 = vpop.permute.xlu0 %2087
    %2089 = vrot.lane.b32.xlu0 %v1773, 64
    %v2090 = vpop.permute.xlu0 %2089
    %2091 = vrot.lane.b32.xlu0 %v1774, 64
    %v2092 = vpop.permute.xlu0 %2091
    %2093 = vrot.lane.b32.xlu0 %v1775, 64
    %v2094 = vpop.permute.xlu0 %2093
    %2095 = vrot.lane.b32.xlu0 %v1776, 64
    %v2096 = vpop.permute.xlu0 %2095
    %2097 = vrot.lane.b32.xlu0 %v1777, 64
    %v2098 = vpop.permute.xlu0 %2097
    %2099 = vrot.lane.b32.xlu0 %v1778, 64
    %v2100 = vpop.permute.xlu0 %2099
    %2101 = vrot.lane.b32.xlu0 %v1779, 64
    %v2102 = vpop.permute.xlu0 %2101
    %2103 = vrot.lane.b32.xlu0 %v1780, 64
    %v2104 = vpop.permute.xlu0 %2103
    %2105 = vrot.lane.b32.xlu0 %v1781, 64
    %v2106 = vpop.permute.xlu0 %2105
    %2107 = vrot.lane.b32.xlu0 %v1782, 64
    %v2108 = vpop.permute.xlu0 %2107
    %2109 = vrot.lane.b32.xlu0 %v1783, 64
    %v2110 = vpop.permute.xlu0 %2109
    %2111 = vrot.lane.b32.xlu0 %v1784, 64
    %v2112 = vpop.permute.xlu0 %2111
    %v2129 = vsel %vm1647, %v2049, %v2082
    %v2130 = vsel %vm1647, %v2050, %v2084
    %v2131 = vsel %vm1647, %v2051, %v2086
    %v2132 = vsel %vm1647, %v2052, %v2088
    %v2133 = vsel %vm1647, %v2053, %v2090
    %v2134 = vsel %vm1647, %v2054, %v2092
    %v2135 = vsel %vm1647, %v2055, %v2094
    %v2136 = vsel %vm1647, %v2056, %v2096
    %v2137 = vsel %vm1647, %v2057, %v2098
    %v2138 = vsel %vm1647, %v2058, %v2100
    %v2139 = vsel %vm1647, %v2059, %v2102
    %v2140 = vsel %vm1647, %v2060, %v2104
    %v2141 = vsel %vm1647, %v2061, %v2106
    %v2142 = vsel %vm1647, %v2062, %v2108
    %v2143 = vsel %vm1647, %v2063, %v2110
    %v2144 = vsel %vm1647, %v2064, %v2112
    %2145 = vst [vmem:[#allocation2] sm:$0xff] %v2129
    %2146 = vst [vmem:[#allocation2 + $0x8] sm:$0xff] %v2130
    %2147 = vst [vmem:[#allocation2 + $0x10] sm:$0xff] %v2131
    %2148 = vst [vmem:[#allocation2 + $0x18] sm:$0xff] %v2132
    %2149 = vst [vmem:[#allocation2 + $0x20] sm:$0xff] %v2133
    %2150 = vst [vmem:[#allocation2 + $0x28] sm:$0xff] %v2134
    %2151 = vst [vmem:[#allocation2 + $0x30] sm:$0xff] %v2135
    %2152 = vst [vmem:[#allocation2 + $0x38] sm:$0xff] %v2136
    %2153 = vst [vmem:[#allocation2 + $0x40] sm:$0xff] %v2137
    %2154 = vst [vmem:[#allocation2 + $0x48] sm:$0xff] %v2138
    %2155 = vst [vmem:[#allocation2 + $0x50] sm:$0xff] %v2139
    %2156 = vst [vmem:[#allocation2 + $0x58] sm:$0xff] %v2140
    %2157 = vst [vmem:[#allocation2 + $0x60] sm:$0xff] %v2141
    %2158 = vst [vmem:[#allocation2 + $0x68] sm:$0xff] %v2142
    %2159 = vst [vmem:[#allocation2 + $0x70] sm:$0xff] %v2143
    %2160 = vst [vmem:[#allocation2 + $0x78] sm:$0xff] %v2144
    // Predicated region
    $region46: #{downsample_forward_nhwc.5} parent=1 // pred_check
      _
    $region47: #{downsample_forward_nhwc.5} parent=1 // pred_check_branch
      %2162 = sbr.rel (0) target = $region49
    $region48: #{downsample_forward_nhwc.5} parent=1 // pred_region
      %s2164 = ssub.s32 2048, 2048
      %2165 = vsyncadd [#allocation3], %s2164
      %s2166 = sshll.u32 [#allocation2], 4
      %s2167 = int_to_ptr.vmem [resolvable:$true] %s2166
      %2172 = dma.vmem_to_hbm [thread:$0]  %s2167, 2048, %s11, [#allocation3], 128, 128, 8
    $region49: #{downsample_forward_nhwc.5} parent=1 // pred_fallthru
      _
    // Predicated region
    $region50: #{downsample_forward_nhwc.5} parent=1 // pred_check
      _
    $region51: #{downsample_forward_nhwc.5} parent=1 // pred_check_branch
      %2174 = sbr.rel (0) target = $region53
    $region52: #{downsample_forward_nhwc.5} parent=1 // pred_region
      %2175 = dma.done [#allocation3], 2048
    $region53: #{downsample_forward_nhwc.5} parent=1 // pred_fallthru
      _
    %2176 = vsyncpa [#allocation3], 1

</llo_original>
